<compile_context>
chip_gen: v7x
topology: tpu7x:2x2x1
jax: 0.10.0
libtpu: 0.0.40
codegen_flags: <defaults>
</compile_context>

<pallas_src>
import functools

import jax
import jax.numpy as jnp
import numpy as np
from jax import lax
from jax.experimental import pallas as pl
from jax.experimental.pallas import tpu as pltpu


def _pad_to(x, shape):
    pads = [(0, s - d) for d, s in zip(x.shape, shape)]
    return jnp.pad(x, pads)


def _cdiv(a, b):
    return -(-a // b)


def _rnn_kernel(u1_ref, w1h_ref, w2_ref, b2_ref, w3_ref, b3_ref,
                o_ref, h1_sc, h2_sc, h3_sc,
                *, tt_steps, seq_len, pred_len):
    """One (batch-tile, time-block) grid step of the 3-layer tanh RNN.

    u1_ref : (TT, BT, Hp)   precomputed x_t @ W1_ih + b1, time-major
    w1h_ref: (Hp, Hp)       layer-1 recurrent weight
    w2_ref : (2*Hp, Hp)     [W2_ih; W2_hh] stacked,  b2_ref: (1, Hp)
    w3_ref : (2*Hp, Hp)     [W3_ih; W3_hh] stacked,  b3_ref: (1, Hp)
    o_ref  : (pred_len, BT, Hp)  last pred_len layer-3 hidden states
    h*_sc  : (BT, Hp)       hidden states carried across time blocks (VMEM)
    """
    t_blk = pl.program_id(1)

    @pl.when(t_blk == 0)
    def _():
        h1_sc[...] = jnp.zeros_like(h1_sc)
        h2_sc[...] = jnp.zeros_like(h2_sc)
        h3_sc[...] = jnp.zeros_like(h3_sc)

    first_out = seq_len - pred_len
    base = t_blk * tt_steps

    def step(tt, carry):
        h1, h2, h3 = carry
        gt = base + tt                       # global time index
        u1_t = u1_ref[tt]                    # (BT, Hp)

        h1 = jnp.tanh(u1_t + jnp.dot(h1, w1h_ref[...],
                                     preferred_element_type=jnp.float32))
        h2 = jnp.tanh(jnp.dot(jnp.concatenate([h1, h2], axis=-1), w2_ref[...],
                              preferred_element_type=jnp.float32)
                      + b2_ref[...])
        h3 = jnp.tanh(jnp.dot(jnp.concatenate([h2, h3], axis=-1), w3_ref[...],
                              preferred_element_type=jnp.float32)
                      + b3_ref[...])

        # Only the last pred_len *real* steps are consumed downstream; skip the
        # head/writeback for everything else (and for tail-padded steps).
        @pl.when(jnp.logical_and(gt >= first_out, gt < seq_len))
        def _():
            o_ref[gt - first_out] = h3

        return (h1, h2, h3)

    carry = lax.fori_loop(0, tt_steps, step,
                          (h1_sc[...], h2_sc[...], h3_sc[...]),
                          unroll=True)
    h1_sc[...], h2_sc[...], h3_sc[...] = carry


def simple_rnn_forward(x, params, pred_len):
    """x: (B, T, D) float32.  params: un-padded weights, already transposed so
    the kernel computes x @ W.  Returns (B, pred_len, O)."""
    B, T, D = x.shape
    H = params["w1_hh"].shape[0]
    assert 0 < pred_len <= T

    Hp = max(128, _cdiv(H, 128) * 128)

    # Batch tiling: one tile if Bp <= 128, else 128-row tiles on a leading
    # "parallel" grid axis (engages the second TensorCore on v7x for large B).
    Bp = max(8, _cdiv(B, 8) * 8)
    if Bp <= 128:
        BT = Bp
    else:
        BT = 128
        Bp = _cdiv(B, 128) * 128
    n_b = Bp // BT

    # Time blocks: at most 32 steps per grid iteration, minimal tail padding.
    n_t = _cdiv(T, 32)
    TT = _cdiv(T, n_t)
    Tp = TT * n_t

    # ---- hoisted (non-recurrent) layer-1 input projection: one XLA matmul ---
    u1 = jnp.einsum("btd,dh->bth", x, params["w1_ih"]) + params["b1"]  # (B,T,H)
    u1 = _pad_to(jnp.swapaxes(u1, 0, 1), (Tp, Bp, Hp))                 # (Tp,Bp,Hp)

    w1h = _pad_to(params["w1_hh"], (Hp, Hp))
    # Layers 2/3: stack [W_ih; W_hh] for a single K=2*Hp contraction per layer.
    w2 = jnp.concatenate([_pad_to(params["w2_ih"], (Hp, Hp)),
                          _pad_to(params["w2_hh"], (Hp, Hp))], axis=0)  # (2Hp,Hp)
    b2 = _pad_to(params["b2"].reshape(1, H), (1, Hp))
    w3 = jnp.concatenate([_pad_to(params["w3_ih"], (Hp, Hp)),
                          _pad_to(params["w3_hh"], (Hp, Hp))], axis=0)
    b3 = _pad_to(params["b3"].reshape(1, H), (1, Hp))

    kernel = functools.partial(_rnn_kernel, tt_steps=TT, seq_len=T,
                               pred_len=pred_len)

    # Weight/bias blocks have a constant index_map (never re-DMA'd).
    const = lambda shape: pl.BlockSpec(shape, lambda b, t: (0,) * len(shape))

    h3_last = pl.pallas_call(
        kernel,
        out_shape=jax.ShapeDtypeStruct((pred_len, Bp, Hp), jnp.float32),
        grid_spec=pltpu.PrefetchScalarGridSpec(
            num_scalar_prefetch=0,
            grid=(n_b, n_t),                 # (batch tiles, time blocks)
            in_specs=[
                pl.BlockSpec((TT, BT, Hp), lambda b, t: (t, b, 0)),  # u1
                const((Hp, Hp)),                                     # W1_hh
                const((2 * Hp, Hp)), const((1, Hp)),                 # layer 2
                const((2 * Hp, Hp)), const((1, Hp)),                 # layer 3
            ],
            # Constant over the time axis -> block stays resident in VMEM and
            # is written back once per batch tile; every row is stored exactly
            # once (gated by pl.when inside the kernel).
            out_specs=pl.BlockSpec((pred_len, BT, Hp), lambda b, t: (0, b, 0)),
            scratch_shapes=[pltpu.VMEM((BT, Hp), jnp.float32)] * 3,
        ),
        compiler_params=pltpu.CompilerParams(
            dimension_semantics=("parallel", "arbitrary")),
    )(u1, w1h, w2, b2, w3, b3)

    # ---- dense head, applied only to the pred_len hidden states we kept -----
    h3 = jnp.swapaxes(h3_last[:, :B, :H], 0, 1)             # (B, pred_len, H)
    return jnp.einsum("bph,ho->bpo", h3, params["wd"]) + params["bd"]


# ------------------------- pure-JAX reference -------------------------------
def _rnn_layer_ref(x, w_ih, w_hh, b):
    B, T, D = x.shape
    H = w_hh.shape[0]

    def step(h, xt):
        h_new = jnp.tanh(xt @ w_ih + h @ w_hh + b)
        return h_new, h_new

    _, ys = jax.lax.scan(step, jnp.zeros((B, H), jnp.float32),
                         jnp.swapaxes(x, 0, 1))
    return jnp.swapaxes(ys, 0, 1)


def simple_rnn_ref(x, params, pred_len):
    h = _rnn_layer_ref(x, params["w1_ih"], params["w1_hh"], params["b1"])
    h = _rnn_layer_ref(h, params["w2_ih"], params["w2_hh"], params["b2"])
    h = _rnn_layer_ref(h, params["w3_ih"], params["w3_hh"], params["b3"])
    y = h @ params["wd"] + params["bd"]
    return y[:, -pred_len:, :]


if __name__ == "__main__":
    # Small, forward-consistent shapes.
    input_dim, pred_len, output_dim = 4, 3, 2
    B, T, H = 2, 8, 100

    key = jax.random.PRNGKey(0)
    ks = jax.random.split(key, 12)
    scale = 0.1
    # Weights stored already transposed w.r.t. PyTorch (so kernel does x @ W);
    # biases are the folded b_ih + b_hh of each nn.RNN layer.
    params = {
        "w1_ih": scale * jax.random.normal(ks[0], (input_dim, H), jnp.float32),
        "w1_hh": scale * jax.random.normal(ks[1], (H, H), jnp.float32),
        "b1":    scale * jax.random.normal(ks[2], (H,), jnp.float32),
        "w2_ih": scale * jax.random.normal(ks[3], (H, H), jnp.float32),
        "w2_hh": scale * jax.random.normal(ks[4], (H, H), jnp.float32),
        "b2":    scale * jax.random.normal(ks[5], (H,), jnp.float32),
        "w3_ih": scale * jax.random.normal(ks[6], (H, H), jnp.float32),
        "w3_hh": scale * jax.random.normal(ks[7], (H, H), jnp.float32),
        "b3":    scale * jax.random.normal(ks[8], (H,), jnp.float32),
        "wd":    scale * jax.random.normal(ks[9], (H, output_dim), jnp.float32),
        "bd":    scale * jax.random.normal(ks[10], (output_dim,), jnp.float32),
    }

    x = jax.random.normal(ks[11], (B, T, input_dim), jnp.float32)

    y = simple_rnn_forward(x, params, pred_len)
    y = jax.block_until_ready(y)

    y_ref = simple_rnn_ref(x, params, pred_len)
    np.testing.assert_allclose(np.asarray(y), np.asarray(y_ref),
                               rtol=1e-5, atol=1e-5)
    assert y.shape == (B, pred_len, output_dim)

    # TODO(synk): dropout layers are identity here (eval-mode semantics).
    print("KERNEL_OK")
</pallas_src>

<mosaic_0001>
module attributes {stable_mosaic.version = 11 : i64} {
  func.func @_rnn_kernel(%arg0: i32, %arg1: i32, %arg2: memref<8x8x128xf32, #tpu.memory_space<vmem>>, %arg3: memref<128x128xf32, #tpu.memory_space<vmem>>, %arg4: memref<256x128xf32, #tpu.memory_space<vmem>>, %arg5: memref<1x128xf32, #tpu.memory_space<vmem>>, %arg6: memref<256x128xf32, #tpu.memory_space<vmem>>, %arg7: memref<1x128xf32, #tpu.memory_space<vmem>>, %arg8: memref<3x8x128xf32, #tpu.memory_space<vmem>>, %arg9: memref<8x128xf32, #tpu.memory_space<vmem>>, %arg10: memref<8x128xf32, #tpu.memory_space<vmem>>, %arg11: memref<8x128xf32, #tpu.memory_space<vmem>>) attributes {dimension_semantics = [#tpu.dimension_semantics<parallel>, #tpu.dimension_semantics<arbitrary>], iteration_bounds = array<i64: 1, 1>, scalar_prefetch = 0 : i64, scratch_operands = 3 : i64, tpu.core_type = #tpu.core_type<tc>, window_params = [{transform_indices = @transform_0, window_bounds = array<i64: 8, 8, 128>}, {pipeline_mode = #tpu.pipeline_mode<synchronous>, transform_indices = @transform_1, window_bounds = array<i64: 128, 128>}, {pipeline_mode = #tpu.pipeline_mode<synchronous>, transform_indices = @transform_2, window_bounds = array<i64: 256, 128>}, {pipeline_mode = #tpu.pipeline_mode<synchronous>, transform_indices = @transform_3, window_bounds = array<i64: 1, 128>}, {pipeline_mode = #tpu.pipeline_mode<synchronous>, transform_indices = @transform_4, window_bounds = array<i64: 256, 128>}, {pipeline_mode = #tpu.pipeline_mode<synchronous>, transform_indices = @transform_5, window_bounds = array<i64: 1, 128>}, {transform_indices = @transform_6, window_bounds = array<i64: 3, 8, 128>}]} {
    %c0_i32 = arith.constant 0 : i32
    %0 = arith.cmpi eq, %arg1, %c0_i32 : i32
    %1 = arith.extui %0 : i1 to i32
    %c0_i32_0 = arith.constant 0 : i32
    %2 = arith.cmpi ne, %1, %c0_i32_0 : i32
    scf.if %2 {
      %cst_157 = arith.constant 0.000000e+00 : f32
      %226 = vector.broadcast %cst_157 : f32 to vector<8x128xf32>
      %c0_158 = arith.constant 0 : index
      %c0_159 = arith.constant 0 : index
      %227 = vector.load %arg9[%c0_158, %c0_159] : memref<8x128xf32, #tpu.memory_space<vmem>>, vector<8x128xf32>
      tpu.vector_store %arg9[%c0_158, %c0_159], %226 {strides = array<i32>} : memref<8x128xf32, #tpu.memory_space<vmem>>, vector<8x128xf32>,
      %cst_160 = arith.constant 0.000000e+00 : f32
      %228 = vector.broadcast %cst_160 : f32 to vector<8x128xf32>
      %c0_161 = arith.constant 0 : index
      %c0_162 = arith.constant 0 : index
      %229 = vector.load %arg10[%c0_161, %c0_162] : memref<8x128xf32, #tpu.memory_space<vmem>>, vector<8x128xf32>
      tpu.vector_store %arg10[%c0_161, %c0_162], %228 {strides = array<i32>} : memref<8x128xf32, #tpu.memory_space<vmem>>, vector<8x128xf32>,
      %cst_163 = arith.constant 0.000000e+00 : f32
      %230 = vector.broadcast %cst_163 : f32 to vector<8x128xf32>
      %c0_164 = arith.constant 0 : index
      %c0_165 = arith.constant 0 : index
      %231 = vector.load %arg11[%c0_164, %c0_165] : memref<8x128xf32, #tpu.memory_space<vmem>>, vector<8x128xf32>
      tpu.vector_store %arg11[%c0_164, %c0_165], %230 {strides = array<i32>} : memref<8x128xf32, #tpu.memory_space<vmem>>, vector<8x128xf32>,
    } else {
    }
    %c8_i32 = arith.constant 8 : i32
    %3 = arith.muli %arg1, %c8_i32 : i32
    %c0 = arith.constant 0 : index
    %c0_1 = arith.constant 0 : index
    %4 = vector.load %arg9[%c0, %c0_1] : memref<8x128xf32, #tpu.memory_space<vmem>>, vector<8x128xf32>
    %c0_2 = arith.constant 0 : index
    %c0_3 = arith.constant 0 : index
    %5 = vector.load %arg10[%c0_2, %c0_3] : memref<8x128xf32, #tpu.memory_space<vmem>>, vector<8x128xf32>
    %c0_4 = arith.constant 0 : index
    %c0_5 = arith.constant 0 : index
    %6 = vector.load %arg11[%c0_4, %c0_5] : memref<8x128xf32, #tpu.memory_space<vmem>>, vector<8x128xf32>
    %c0_i32_6 = arith.constant 0 : i32
    %7 = arith.addi %3, %c0_i32_6 : i32
    %8 = arith.index_cast %c0_i32_6 : i32 to index
    %c0_7 = arith.constant 0 : index
    %c0_8 = arith.constant 0 : index
    %9 = vector.load %arg2[%8, %c0_7, %c0_8] : memref<8x8x128xf32, #tpu.memory_space<vmem>>, vector<1x8x128xf32>
    %10 = vector.shape_cast %9 : vector<1x8x128xf32> to vector<8x128xf32>
    %c0_9 = arith.constant 0 : index
    %c0_10 = arith.constant 0 : index
    %11 = vector.load %arg3[%c0_9, %c0_10] : memref<128x128xf32, #tpu.memory_space<vmem>>, vector<128x128xf32>
    %cst = arith.constant dense<0.000000e+00> : vector<8x128xf32>
    %12 = tpu.matmul %4, %11, %cst {dimension_numbers = #tpu.dot_dimension_numbers<[1], [0], [0], [1], [0, 0, 1, 1], [], []>} : vector<8x128xf32>, vector<128x128xf32>, vector<8x128xf32> -> vector<8x128xf32>
    %13 = arith.addf %10, %12 : vector<8x128xf32>
    %14 = math.tanh %13 : vector<8x128xf32>
    %15 = tpu.concatenate %14, %5 in 1 : vector<8x128xf32>, vector<8x128xf32> -> vector<8x256xf32>
    %c0_11 = arith.constant 0 : index
    %c0_12 = arith.constant 0 : index
    %16 = vector.load %arg4[%c0_11, %c0_12] : memref<256x128xf32, #tpu.memory_space<vmem>>, vector<256x128xf32>
    %cst_13 = arith.constant dense<0.000000e+00> : vector<8x128xf32>
    %17 = tpu.matmul %15, %16, %cst_13 {dimension_numbers = #tpu.dot_dimension_numbers<[1], [0], [0], [1], [0, 0, 1, 1], [], []>} : vector<8x256xf32>, vector<256x128xf32>, vector<8x128xf32> -> vector<8x128xf32>
    %c0_14 = arith.constant 0 : index
    %c0_15 = arith.constant 0 : index
    %18 = vector.load %arg5[%c0_14, %c0_15] : memref<1x128xf32, #tpu.memory_space<vmem>>, vector<1x128xf32>
    %19 = vector.broadcast %18 : vector<1x128xf32> to vector<8x128xf32>
    %20 = arith.addf %17, %19 : vector<8x128xf32>
    %21 = math.tanh %20 : vector<8x128xf32>
    %22 = tpu.concatenate %21, %6 in 1 : vector<8x128xf32>, vector<8x128xf32> -> vector<8x256xf32>
    %c0_16 = arith.constant 0 : index
    %c0_17 = arith.constant 0 : index
    %23 = vector.load %arg6[%c0_16, %c0_17] : memref<256x128xf32, #tpu.memory_space<vmem>>, vector<256x128xf32>
    %cst_18 = arith.constant dense<0.000000e+00> : vector<8x128xf32>
    %24 = tpu.matmul %22, %23, %cst_18 {dimension_numbers = #tpu.dot_dimension_numbers<[1], [0], [0], [1], [0, 0, 1, 1], [], []>} : vector<8x256xf32>, vector<256x128xf32>, vector<8x128xf32> -> vector<8x128xf32>
    %c0_19 = arith.constant 0 : index
    %c0_20 = arith.constant 0 : index
    %25 = vector.load %arg7[%c0_19, %c0_20] : memref<1x128xf32, #tpu.memory_space<vmem>>, vector<1x128xf32>
    %26 = vector.broadcast %25 : vector<1x128xf32> to vector<8x128xf32>
    %27 = arith.addf %24, %26 : vector<8x128xf32>
    %28 = math.tanh %27 : vector<8x128xf32>
    %c5_i32 = arith.constant 5 : i32
    %29 = arith.cmpi sge, %7, %c5_i32 : i32
    %c8_i32_21 = arith.constant 8 : i32
    %30 = arith.cmpi slt, %7, %c8_i32_21 : i32
    %31 = arith.andi %29, %30 : i1
    %32 = arith.extui %31 : i1 to i32
    %c0_i32_22 = arith.constant 0 : i32
    %33 = arith.cmpi ne, %32, %c0_i32_22 : i32
    scf.if %33 {
      %c5_i32_157 = arith.constant 5 : i32
      %226 = arith.subi %7, %c5_i32_157 : i32
      %227 = arith.index_cast %226 : i32 to index
      %c0_158 = arith.constant 0 : index
      %c0_159 = arith.constant 0 : index
      %228 = vector.load %arg8[%227, %c0_158, %c0_159] : memref<3x8x128xf32, #tpu.memory_space<vmem>>, vector<1x8x128xf32>
      %229 = vector.shape_cast %228 : vector<1x8x128xf32> to vector<8x128xf32>
      %230 = vector.shape_cast %28 : vector<8x128xf32> to vector<1x8x128xf32>
      tpu.vector_store %arg8[%227, %c0_158, %c0_159], %230 {strides = array<i32>} : memref<3x8x128xf32, #tpu.memory_space<vmem>>, vector<1x8x128xf32>,
    } else {
    }
    %c1_i32 = arith.constant 1 : i32
    %34 = arith.addi %3, %c1_i32 : i32
    %35 = arith.index_cast %c1_i32 : i32 to index
    %c0_23 = arith.constant 0 : index
    %c0_24 = arith.constant 0 : index
    %36 = vector.load %arg2[%35, %c0_23, %c0_24] : memref<8x8x128xf32, #tpu.memory_space<vmem>>, vector<1x8x128xf32>
    %37 = vector.shape_cast %36 : vector<1x8x128xf32> to vector<8x128xf32>
    %c0_25 = arith.constant 0 : index
    %c0_26 = arith.constant 0 : index
    %38 = vector.load %arg3[%c0_25, %c0_26] : memref<128x128xf32, #tpu.memory_space<vmem>>, vector<128x128xf32>
    %cst_27 = arith.constant dense<0.000000e+00> : vector<8x128xf32>
    %39 = tpu.matmul %14, %38, %cst_27 {dimension_numbers = #tpu.dot_dimension_numbers<[1], [0], [0], [1], [0, 0, 1, 1], [], []>} : vector<8x128xf32>, vector<128x128xf32>, vector<8x128xf32> -> vector<8x128xf32>
    %40 = arith.addf %37, %39 : vector<8x128xf32>
    %41 = math.tanh %40 : vector<8x128xf32>
    %42 = tpu.concatenate %41, %21 in 1 : vector<8x128xf32>, vector<8x128xf32> -> vector<8x256xf32>
    %c0_28 = arith.constant 0 : index
    %c0_29 = arith.constant 0 : index
    %43 = vector.load %arg4[%c0_28, %c0_29] : memref<256x128xf32, #tpu.memory_space<vmem>>, vector<256x128xf32>
    %cst_30 = arith.constant dense<0.000000e+00> : vector<8x128xf32>
    %44 = tpu.matmul %42, %43, %cst_30 {dimension_numbers = #tpu.dot_dimension_numbers<[1], [0], [0], [1], [0, 0, 1, 1], [], []>} : vector<8x256xf32>, vector<256x128xf32>, vector<8x128xf32> -> vector<8x128xf32>
    %c0_31 = arith.constant 0 : index
    %c0_32 = arith.constant 0 : index
    %45 = vector.load %arg5[%c0_31, %c0_32] : memref<1x128xf32, #tpu.memory_space<vmem>>, vector<1x128xf32>
    %46 = vector.broadcast %45 : vector<1x128xf32> to vector<8x128xf32>
    %47 = arith.addf %44, %46 : vector<8x128xf32>
    %48 = math.tanh %47 : vector<8x128xf32>
    %49 = tpu.concatenate %48, %28 in 1 : vector<8x128xf32>, vector<8x128xf32> -> vector<8x256xf32>
    %c0_33 = arith.constant 0 : index
    %c0_34 = arith.constant 0 : index
    %50 = vector.load %arg6[%c0_33, %c0_34] : memref<256x128xf32, #tpu.memory_space<vmem>>, vector<256x128xf32>
    %cst_35 = arith.constant dense<0.000000e+00> : vector<8x128xf32>
    %51 = tpu.matmul %49, %50, %cst_35 {dimension_numbers = #tpu.dot_dimension_numbers<[1], [0], [0], [1], [0, 0, 1, 1], [], []>} : vector<8x256xf32>, vector<256x128xf32>, vector<8x128xf32> -> vector<8x128xf32>
    %c0_36 = arith.constant 0 : index
    %c0_37 = arith.constant 0 : index
    %52 = vector.load %arg7[%c0_36, %c0_37] : memref<1x128xf32, #tpu.memory_space<vmem>>, vector<1x128xf32>
    %53 = vector.broadcast %52 : vector<1x128xf32> to vector<8x128xf32>
    %54 = arith.addf %51, %53 : vector<8x128xf32>
    %55 = math.tanh %54 : vector<8x128xf32>
    %c5_i32_38 = arith.constant 5 : i32
    %56 = arith.cmpi sge, %34, %c5_i32_38 : i32
    %c8_i32_39 = arith.constant 8 : i32
    %57 = arith.cmpi slt, %34, %c8_i32_39 : i32
    %58 = arith.andi %56, %57 : i1
    %59 = arith.extui %58 : i1 to i32
    %c0_i32_40 = arith.constant 0 : i32
    %60 = arith.cmpi ne, %59, %c0_i32_40 : i32
    scf.if %60 {
      %c5_i32_157 = arith.constant 5 : i32
      %226 = arith.subi %34, %c5_i32_157 : i32
      %227 = arith.index_cast %226 : i32 to index
      %c0_158 = arith.constant 0 : index
      %c0_159 = arith.constant 0 : index
      %228 = vector.load %arg8[%227, %c0_158, %c0_159] : memref<3x8x128xf32, #tpu.memory_space<vmem>>, vector<1x8x128xf32>
      %229 = vector.shape_cast %228 : vector<1x8x128xf32> to vector<8x128xf32>
      %230 = vector.shape_cast %55 : vector<8x128xf32> to vector<1x8x128xf32>
      tpu.vector_store %arg8[%227, %c0_158, %c0_159], %230 {strides = array<i32>} : memref<3x8x128xf32, #tpu.memory_space<vmem>>, vector<1x8x128xf32>,
    } else {
    }
    %c2_i32 = arith.constant 2 : i32
    %61 = arith.addi %3, %c2_i32 : i32
    %62 = arith.index_cast %c2_i32 : i32 to index
    %c0_41 = arith.constant 0 : index
    %c0_42 = arith.constant 0 : index
    %63 = vector.load %arg2[%62, %c0_41, %c0_42] : memref<8x8x128xf32, #tpu.memory_space<vmem>>, vector<1x8x128xf32>
    %64 = vector.shape_cast %63 : vector<1x8x128xf32> to vector<8x128xf32>
    %c0_43 = arith.constant 0 : index
    %c0_44 = arith.constant 0 : index
    %65 = vector.load %arg3[%c0_43, %c0_44] : memref<128x128xf32, #tpu.memory_space<vmem>>, vector<128x128xf32>
    %cst_45 = arith.constant dense<0.000000e+00> : vector<8x128xf32>
    %66 = tpu.matmul %41, %65, %cst_45 {dimension_numbers = #tpu.dot_dimension_numbers<[1], [0], [0], [1], [0, 0, 1, 1], [], []>} : vector<8x128xf32>, vector<128x128xf32>, vector<8x128xf32> -> vector<8x128xf32>
    %67 = arith.addf %64, %66 : vector<8x128xf32>
    %68 = math.tanh %67 : vector<8x128xf32>
    %69 = tpu.concatenate %68, %48 in 1 : vector<8x128xf32>, vector<8x128xf32> -> vector<8x256xf32>
    %c0_46 = arith.constant 0 : index
    %c0_47 = arith.constant 0 : index
    %70 = vector.load %arg4[%c0_46, %c0_47] : memref<256x128xf32, #tpu.memory_space<vmem>>, vector<256x128xf32>
    %cst_48 = arith.constant dense<0.000000e+00> : vector<8x128xf32>
    %71 = tpu.matmul %69, %70, %cst_48 {dimension_numbers = #tpu.dot_dimension_numbers<[1], [0], [0], [1], [0, 0, 1, 1], [], []>} : vector<8x256xf32>, vector<256x128xf32>, vector<8x128xf32> -> vector<8x128xf32>
    %c0_49 = arith.constant 0 : index
    %c0_50 = arith.constant 0 : index
    %72 = vector.load %arg5[%c0_49, %c0_50] : memref<1x128xf32, #tpu.memory_space<vmem>>, vector<1x128xf32>
    %73 = vector.broadcast %72 : vector<1x128xf32> to vector<8x128xf32>
    %74 = arith.addf %71, %73 : vector<8x128xf32>
    %75 = math.tanh %74 : vector<8x128xf32>
    %76 = tpu.concatenate %75, %55 in 1 : vector<8x128xf32>, vector<8x128xf32> -> vector<8x256xf32>
    %c0_51 = arith.constant 0 : index
    %c0_52 = arith.constant 0 : index
    %77 = vector.load %arg6[%c0_51, %c0_52] : memref<256x128xf32, #tpu.memory_space<vmem>>, vector<256x128xf32>
    %cst_53 = arith.constant dense<0.000000e+00> : vector<8x128xf32>
    %78 = tpu.matmul %76, %77, %cst_53 {dimension_numbers = #tpu.dot_dimension_numbers<[1], [0], [0], [1], [0, 0, 1, 1], [], []>} : vector<8x256xf32>, vector<256x128xf32>, vector<8x128xf32> -> vector<8x128xf32>
    %c0_54 = arith.constant 0 : index
    %c0_55 = arith.constant 0 : index
    %79 = vector.load %arg7[%c0_54, %c0_55] : memref<1x128xf32, #tpu.memory_space<vmem>>, vector<1x128xf32>
    %80 = vector.broadcast %79 : vector<1x128xf32> to vector<8x128xf32>
    %81 = arith.addf %78, %80 : vector<8x128xf32>
    %82 = math.tanh %81 : vector<8x128xf32>
    %c5_i32_56 = arith.constant 5 : i32
    %83 = arith.cmpi sge, %61, %c5_i32_56 : i32
    %c8_i32_57 = arith.constant 8 : i32
    %84 = arith.cmpi slt, %61, %c8_i32_57 : i32
    %85 = arith.andi %83, %84 : i1
    %86 = arith.extui %85 : i1 to i32
    %c0_i32_58 = arith.constant 0 : i32
    %87 = arith.cmpi ne, %86, %c0_i32_58 : i32
    scf.if %87 {
      %c5_i32_157 = arith.constant 5 : i32
      %226 = arith.subi %61, %c5_i32_157 : i32
      %227 = arith.index_cast %226 : i32 to index
      %c0_158 = arith.constant 0 : index
      %c0_159 = arith.constant 0 : index
      %228 = vector.load %arg8[%227, %c0_158, %c0_159] : memref<3x8x128xf32, #tpu.memory_space<vmem>>, vector<1x8x128xf32>
      %229 = vector.shape_cast %228 : vector<1x8x128xf32> to vector<8x128xf32>
      %230 = vector.shape_cast %82 : vector<8x128xf32> to vector<1x8x128xf32>
      tpu.vector_store %arg8[%227, %c0_158, %c0_159], %230 {strides = array<i32>} : memref<3x8x128xf32, #tpu.memory_space<vmem>>, vector<1x8x128xf32>,
    } else {
    }
    %c3_i32 = arith.constant 3 : i32
    %88 = arith.addi %3, %c3_i32 : i32
    %89 = arith.index_cast %c3_i32 : i32 to index
    %c0_59 = arith.constant 0 : index
    %c0_60 = arith.constant 0 : index
    %90 = vector.load %arg2[%89, %c0_59, %c0_60] : memref<8x8x128xf32, #tpu.memory_space<vmem>>, vector<1x8x128xf32>
    %91 = vector.shape_cast %90 : vector<1x8x128xf32> to vector<8x128xf32>
    %c0_61 = arith.constant 0 : index
    %c0_62 = arith.constant 0 : index
    %92 = vector.load %arg3[%c0_61, %c0_62] : memref<128x128xf32, #tpu.memory_space<vmem>>, vector<128x128xf32>
    %cst_63 = arith.constant dense<0.000000e+00> : vector<8x128xf32>
    %93 = tpu.matmul %68, %92, %cst_63 {dimension_numbers = #tpu.dot_dimension_numbers<[1], [0], [0], [1], [0, 0, 1, 1], [], []>} : vector<8x128xf32>, vector<128x128xf32>, vector<8x128xf32> -> vector<8x128xf32>
    %94 = arith.addf %91, %93 : vector<8x128xf32>
    %95 = math.tanh %94 : vector<8x128xf32>
    %96 = tpu.concatenate %95, %75 in 1 : vector<8x128xf32>, vector<8x128xf32> -> vector<8x256xf32>
    %c0_64 = arith.constant 0 : index
    %c0_65 = arith.constant 0 : index
    %97 = vector.load %arg4[%c0_64, %c0_65] : memref<256x128xf32, #tpu.memory_space<vmem>>, vector<256x128xf32>
    %cst_66 = arith.constant dense<0.000000e+00> : vector<8x128xf32>
    %98 = tpu.matmul %96, %97, %cst_66 {dimension_numbers = #tpu.dot_dimension_numbers<[1], [0], [0], [1], [0, 0, 1, 1], [], []>} : vector<8x256xf32>, vector<256x128xf32>, vector<8x128xf32> -> vector<8x128xf32>
    %c0_67 = arith.constant 0 : index
    %c0_68 = arith.constant 0 : index
    %99 = vector.load %arg5[%c0_67, %c0_68] : memref<1x128xf32, #tpu.memory_space<vmem>>, vector<1x128xf32>
    %100 = vector.broadcast %99 : vector<1x128xf32> to vector<8x128xf32>
    %101 = arith.addf %98, %100 : vector<8x128xf32>
    %102 = math.tanh %101 : vector<8x128xf32>
    %103 = tpu.concatenate %102, %82 in 1 : vector<8x128xf32>, vector<8x128xf32> -> vector<8x256xf32>
    %c0_69 = arith.constant 0 : index
    %c0_70 = arith.constant 0 : index
    %104 = vector.load %arg6[%c0_69, %c0_70] : memref<256x128xf32, #tpu.memory_space<vmem>>, vector<256x128xf32>
    %cst_71 = arith.constant dense<0.000000e+00> : vector<8x128xf32>
    %105 = tpu.matmul %103, %104, %cst_71 {dimension_numbers = #tpu.dot_dimension_numbers<[1], [0], [0], [1], [0, 0, 1, 1], [], []>} : vector<8x256xf32>, vector<256x128xf32>, vector<8x128xf32> -> vector<8x128xf32>
    %c0_72 = arith.constant 0 : index
    %c0_73 = arith.constant 0 : index
    %106 = vector.load %arg7[%c0_72, %c0_73] : memref<1x128xf32, #tpu.memory_space<vmem>>, vector<1x128xf32>
    %107 = vector.broadcast %106 : vector<1x128xf32> to vector<8x128xf32>
    %108 = arith.addf %105, %107 : vector<8x128xf32>
    %109 = math.tanh %108 : vector<8x128xf32>
    %c5_i32_74 = arith.constant 5 : i32
    %110 = arith.cmpi sge, %88, %c5_i32_74 : i32
    %c8_i32_75 = arith.constant 8 : i32
    %111 = arith.cmpi slt, %88, %c8_i32_75 : i32
    %112 = arith.andi %110, %111 : i1
    %113 = arith.extui %112 : i1 to i32
    %c0_i32_76 = arith.constant 0 : i32
    %114 = arith.cmpi ne, %113, %c0_i32_76 : i32
    scf.if %114 {
      %c5_i32_157 = arith.constant 5 : i32
      %226 = arith.subi %88, %c5_i32_157 : i32
      %227 = arith.index_cast %226 : i32 to index
      %c0_158 = arith.constant 0 : index
      %c0_159 = arith.constant 0 : index
      %228 = vector.load %arg8[%227, %c0_158, %c0_159] : memref<3x8x128xf32, #tpu.memory_space<vmem>>, vector<1x8x128xf32>
      %229 = vector.shape_cast %228 : vector<1x8x128xf32> to vector<8x128xf32>
      %230 = vector.shape_cast %109 : vector<8x128xf32> to vector<1x8x128xf32>
      tpu.vector_store %arg8[%227, %c0_158, %c0_159], %230 {strides = array<i32>} : memref<3x8x128xf32, #tpu.memory_space<vmem>>, vector<1x8x128xf32>,
    } else {
    }
    %c4_i32 = arith.constant 4 : i32
    %115 = arith.addi %3, %c4_i32 : i32
    %116 = arith.index_cast %c4_i32 : i32 to index
    %c0_77 = arith.constant 0 : index
    %c0_78 = arith.constant 0 : index
    %117 = vector.load %arg2[%116, %c0_77, %c0_78] : memref<8x8x128xf32, #tpu.memory_space<vmem>>, vector<1x8x128xf32>
    %118 = vector.shape_cast %117 : vector<1x8x128xf32> to vector<8x128xf32>
    %c0_79 = arith.constant 0 : index
    %c0_80 = arith.constant 0 : index
    %119 = vector.load %arg3[%c0_79, %c0_80] : memref<128x128xf32, #tpu.memory_space<vmem>>, vector<128x128xf32>
    %cst_81 = arith.constant dense<0.000000e+00> : vector<8x128xf32>
    %120 = tpu.matmul %95, %119, %cst_81 {dimension_numbers = #tpu.dot_dimension_numbers<[1], [0], [0], [1], [0, 0, 1, 1], [], []>} : vector<8x128xf32>, vector<128x128xf32>, vector<8x128xf32> -> vector<8x128xf32>
    %121 = arith.addf %118, %120 : vector<8x128xf32>
    %122 = math.tanh %121 : vector<8x128xf32>
    %123 = tpu.concatenate %122, %102 in 1 : vector<8x128xf32>, vector<8x128xf32> -> vector<8x256xf32>
    %c0_82 = arith.constant 0 : index
    %c0_83 = arith.constant 0 : index
    %124 = vector.load %arg4[%c0_82, %c0_83] : memref<256x128xf32, #tpu.memory_space<vmem>>, vector<256x128xf32>
    %cst_84 = arith.constant dense<0.000000e+00> : vector<8x128xf32>
    %125 = tpu.matmul %123, %124, %cst_84 {dimension_numbers = #tpu.dot_dimension_numbers<[1], [0], [0], [1], [0, 0, 1, 1], [], []>} : vector<8x256xf32>, vector<256x128xf32>, vector<8x128xf32> -> vector<8x128xf32>
    %c0_85 = arith.constant 0 : index
    %c0_86 = arith.constant 0 : index
    %126 = vector.load %arg5[%c0_85, %c0_86] : memref<1x128xf32, #tpu.memory_space<vmem>>, vector<1x128xf32>
    %127 = vector.broadcast %126 : vector<1x128xf32> to vector<8x128xf32>
    %128 = arith.addf %125, %127 : vector<8x128xf32>
    %129 = math.tanh %128 : vector<8x128xf32>
    %130 = tpu.concatenate %129, %109 in 1 : vector<8x128xf32>, vector<8x128xf32> -> vector<8x256xf32>
    %c0_87 = arith.constant 0 : index
    %c0_88 = arith.constant 0 : index
    %131 = vector.load %arg6[%c0_87, %c0_88] : memref<256x128xf32, #tpu.memory_space<vmem>>, vector<256x128xf32>
    %cst_89 = arith.constant dense<0.000000e+00> : vector<8x128xf32>
    %132 = tpu.matmul %130, %131, %cst_89 {dimension_numbers = #tpu.dot_dimension_numbers<[1], [0], [0], [1], [0, 0, 1, 1], [], []>} : vector<8x256xf32>, vector<256x128xf32>, vector<8x128xf32> -> vector<8x128xf32>
    %c0_90 = arith.constant 0 : index
    %c0_91 = arith.constant 0 : index
    %133 = vector.load %arg7[%c0_90, %c0_91] : memref<1x128xf32, #tpu.memory_space<vmem>>, vector<1x128xf32>
    %134 = vector.broadcast %133 : vector<1x128xf32> to vector<8x128xf32>
    %135 = arith.addf %132, %134 : vector<8x128xf32>
    %136 = math.tanh %135 : vector<8x128xf32>
    %c5_i32_92 = arith.constant 5 : i32
    %137 = arith.cmpi sge, %115, %c5_i32_92 : i32
    %c8_i32_93 = arith.constant 8 : i32
    %138 = arith.cmpi slt, %115, %c8_i32_93 : i32
    %139 = arith.andi %137, %138 : i1
    %140 = arith.extui %139 : i1 to i32
    %c0_i32_94 = arith.constant 0 : i32
    %141 = arith.cmpi ne, %140, %c0_i32_94 : i32
    scf.if %141 {
      %c5_i32_157 = arith.constant 5 : i32
      %226 = arith.subi %115, %c5_i32_157 : i32
      %227 = arith.index_cast %226 : i32 to index
      %c0_158 = arith.constant 0 : index
      %c0_159 = arith.constant 0 : index
      %228 = vector.load %arg8[%227, %c0_158, %c0_159] : memref<3x8x128xf32, #tpu.memory_space<vmem>>, vector<1x8x128xf32>
      %229 = vector.shape_cast %228 : vector<1x8x128xf32> to vector<8x128xf32>
      %230 = vector.shape_cast %136 : vector<8x128xf32> to vector<1x8x128xf32>
      tpu.vector_store %arg8[%227, %c0_158, %c0_159], %230 {strides = array<i32>} : memref<3x8x128xf32, #tpu.memory_space<vmem>>, vector<1x8x128xf32>,
    } else {
    }
    %c5_i32_95 = arith.constant 5 : i32
    %142 = arith.addi %3, %c5_i32_95 : i32
    %143 = arith.index_cast %c5_i32_95 : i32 to index
    %c0_96 = arith.constant 0 : index
    %c0_97 = arith.constant 0 : index
    %144 = vector.load %arg2[%143, %c0_96, %c0_97] : memref<8x8x128xf32, #tpu.memory_space<vmem>>, vector<1x8x128xf32>
    %145 = vector.shape_cast %144 : vector<1x8x128xf32> to vector<8x128xf32>
    %c0_98 = arith.constant 0 : index
    %c0_99 = arith.constant 0 : index
    %146 = vector.load %arg3[%c0_98, %c0_99] : memref<128x128xf32, #tpu.memory_space<vmem>>, vector<128x128xf32>
    %cst_100 = arith.constant dense<0.000000e+00> : vector<8x128xf32>
    %147 = tpu.matmul %122, %146, %cst_100 {dimension_numbers = #tpu.dot_dimension_numbers<[1], [0], [0], [1], [0, 0, 1, 1], [], []>} : vector<8x128xf32>, vector<128x128xf32>, vector<8x128xf32> -> vector<8x128xf32>
    %148 = arith.addf %145, %147 : vector<8x128xf32>
    %149 = math.tanh %148 : vector<8x128xf32>
    %150 = tpu.concatenate %149, %129 in 1 : vector<8x128xf32>, vector<8x128xf32> -> vector<8x256xf32>
    %c0_101 = arith.constant 0 : index
    %c0_102 = arith.constant 0 : index
    %151 = vector.load %arg4[%c0_101, %c0_102] : memref<256x128xf32, #tpu.memory_space<vmem>>, vector<256x128xf32>
    %cst_103 = arith.constant dense<0.000000e+00> : vector<8x128xf32>
    %152 = tpu.matmul %150, %151, %cst_103 {dimension_numbers = #tpu.dot_dimension_numbers<[1], [0], [0], [1], [0, 0, 1, 1], [], []>} : vector<8x256xf32>, vector<256x128xf32>, vector<8x128xf32> -> vector<8x128xf32>
    %c0_104 = arith.constant 0 : index
    %c0_105 = arith.constant 0 : index
    %153 = vector.load %arg5[%c0_104, %c0_105] : memref<1x128xf32, #tpu.memory_space<vmem>>, vector<1x128xf32>
    %154 = vector.broadcast %153 : vector<1x128xf32> to vector<8x128xf32>
    %155 = arith.addf %152, %154 : vector<8x128xf32>
    %156 = math.tanh %155 : vector<8x128xf32>
    %157 = tpu.concatenate %156, %136 in 1 : vector<8x128xf32>, vector<8x128xf32> -> vector<8x256xf32>
    %c0_106 = arith.constant 0 : index
    %c0_107 = arith.constant 0 : index
    %158 = vector.load %arg6[%c0_106, %c0_107] : memref<256x128xf32, #tpu.memory_space<vmem>>, vector<256x128xf32>
    %cst_108 = arith.constant dense<0.000000e+00> : vector<8x128xf32>
    %159 = tpu.matmul %157, %158, %cst_108 {dimension_numbers = #tpu.dot_dimension_numbers<[1], [0], [0], [1], [0, 0, 1, 1], [], []>} : vector<8x256xf32>, vector<256x128xf32>, vector<8x128xf32> -> vector<8x128xf32>
    %c0_109 = arith.constant 0 : index
    %c0_110 = arith.constant 0 : index
    %160 = vector.load %arg7[%c0_109, %c0_110] : memref<1x128xf32, #tpu.memory_space<vmem>>, vector<1x128xf32>
    %161 = vector.broadcast %160 : vector<1x128xf32> to vector<8x128xf32>
    %162 = arith.addf %159, %161 : vector<8x128xf32>
    %163 = math.tanh %162 : vector<8x128xf32>
    %c5_i32_111 = arith.constant 5 : i32
    %164 = arith.cmpi sge, %142, %c5_i32_111 : i32
    %c8_i32_112 = arith.constant 8 : i32
    %165 = arith.cmpi slt, %142, %c8_i32_112 : i32
    %166 = arith.andi %164, %165 : i1
    %167 = arith.extui %166 : i1 to i32
    %c0_i32_113 = arith.constant 0 : i32
    %168 = arith.cmpi ne, %167, %c0_i32_113 : i32
    scf.if %168 {
      %c5_i32_157 = arith.constant 5 : i32
      %226 = arith.subi %142, %c5_i32_157 : i32
      %227 = arith.index_cast %226 : i32 to index
      %c0_158 = arith.constant 0 : index
      %c0_159 = arith.constant 0 : index
      %228 = vector.load %arg8[%227, %c0_158, %c0_159] : memref<3x8x128xf32, #tpu.memory_space<vmem>>, vector<1x8x128xf32>
      %229 = vector.shape_cast %228 : vector<1x8x128xf32> to vector<8x128xf32>
      %230 = vector.shape_cast %163 : vector<8x128xf32> to vector<1x8x128xf32>
      tpu.vector_store %arg8[%227, %c0_158, %c0_159], %230 {strides = array<i32>} : memref<3x8x128xf32, #tpu.memory_space<vmem>>, vector<1x8x128xf32>,
    } else {
    }
    %c6_i32 = arith.constant 6 : i32
    %169 = arith.addi %3, %c6_i32 : i32
    %170 = arith.index_cast %c6_i32 : i32 to index
    %c0_114 = arith.constant 0 : index
    %c0_115 = arith.constant 0 : index
    %171 = vector.load %arg2[%170, %c0_114, %c0_115] : memref<8x8x128xf32, #tpu.memory_space<vmem>>, vector<1x8x128xf32>
    %172 = vector.shape_cast %171 : vector<1x8x128xf32> to vector<8x128xf32>
    %c0_116 = arith.constant 0 : index
    %c0_117 = arith.constant 0 : index
    %173 = vector.load %arg3[%c0_116, %c0_117] : memref<128x128xf32, #tpu.memory_space<vmem>>, vector<128x128xf32>
    %cst_118 = arith.constant dense<0.000000e+00> : vector<8x128xf32>
    %174 = tpu.matmul %149, %173, %cst_118 {dimension_numbers = #tpu.dot_dimension_numbers<[1], [0], [0], [1], [0, 0, 1, 1], [], []>} : vector<8x128xf32>, vector<128x128xf32>, vector<8x128xf32> -> vector<8x128xf32>
    %175 = arith.addf %172, %174 : vector<8x128xf32>
    %176 = math.tanh %175 : vector<8x128xf32>
    %177 = tpu.concatenate %176, %156 in 1 : vector<8x128xf32>, vector<8x128xf32> -> vector<8x256xf32>
    %c0_119 = arith.constant 0 : index
    %c0_120 = arith.constant 0 : index
    %178 = vector.load %arg4[%c0_119, %c0_120] : memref<256x128xf32, #tpu.memory_space<vmem>>, vector<256x128xf32>
    %cst_121 = arith.constant dense<0.000000e+00> : vector<8x128xf32>
    %179 = tpu.matmul %177, %178, %cst_121 {dimension_numbers = #tpu.dot_dimension_numbers<[1], [0], [0], [1], [0, 0, 1, 1], [], []>} : vector<8x256xf32>, vector<256x128xf32>, vector<8x128xf32> -> vector<8x128xf32>
    %c0_122 = arith.constant 0 : index
    %c0_123 = arith.constant 0 : index
    %180 = vector.load %arg5[%c0_122, %c0_123] : memref<1x128xf32, #tpu.memory_space<vmem>>, vector<1x128xf32>
    %181 = vector.broadcast %180 : vector<1x128xf32> to vector<8x128xf32>
    %182 = arith.addf %179, %181 : vector<8x128xf32>
    %183 = math.tanh %182 : vector<8x128xf32>
    %184 = tpu.concatenate %183, %163 in 1 : vector<8x128xf32>, vector<8x128xf32> -> vector<8x256xf32>
    %c0_124 = arith.constant 0 : index
    %c0_125 = arith.constant 0 : index
    %185 = vector.load %arg6[%c0_124, %c0_125] : memref<256x128xf32, #tpu.memory_space<vmem>>, vector<256x128xf32>
    %cst_126 = arith.constant dense<0.000000e+00> : vector<8x128xf32>
    %186 = tpu.matmul %184, %185, %cst_126 {dimension_numbers = #tpu.dot_dimension_numbers<[1], [0], [0], [1], [0, 0, 1, 1], [], []>} : vector<8x256xf32>, vector<256x128xf32>, vector<8x128xf32> -> vector<8x128xf32>
    %c0_127 = arith.constant 0 : index
    %c0_128 = arith.constant 0 : index
    %187 = vector.load %arg7[%c0_127, %c0_128] : memref<1x128xf32, #tpu.memory_space<vmem>>, vector<1x128xf32>
    %188 = vector.broadcast %187 : vector<1x128xf32> to vector<8x128xf32>
    %189 = arith.addf %186, %188 : vector<8x128xf32>
    %190 = math.tanh %189 : vector<8x128xf32>
    %c5_i32_129 = arith.constant 5 : i32
    %191 = arith.cmpi sge, %169, %c5_i32_129 : i32
    %c8_i32_130 = arith.constant 8 : i32
    %192 = arith.cmpi slt, %169, %c8_i32_130 : i32
    %193 = arith.andi %191, %192 : i1
    %194 = arith.extui %193 : i1 to i32
    %c0_i32_131 = arith.constant 0 : i32
    %195 = arith.cmpi ne, %194, %c0_i32_131 : i32
    scf.if %195 {
      %c5_i32_157 = arith.constant 5 : i32
      %226 = arith.subi %169, %c5_i32_157 : i32
      %227 = arith.index_cast %226 : i32 to index
      %c0_158 = arith.constant 0 : index
      %c0_159 = arith.constant 0 : index
      %228 = vector.load %arg8[%227, %c0_158, %c0_159] : memref<3x8x128xf32, #tpu.memory_space<vmem>>, vector<1x8x128xf32>
      %229 = vector.shape_cast %228 : vector<1x8x128xf32> to vector<8x128xf32>
      %230 = vector.shape_cast %190 : vector<8x128xf32> to vector<1x8x128xf32>
      tpu.vector_store %arg8[%227, %c0_158, %c0_159], %230 {strides = array<i32>} : memref<3x8x128xf32, #tpu.memory_space<vmem>>, vector<1x8x128xf32>,
    } else {
    }
    %c7_i32 = arith.constant 7 : i32
    %196 = arith.addi %3, %c7_i32 : i32
    %197 = arith.index_cast %c7_i32 : i32 to index
    %c0_132 = arith.constant 0 : index
    %c0_133 = arith.constant 0 : index
    %198 = vector.load %arg2[%197, %c0_132, %c0_133] : memref<8x8x128xf32, #tpu.memory_space<vmem>>, vector<1x8x128xf32>
    %199 = vector.shape_cast %198 : vector<1x8x128xf32> to vector<8x128xf32>
    %c0_134 = arith.constant 0 : index
    %c0_135 = arith.constant 0 : index
    %200 = vector.load %arg3[%c0_134, %c0_135] : memref<128x128xf32, #tpu.memory_space<vmem>>, vector<128x128xf32>
    %cst_136 = arith.constant dense<0.000000e+00> : vector<8x128xf32>
    %201 = tpu.matmul %176, %200, %cst_136 {dimension_numbers = #tpu.dot_dimension_numbers<[1], [0], [0], [1], [0, 0, 1, 1], [], []>} : vector<8x128xf32>, vector<128x128xf32>, vector<8x128xf32> -> vector<8x128xf32>
    %202 = arith.addf %199, %201 : vector<8x128xf32>
    %203 = math.tanh %202 : vector<8x128xf32>
    %204 = tpu.concatenate %203, %183 in 1 : vector<8x128xf32>, vector<8x128xf32> -> vector<8x256xf32>
    %c0_137 = arith.constant 0 : index
    %c0_138 = arith.constant 0 : index
    %205 = vector.load %arg4[%c0_137, %c0_138] : memref<256x128xf32, #tpu.memory_space<vmem>>, vector<256x128xf32>
    %cst_139 = arith.constant dense<0.000000e+00> : vector<8x128xf32>
    %206 = tpu.matmul %204, %205, %cst_139 {dimension_numbers = #tpu.dot_dimension_numbers<[1], [0], [0], [1], [0, 0, 1, 1], [], []>} : vector<8x256xf32>, vector<256x128xf32>, vector<8x128xf32> -> vector<8x128xf32>
    %c0_140 = arith.constant 0 : index
    %c0_141 = arith.constant 0 : index
    %207 = vector.load %arg5[%c0_140, %c0_141] : memref<1x128xf32, #tpu.memory_space<vmem>>, vector<1x128xf32>
    %208 = vector.broadcast %207 : vector<1x128xf32> to vector<8x128xf32>
    %209 = arith.addf %206, %208 : vector<8x128xf32>
    %210 = math.tanh %209 : vector<8x128xf32>
    %211 = tpu.concatenate %210, %190 in 1 : vector<8x128xf32>, vector<8x128xf32> -> vector<8x256xf32>
    %c0_142 = arith.constant 0 : index
    %c0_143 = arith.constant 0 : index
    %212 = vector.load %arg6[%c0_142, %c0_143] : memref<256x128xf32, #tpu.memory_space<vmem>>, vector<256x128xf32>
    %cst_144 = arith.constant dense<0.000000e+00> : vector<8x128xf32>
    %213 = tpu.matmul %211, %212, %cst_144 {dimension_numbers = #tpu.dot_dimension_numbers<[1], [0], [0], [1], [0, 0, 1, 1], [], []>} : vector<8x256xf32>, vector<256x128xf32>, vector<8x128xf32> -> vector<8x128xf32>
    %c0_145 = arith.constant 0 : index
    %c0_146 = arith.constant 0 : index
    %214 = vector.load %arg7[%c0_145, %c0_146] : memref<1x128xf32, #tpu.memory_space<vmem>>, vector<1x128xf32>
    %215 = vector.broadcast %214 : vector<1x128xf32> to vector<8x128xf32>
    %216 = arith.addf %213, %215 : vector<8x128xf32>
    %217 = math.tanh %216 : vector<8x128xf32>
    %c5_i32_147 = arith.constant 5 : i32
    %218 = arith.cmpi sge, %196, %c5_i32_147 : i32
    %c8_i32_148 = arith.constant 8 : i32
    %219 = arith.cmpi slt, %196, %c8_i32_148 : i32
    %220 = arith.andi %218, %219 : i1
    %221 = arith.extui %220 : i1 to i32
    %c0_i32_149 = arith.constant 0 : i32
    %222 = arith.cmpi ne, %221, %c0_i32_149 : i32
    scf.if %222 {
      %c5_i32_157 = arith.constant 5 : i32
      %226 = arith.subi %196, %c5_i32_157 : i32
      %227 = arith.index_cast %226 : i32 to index
      %c0_158 = arith.constant 0 : index
      %c0_159 = arith.constant 0 : index
      %228 = vector.load %arg8[%227, %c0_158, %c0_159] : memref<3x8x128xf32, #tpu.memory_space<vmem>>, vector<1x8x128xf32>
      %229 = vector.shape_cast %228 : vector<1x8x128xf32> to vector<8x128xf32>
      %230 = vector.shape_cast %217 : vector<8x128xf32> to vector<1x8x128xf32>
      tpu.vector_store %arg8[%227, %c0_158, %c0_159], %230 {strides = array<i32>} : memref<3x8x128xf32, #tpu.memory_space<vmem>>, vector<1x8x128xf32>,
    } else {
    }
    %c8_i32_150 = arith.constant 8 : i32
    %c0_151 = arith.constant 0 : index
    %c0_152 = arith.constant 0 : index
    %223 = vector.load %arg9[%c0_151, %c0_152] : memref<8x128xf32, #tpu.memory_space<vmem>>, vector<8x128xf32>
    tpu.vector_store %arg9[%c0_151, %c0_152], %203 {strides = array<i32>} : memref<8x128xf32, #tpu.memory_space<vmem>>, vector<8x128xf32>,
    %c0_153 = arith.constant 0 : index
    %c0_154 = arith.constant 0 : index
    %224 = vector.load %arg10[%c0_153, %c0_154] : memref<8x128xf32, #tpu.memory_space<vmem>>, vector<8x128xf32>
    tpu.vector_store %arg10[%c0_153, %c0_154], %210 {strides = array<i32>} : memref<8x128xf32, #tpu.memory_space<vmem>>, vector<8x128xf32>,
    %c0_155 = arith.constant 0 : index
    %c0_156 = arith.constant 0 : index
    %225 = vector.load %arg11[%c0_155, %c0_156] : memref<8x128xf32, #tpu.memory_space<vmem>>, vector<8x128xf32>
    tpu.vector_store %arg11[%c0_155, %c0_156], %217 {strides = array<i32>} : memref<8x128xf32, #tpu.memory_space<vmem>>, vector<8x128xf32>,
    return
  }
  func.func @transform_0(%arg0: i32, %arg1: i32) -> (i32, i32, i32) {
    %c0_i32 = arith.constant 0 : i32
    %c0_i32_0 = arith.constant 0 : i32
    return %arg1, %arg0, %c0_i32 : i32, i32, i32
  }
  func.func @transform_1(%arg0: i32, %arg1: i32) -> (i32, i32) {
    %c0_i32 = arith.constant 0 : i32
    %c0_i32_0 = arith.constant 0 : i32
    %c0_i32_1 = arith.constant 0 : i32
    return %c0_i32, %c0_i32_0 : i32, i32
  }
  func.func @transform_2(%arg0: i32, %arg1: i32) -> (i32, i32) {
    %c0_i32 = arith.constant 0 : i32
    %c0_i32_0 = arith.constant 0 : i32
    %c0_i32_1 = arith.constant 0 : i32
    return %c0_i32, %c0_i32_0 : i32, i32
  }
  func.func @transform_3(%arg0: i32, %arg1: i32) -> (i32, i32) {
    %c0_i32 = arith.constant 0 : i32
    %c0_i32_0 = arith.constant 0 : i32
    %c0_i32_1 = arith.constant 0 : i32
    return %c0_i32, %c0_i32_0 : i32, i32
  }
  func.func @transform_4(%arg0: i32, %arg1: i32) -> (i32, i32) {
    %c0_i32 = arith.constant 0 : i32
    %c0_i32_0 = arith.constant 0 : i32
    %c0_i32_1 = arith.constant 0 : i32
    return %c0_i32, %c0_i32_0 : i32, i32
  }
  func.func @transform_5(%arg0: i32, %arg1: i32) -> (i32, i32) {
    %c0_i32 = arith.constant 0 : i32
    %c0_i32_0 = arith.constant 0 : i32
    %c0_i32_1 = arith.constant 0 : i32
    return %c0_i32, %c0_i32_0 : i32, i32
  }
  func.func @transform_6(%arg0: i32, %arg1: i32) -> (i32, i32, i32) {
    %c0_i32 = arith.constant 0 : i32
    %c0_i32_0 = arith.constant 0 : i32
    %c0_i32_1 = arith.constant 0 : i32
    return %c0_i32, %arg0, %c0_i32_0 : i32, i32, i32
  }
}

</mosaic_0001>

<llo_original>
// kernel: tpu_custom_call.1
$region0: #{tpu_custom_call.1}
  #allocation0 [shape = 'u32[]', space=smem, size = 0x4, offset = 0x4, fixed_abs, tag = 'smem constant byte address 0x4 - core index']
  #allocation1 [shape = 'u32[144,128]{1,0:T(1,128)}', space=vmem, size = 0x12000, scoped, tag = 'internal scratch']
  #allocation2 [shape = 'f32[8,128]{1,0:T(8,128)}', space=vmem, size = 0x1000, scoped, tag = 'scratch operand']
  #allocation3 [shape = 'f32[8,128]{1,0:T(8,128)}', space=vmem, size = 0x1000, scoped, tag = 'scratch operand']
  #allocation4 [shape = 'f32[8,128]{1,0:T(8,128)}', space=vmem, size = 0x1000, scoped, tag = 'scratch operand']
  %s0 = inlined_call_operand.hbm [shape: f32[8,8,128], index: 0, kind: input, shape index: {}]
  %s1 = inlined_call_operand.hbm [shape: f32[128,128], index: 1, kind: input, shape index: {}]
  %s2 = inlined_call_operand.hbm [shape: f32[256,128], index: 2, kind: input, shape index: {}]
  %s3 = inlined_call_operand.vmem [shape: f32[1,128], index: 3, kind: input, shape index: {}]
  %s4 = inlined_call_operand.hbm [shape: f32[256,128], index: 4, kind: input, shape index: {}]
  %s5 = inlined_call_operand.vmem [shape: f32[1,128], index: 5, kind: input, shape index: {}]
  %s6 = inlined_call_operand.hbm [shape: f32[3,8,128], index: 6, kind: output, shape index: {}]
  %s7 = sld [smem:[#allocation0]]
  $region86: #{tpu_custom_call.1} parent=0
    _
  %s9 = ssub.s32 1, %s7
  %s10 = scalar_select 0, %s9, %s7
  $region1: #{tpu_custom_call.1} parent=0
    #allocation5 [shape = 'u8[32768]{0}', space=vmem, size = 0x8000, scoped, tag = 'input window, operand 0, single buffered']
    #allocation6 [shape = 's32[1]{0}', space=sflag, size = 0x4, scoped, tag = 'scoped memory for tpu_custom_call.1']
    #allocation7 [shape = 's32[1]{0}', space=sflag, size = 0x4, scoped, tag = 'scoped memory for tpu_custom_call.1']
    #allocation8 [shape = 'u8[65536]{0}', space=vmem, size = 0x10000, scoped, tag = 'input window, operand 1, single buffered']
    #allocation9 [shape = 's32[1]{0}', space=sflag, size = 0x4, scoped, tag = 'scoped memory for tpu_custom_call.1']
    #allocation10 [shape = 'u8[131072]{0}', space=vmem, size = 0x20000, scoped, tag = 'input window, operand 2, single buffered']
    #allocation11 [shape = 'u8[131072]{0}', space=vmem, size = 0x20000, scoped, tag = 'input window, operand 4, single buffered']
    #allocation12 [shape = 's32[1]{0}', space=sflag, size = 0x4, scoped, tag = 'scoped memory for tpu_custom_call.1']
    #allocation13 [shape = 'u8[12288]{0}', space=vmem, size = 0x3000, scoped, tag = 'output window, operand 0, single buffered']
    %11 = vsyncpa [#allocation6], 0
    %12 = vsyncpa [#allocation9], 0
    %13 = vsyncpa [#allocation12], 0
    %14 = vsyncpa [#allocation7], 0
    // Predicated region
    $region2: #{tpu_custom_call.1} parent=1 // pred_check
      _
    $region3: #{tpu_custom_call.1} parent=1 // pred_check_branch
      %16 = sbr.rel (0) target = $region5
    $region4: #{tpu_custom_call.1} parent=1 // pred_region
      %s18 = ssub.s32 1024, 1024
      %19 = vsyncadd [#allocation6], %s18
      %s20 = sshll.u32 [#allocation5], 4
      %s21 = int_to_ptr.vmem [resolvable:$true] %s20
      %26 = dma.hbm_to_vmem [thread:$0]  %s0, 1024, %s21, [#allocation6], 128, 128, 8
    $region5: #{tpu_custom_call.1} parent=1 // pred_fallthru
      _
    // Predicated region
    $region6: #{tpu_custom_call.1} parent=1 // pred_check
      _
    $region7: #{tpu_custom_call.1} parent=1 // pred_check_branch
      %28 = sbr.rel (0) target = $region9
    $region8: #{tpu_custom_call.1} parent=1 // pred_region
      %s30 = ssub.s32 2048, 2048
      %31 = vsyncadd [#allocation9], %s30
      %s32 = sshll.u32 [#allocation8], 4
      %s33 = int_to_ptr.vmem [resolvable:$true] %s32
      %38 = dma.hbm_to_vmem [thread:$0]  %s1, 2048, %s33, [#allocation9], 128, 128, 8
    $region9: #{tpu_custom_call.1} parent=1 // pred_fallthru
      _
    // Predicated region
    $region10: #{tpu_custom_call.1} parent=1 // pred_check
      _
    $region11: #{tpu_custom_call.1} parent=1 // pred_check_branch
      %40 = sbr.rel (0) target = $region13
    $region12: #{tpu_custom_call.1} parent=1 // pred_region
      %s42 = ssub.s32 4096, 4096
      %43 = vsyncadd [#allocation9], %s42
      %s44 = sshll.u32 [#allocation10], 4
      %s45 = int_to_ptr.vmem [resolvable:$true] %s44
      %50 = dma.hbm_to_vmem [thread:$0]  %s2, 4096, %s45, [#allocation9], 128, 128, 8
    $region13: #{tpu_custom_call.1} parent=1 // pred_fallthru
      _
    // Predicated region
    $region14: #{tpu_custom_call.1} parent=1 // pred_check
      _
    $region15: #{tpu_custom_call.1} parent=1 // pred_check_branch
      %52 = sbr.rel (0) target = $region17
    $region16: #{tpu_custom_call.1} parent=1 // pred_region
      _
    $region17: #{tpu_custom_call.1} parent=1 // pred_fallthru
      _
    // Predicated region
    $region18: #{tpu_custom_call.1} parent=1 // pred_check
      _
    $region19: #{tpu_custom_call.1} parent=1 // pred_check_branch
      %54 = sbr.rel (0) target = $region21
    $region20: #{tpu_custom_call.1} parent=1 // pred_region
      %s56 = ssub.s32 4096, 4096
      %57 = vsyncadd [#allocation12], %s56
      %s58 = sshll.u32 [#allocation11], 4
      %s59 = int_to_ptr.vmem [resolvable:$true] %s58
      %64 = dma.hbm_to_vmem [thread:$0]  %s4, 4096, %s59, [#allocation12], 128, 128, 8
    $region21: #{tpu_custom_call.1} parent=1 // pred_fallthru
      _
    // Predicated region
    $region22: #{tpu_custom_call.1} parent=1 // pred_check
      _
    $region23: #{tpu_custom_call.1} parent=1 // pred_check_branch
      %66 = sbr.rel (0) target = $region25
    $region24: #{tpu_custom_call.1} parent=1 // pred_region
      _
    $region25: #{tpu_custom_call.1} parent=1 // pred_fallthru
      _
    // Predicated region
    $region26: #{tpu_custom_call.1} parent=1 // pred_check
      _
    $region27: #{tpu_custom_call.1} parent=1 // pred_check_branch
      %68 = sbr.rel (0) target = $region29
    $region28: #{tpu_custom_call.1} parent=1 // pred_region
      %69 = dma.done [#allocation6], 1024
    $region29: #{tpu_custom_call.1} parent=1 // pred_fallthru
      _
    // Predicated region
    $region30: #{tpu_custom_call.1} parent=1 // pred_check
      _
    $region31: #{tpu_custom_call.1} parent=1 // pred_check_branch
      %71 = sbr.rel (0) target = $region33
    $region32: #{tpu_custom_call.1} parent=1 // pred_region
      %72 = dma.done [#allocation9], 2048
    $region33: #{tpu_custom_call.1} parent=1 // pred_fallthru
      _
    // Predicated region
    $region34: #{tpu_custom_call.1} parent=1 // pred_check
      _
    $region35: #{tpu_custom_call.1} parent=1 // pred_check_branch
      %74 = sbr.rel (0) target = $region37
    $region36: #{tpu_custom_call.1} parent=1 // pred_region
      %75 = dma.done [#allocation9], 4096
    $region37: #{tpu_custom_call.1} parent=1 // pred_fallthru
      _
    // Predicated region
    $region38: #{tpu_custom_call.1} parent=1 // pred_check
      _
    $region39: #{tpu_custom_call.1} parent=1 // pred_check_branch
      %77 = sbr.rel (0) target = $region41
    $region40: #{tpu_custom_call.1} parent=1 // pred_region
      %78 = dma.done [#allocation12], 4096
    $region41: #{tpu_custom_call.1} parent=1 // pred_fallthru
      _
    %p79 = scmp.eq.s32.totalorder 0, 0
    // Predicated region
    $region42: #{tpu_custom_call.1} parent=1 // pred_check
      %p80 = pneg %p79
    $region43: #{tpu_custom_call.1} parent=1 // pred_check_branch
      %82 = sbr.rel (%p80) target = $region45
    $region44: #{tpu_custom_call.1} parent=1 // pred_region
      %83 = vst [vmem:[#allocation2] sm:$0xff] 0.0
      %84 = vst [vmem:[#allocation3] sm:$0xff] 0.0
      %85 = vst [vmem:[#allocation4] sm:$0xff] 0.0
    $region45: #{tpu_custom_call.1} parent=1 // pred_fallthru
      _
    %s86 = smul.u32 0, 8
    %v87 = vld [vmem:[#allocation2] sm:$0xff]
    %v88 = vld [vmem:[#allocation3] sm:$0xff]
    %v89 = vld [vmem:[#allocation4] sm:$0xff]
    %v90 = vld [vmem:[#allocation5] sm:$0xff]
    %v91 = vld [vmem:[#allocation8] sm:$0xff]
    %v92 = vld [vmem:[#allocation8 + $0x8] sm:$0xff]
    %v93 = vld [vmem:[#allocation8 + $0x10] sm:$0xff]
    %v94 = vld [vmem:[#allocation8 + $0x18] sm:$0xff]
    %v95 = vld [vmem:[#allocation8 + $0x20] sm:$0xff]
    %v96 = vld [vmem:[#allocation8 + $0x28] sm:$0xff]
    %v97 = vld [vmem:[#allocation8 + $0x30] sm:$0xff]
    %v98 = vld [vmem:[#allocation8 + $0x38] sm:$0xff]
    %v99 = vld [vmem:[#allocation8 + $0x40] sm:$0xff]
    %v100 = vld [vmem:[#allocation8 + $0x48] sm:$0xff]
    %v101 = vld [vmem:[#allocation8 + $0x50] sm:$0xff]
    %v102 = vld [vmem:[#allocation8 + $0x58] sm:$0xff]
    %v103 = vld [vmem:[#allocation8 + $0x60] sm:$0xff]
    %v104 = vld [vmem:[#allocation8 + $0x68] sm:$0xff]
    %v105 = vld [vmem:[#allocation8 + $0x70] sm:$0xff]
    %v106 = vld [vmem:[#allocation8 + $0x78] sm:$0xff]
    %107 = vmatprep.subr.mxu0 0.0
    %108 = vmatpush1.msra.mxu0 %v91
    %109 = vmatprep.subr.mxu0 0.0
    %110 = vmatpush1.msra.mxu0 %v92
    %111 = vmatprep.subr.mxu0 0.0
    %112 = vmatpush1.msra.mxu0 %v93
    %113 = vmatprep.subr.mxu0 0.0
    %114 = vmatpush1.msra.mxu0 %v94
    %115 = vmatprep.subr.mxu0 0.0
    %116 = vmatpush1.msra.mxu0 %v95
    %117 = vmatprep.subr.mxu0 0.0
    %118 = vmatpush1.msra.mxu0 %v96
    %119 = vmatprep.subr.mxu0 0.0
    %120 = vmatpush1.msra.mxu0 %v97
    %121 = vmatprep.subr.mxu0 0.0
    %122 = vmatpush1.msra.mxu0 %v98
    %123 = vmatprep.subr.mxu0 0.0
    %124 = vmatpush1.msra.mxu0 %v99
    %125 = vmatprep.subr.mxu0 0.0
    %126 = vmatpush1.msra.mxu0 %v100
    %127 = vmatprep.subr.mxu0 0.0
    %128 = vmatpush1.msra.mxu0 %v101
    %129 = vmatprep.subr.mxu0 0.0
    %130 = vmatpush1.msra.mxu0 %v102
    %131 = vmatprep.subr.mxu0 0.0
    %132 = vmatpush1.msra.mxu0 %v103
    %133 = vmatprep.subr.mxu0 0.0
    %134 = vmatpush1.msra.mxu0 %v104
    %135 = vmatprep.subr.mxu0 0.0
    %136 = vmatpush1.msra.mxu0 %v105
    %137 = vmatprep.subr.mxu0 0.0
    %138 = vmatpush1.msra.mxu0 %v106
    %139 = vmatprep.subr.mxu0 0.0
    %140 = vmatpush1.msra.mxu0 0.0
    %141 = vmatprep.subr.mxu0 0.0
    %142 = vmatpush1.msra.mxu0 0.0
    %143 = vmatprep.subr.mxu0 0.0
    %144 = vmatpush1.msra.mxu0 0.0
    %145 = vmatprep.subr.mxu0 0.0
    %146 = vmatpush1.msra.mxu0 0.0
    %147 = vmatprep.subr.mxu0 0.0
    %148 = vmatpush1.msra.mxu0 0.0
    %149 = vmatprep.subr.mxu0 0.0
    %150 = vmatpush1.msra.mxu0 0.0
    %151 = vmatprep.subr.mxu0 0.0
    %152 = vmatpush1.msra.mxu0 0.0
    %153 = vmatprep.subr.mxu0 0.0
    %154 = vmatpush1.msra.mxu0 0.0
    %155 = vmatprep.subr.mxu0 0.0
    %156 = vmatpush1.msra.mxu0 0.0
    %157 = vmatprep.subr.mxu0 0.0
    %158 = vmatpush1.msra.mxu0 0.0
    %159 = vmatprep.subr.mxu0 0.0
    %160 = vmatpush1.msra.mxu0 0.0
    %161 = vmatprep.subr.mxu0 0.0
    %162 = vmatpush1.msra.mxu0 0.0
    %163 = vmatprep.subr.mxu0 0.0
    %164 = vmatpush1.msra.mxu0 0.0
    %165 = vmatprep.subr.mxu0 0.0
    %166 = vmatpush1.msra.mxu0 0.0
    %167 = vmatprep.subr.mxu0 0.0
    %168 = vmatpush1.msra.mxu0 0.0
    %169 = vmatprep.subr.mxu0 0.0
    %170 = vmatpush1.msra.mxu0 0.0
    %171 = vmatprep.mubr.f32.mxu0 0.0
    %172 = vmatmul.mubr.f32.gmra.mrb[0].mxu0 %v87
    %v173 = vpop.f32.mrb[0].mxu0
    %v174 = vadd.f32 0.0, %v173
    %v175 = vpop.f32.mrb[0].mxu0
    %176 = vdwg.mxu0
    %v177 = vadd.f32 %v90, %v174
    %v178 = vtanh.pop %v177
    %v179 = vld [vmem:[#allocation10] sm:$0xff]
    %v180 = vld [vmem:[#allocation10 + $0x8] sm:$0xff]
    %v181 = vld [vmem:[#allocation10 + $0x10] sm:$0xff]
    %v182 = vld [vmem:[#allocation10 + $0x18] sm:$0xff]
    %v183 = vld [vmem:[#allocation10 + $0x20] sm:$0xff]
    %v184 = vld [vmem:[#allocation10 + $0x28] sm:$0xff]
    %v185 = vld [vmem:[#allocation10 + $0x30] sm:$0xff]
    %v186 = vld [vmem:[#allocation10 + $0x38] sm:$0xff]
    %v187 = vld [vmem:[#allocation10 + $0x40] sm:$0xff]
    %v188 = vld [vmem:[#allocation10 + $0x48] sm:$0xff]
    %v189 = vld [vmem:[#allocation10 + $0x50] sm:$0xff]
    %v190 = vld [vmem:[#allocation10 + $0x58] sm:$0xff]
    %v191 = vld [vmem:[#allocation10 + $0x60] sm:$0xff]
    %v192 = vld [vmem:[#allocation10 + $0x68] sm:$0xff]
    %v193 = vld [vmem:[#allocation10 + $0x70] sm:$0xff]
    %v194 = vld [vmem:[#allocation10 + $0x78] sm:$0xff]
    %v195 = vld [vmem:[#allocation10 + $0x80] sm:$0xff]
    %v196 = vld [vmem:[#allocation10 + $0x88] sm:$0xff]
    %v197 = vld [vmem:[#allocation10 + $0x90] sm:$0xff]
    %v198 = vld [vmem:[#allocation10 + $0x98] sm:$0xff]
    %v199 = vld [vmem:[#allocation10 + $0xa0] sm:$0xff]
    %v200 = vld [vmem:[#allocation10 + $0xa8] sm:$0xff]
    %v201 = vld [vmem:[#allocation10 + $0xb0] sm:$0xff]
    %v202 = vld [vmem:[#allocation10 + $0xb8] sm:$0xff]
    %v203 = vld [vmem:[#allocation10 + $0xc0] sm:$0xff]
    %v204 = vld [vmem:[#allocation10 + $0xc8] sm:$0xff]
    %v205 = vld [vmem:[#allocation10 + $0xd0] sm:$0xff]
    %v206 = vld [vmem:[#allocation10 + $0xd8] sm:$0xff]
    %v207 = vld [vmem:[#allocation10 + $0xe0] sm:$0xff]
    %v208 = vld [vmem:[#allocation10 + $0xe8] sm:$0xff]
    %v209 = vld [vmem:[#allocation10 + $0xf0] sm:$0xff]
    %v210 = vld [vmem:[#allocation10 + $0xf8] sm:$0xff]
    %v211 = vld [vmem:[%s3] sm:$0x1]
    %v213 = vlaneseq
    %v214 = vshrl.u32 %v213, 7
    %v215 = vsub.s32 0, %v214
    %v216 = vrot.slane %v211, %v215
    %218 = vmatprep.subr.mxu0 0.0
    %219 = vmatpush1.msra.mxu0 %v179
    %220 = vmatprep.subr.mxu0 0.0
    %221 = vmatpush1.msra.mxu0 %v180
    %222 = vmatprep.subr.mxu0 0.0
    %223 = vmatpush1.msra.mxu0 %v181
    %224 = vmatprep.subr.mxu0 0.0
    %225 = vmatpush1.msra.mxu0 %v182
    %226 = vmatprep.subr.mxu0 0.0
    %227 = vmatpush1.msra.mxu0 %v183
    %228 = vmatprep.subr.mxu0 0.0
    %229 = vmatpush1.msra.mxu0 %v184
    %230 = vmatprep.subr.mxu0 0.0
    %231 = vmatpush1.msra.mxu0 %v185
    %232 = vmatprep.subr.mxu0 0.0
    %233 = vmatpush1.msra.mxu0 %v186
    %234 = vmatprep.subr.mxu0 0.0
    %235 = vmatpush1.msra.mxu0 %v187
    %236 = vmatprep.subr.mxu0 0.0
    %237 = vmatpush1.msra.mxu0 %v188
    %238 = vmatprep.subr.mxu0 0.0
    %239 = vmatpush1.msra.mxu0 %v189
    %240 = vmatprep.subr.mxu0 0.0
    %241 = vmatpush1.msra.mxu0 %v190
    %242 = vmatprep.subr.mxu0 0.0
    %243 = vmatpush1.msra.mxu0 %v191
    %244 = vmatprep.subr.mxu0 0.0
    %245 = vmatpush1.msra.mxu0 %v192
    %246 = vmatprep.subr.mxu0 0.0
    %247 = vmatpush1.msra.mxu0 %v193
    %248 = vmatprep.subr.mxu0 0.0
    %249 = vmatpush1.msra.mxu0 %v194
    %250 = vmatprep.subr.mxu0 0.0
    %251 = vmatpush1.msra.mxu0 %v195
    %252 = vmatprep.subr.mxu0 0.0
    %253 = vmatpush1.msra.mxu0 %v196
    %254 = vmatprep.subr.mxu0 0.0
    %255 = vmatpush1.msra.mxu0 %v197
    %256 = vmatprep.subr.mxu0 0.0
    %257 = vmatpush1.msra.mxu0 %v198
    %258 = vmatprep.subr.mxu0 0.0
    %259 = vmatpush1.msra.mxu0 %v199
    %260 = vmatprep.subr.mxu0 0.0
    %261 = vmatpush1.msra.mxu0 %v200
    %262 = vmatprep.subr.mxu0 0.0
    %263 = vmatpush1.msra.mxu0 %v201
    %264 = vmatprep.subr.mxu0 0.0
    %265 = vmatpush1.msra.mxu0 %v202
    %266 = vmatprep.subr.mxu0 0.0
    %267 = vmatpush1.msra.mxu0 %v203
    %268 = vmatprep.subr.mxu0 0.0
    %269 = vmatpush1.msra.mxu0 %v204
    %270 = vmatprep.subr.mxu0 0.0
    %271 = vmatpush1.msra.mxu0 %v205
    %272 = vmatprep.subr.mxu0 0.0
    %273 = vmatpush1.msra.mxu0 %v206
    %274 = vmatprep.subr.mxu0 0.0
    %275 = vmatpush1.msra.mxu0 %v207
    %276 = vmatprep.subr.mxu0 0.0
    %277 = vmatpush1.msra.mxu0 %v208
    %278 = vmatprep.subr.mxu0 0.0
    %279 = vmatpush1.msra.mxu0 %v209
    %280 = vmatprep.subr.mxu0 0.0
    %281 = vmatpush1.msra.mxu0 %v210
    %282 = vmatprep.mubr.f32.mxu0 %v88
    %283 = vmatmul.mubr.f32.gmra.mrb[0].mxu0 %v178
    %v284 = vpop.f32.mrb[0].mxu0
    %v285 = vadd.f32 %v216, %v284
    %v286 = vpop.f32.mrb[0].mxu0
    %287 = vdwg.mxu0
    %v288 = vtanh.pop %v285
    %v289 = vld [vmem:[#allocation11] sm:$0xff]
    %v290 = vld [vmem:[#allocation11 + $0x8] sm:$0xff]
    %v291 = vld [vmem:[#allocation11 + $0x10] sm:$0xff]
    %v292 = vld [vmem:[#allocation11 + $0x18] sm:$0xff]
    %v293 = vld [vmem:[#allocation11 + $0x20] sm:$0xff]
    %v294 = vld [vmem:[#allocation11 + $0x28] sm:$0xff]
    %v295 = vld [vmem:[#allocation11 + $0x30] sm:$0xff]
    %v296 = vld [vmem:[#allocation11 + $0x38] sm:$0xff]
    %v297 = vld [vmem:[#allocation11 + $0x40] sm:$0xff]
    %v298 = vld [vmem:[#allocation11 + $0x48] sm:$0xff]
    %v299 = vld [vmem:[#allocation11 + $0x50] sm:$0xff]
    %v300 = vld [vmem:[#allocation11 + $0x58] sm:$0xff]
    %v301 = vld [vmem:[#allocation11 + $0x60] sm:$0xff]
    %v302 = vld [vmem:[#allocation11 + $0x68] sm:$0xff]
    %v303 = vld [vmem:[#allocation11 + $0x70] sm:$0xff]
    %v304 = vld [vmem:[#allocation11 + $0x78] sm:$0xff]
    %v305 = vld [vmem:[#allocation11 + $0x80] sm:$0xff]
    %v306 = vld [vmem:[#allocation11 + $0x88] sm:$0xff]
    %v307 = vld [vmem:[#allocation11 + $0x90] sm:$0xff]
    %v308 = vld [vmem:[#allocation11 + $0x98] sm:$0xff]
    %v309 = vld [vmem:[#allocation11 + $0xa0] sm:$0xff]
    %v310 = vld [vmem:[#allocation11 + $0xa8] sm:$0xff]
    %v311 = vld [vmem:[#allocation11 + $0xb0] sm:$0xff]
    %v312 = vld [vmem:[#allocation11 + $0xb8] sm:$0xff]
    %v313 = vld [vmem:[#allocation11 + $0xc0] sm:$0xff]
    %v314 = vld [vmem:[#allocation11 + $0xc8] sm:$0xff]
    %v315 = vld [vmem:[#allocation11 + $0xd0] sm:$0xff]
    %v316 = vld [vmem:[#allocation11 + $0xd8] sm:$0xff]
    %v317 = vld [vmem:[#allocation11 + $0xe0] sm:$0xff]
    %v318 = vld [vmem:[#allocation11 + $0xe8] sm:$0xff]
    %v319 = vld [vmem:[#allocation11 + $0xf0] sm:$0xff]
    %v320 = vld [vmem:[#allocation11 + $0xf8] sm:$0xff]
    %v321 = vld [vmem:[%s5] sm:$0x1]
    %v323 = vlaneseq
    %v324 = vshrl.u32 %v323, 7
    %v325 = vsub.s32 0, %v324
    %v326 = vrot.slane %v321, %v325
    %328 = vmatprep.subr.mxu0 0.0
    %329 = vmatpush1.msra.mxu0 %v289
    %330 = vmatprep.subr.mxu0 0.0
    %331 = vmatpush1.msra.mxu0 %v290
    %332 = vmatprep.subr.mxu0 0.0
    %333 = vmatpush1.msra.mxu0 %v291
    %334 = vmatprep.subr.mxu0 0.0
    %335 = vmatpush1.msra.mxu0 %v292
    %336 = vmatprep.subr.mxu0 0.0
    %337 = vmatpush1.msra.mxu0 %v293
    %338 = vmatprep.subr.mxu0 0.0
    %339 = vmatpush1.msra.mxu0 %v294
    %340 = vmatprep.subr.mxu0 0.0
    %341 = vmatpush1.msra.mxu0 %v295
    %342 = vmatprep.subr.mxu0 0.0
    %343 = vmatpush1.msra.mxu0 %v296
    %344 = vmatprep.subr.mxu0 0.0
    %345 = vmatpush1.msra.mxu0 %v297
    %346 = vmatprep.subr.mxu0 0.0
    %347 = vmatpush1.msra.mxu0 %v298
    %348 = vmatprep.subr.mxu0 0.0
    %349 = vmatpush1.msra.mxu0 %v299
    %350 = vmatprep.subr.mxu0 0.0
    %351 = vmatpush1.msra.mxu0 %v300
    %352 = vmatprep.subr.mxu0 0.0
    %353 = vmatpush1.msra.mxu0 %v301
    %354 = vmatprep.subr.mxu0 0.0
    %355 = vmatpush1.msra.mxu0 %v302
    %356 = vmatprep.subr.mxu0 0.0
    %357 = vmatpush1.msra.mxu0 %v303
    %358 = vmatprep.subr.mxu0 0.0
    %359 = vmatpush1.msra.mxu0 %v304
    %360 = vmatprep.subr.mxu0 0.0
    %361 = vmatpush1.msra.mxu0 %v305
    %362 = vmatprep.subr.mxu0 0.0
    %363 = vmatpush1.msra.mxu0 %v306
    %364 = vmatprep.subr.mxu0 0.0
    %365 = vmatpush1.msra.mxu0 %v307
    %366 = vmatprep.subr.mxu0 0.0
    %367 = vmatpush1.msra.mxu0 %v308
    %368 = vmatprep.subr.mxu0 0.0
    %369 = vmatpush1.msra.mxu0 %v309
    %370 = vmatprep.subr.mxu0 0.0
    %371 = vmatpush1.msra.mxu0 %v310
    %372 = vmatprep.subr.mxu0 0.0
    %373 = vmatpush1.msra.mxu0 %v311
    %374 = vmatprep.subr.mxu0 0.0
    %375 = vmatpush1.msra.mxu0 %v312
    %376 = vmatprep.subr.mxu0 0.0
    %377 = vmatpush1.msra.mxu0 %v313
    %378 = vmatprep.subr.mxu0 0.0
    %379 = vmatpush1.msra.mxu0 %v314
    %380 = vmatprep.subr.mxu0 0.0
    %381 = vmatpush1.msra.mxu0 %v315
    %382 = vmatprep.subr.mxu0 0.0
    %383 = vmatpush1.msra.mxu0 %v316
    %384 = vmatprep.subr.mxu0 0.0
    %385 = vmatpush1.msra.mxu0 %v317
    %386 = vmatprep.subr.mxu0 0.0
    %387 = vmatpush1.msra.mxu0 %v318
    %388 = vmatprep.subr.mxu0 0.0
    %389 = vmatpush1.msra.mxu0 %v319
    %390 = vmatprep.subr.mxu0 0.0
    %391 = vmatpush1.msra.mxu0 %v320
    %392 = vmatprep.mubr.f32.mxu0 %v89
    %393 = vmatmul.mubr.f32.gmra.mrb[0].mxu0 %v288
    %v394 = vpop.f32.mrb[0].mxu0
    %v395 = vadd.f32 %v326, %v394
    %v396 = vpop.f32.mrb[0].mxu0
    %397 = vdwg.mxu0
    %v398 = vtanh.pop %v395
    %p399 = scmp.ge.s32.totalorder %s86, 5
    %p400 = scmp.lt.s32.totalorder %s86, 8
    %p401 = pnand %p399, %p400
    %p402 = pneg %p401
    // Predicated region
    $region46: #{tpu_custom_call.1} parent=1 // pred_check
      _
    $region47: #{tpu_custom_call.1} parent=1 // pred_check_branch
      %404 = sbr.rel (%p401) target = $region49
    $region48: #{tpu_custom_call.1} parent=1 // pred_region
      %s405 = sadd.s32 %s86, 4294967291
      %s406 = smul.u32 %s405, 8
      %s407 = scalar_lea.vmem [#allocation13], %s406
      %408 = vst [vmem:[%s407] sm:$0xff] %v398
    $region49: #{tpu_custom_call.1} parent=1 // pred_fallthru
      _
    %s409 = sadd.s32 %s86, 1
    %s410 = scalar_lea.vmem [#allocation5], 8
    %v411 = vld [vmem:[%s410] sm:$0xff]
    %v412 = vld [vmem:[#allocation8] sm:$0xff]
    %v413 = vld [vmem:[#allocation8 + $0x8] sm:$0xff]
    %v414 = vld [vmem:[#allocation8 + $0x10] sm:$0xff]
    %v415 = vld [vmem:[#allocation8 + $0x18] sm:$0xff]
    %v416 = vld [vmem:[#allocation8 + $0x20] sm:$0xff]
    %v417 = vld [vmem:[#allocation8 + $0x28] sm:$0xff]
    %v418 = vld [vmem:[#allocation8 + $0x30] sm:$0xff]
    %v419 = vld [vmem:[#allocation8 + $0x38] sm:$0xff]
    %v420 = vld [vmem:[#allocation8 + $0x40] sm:$0xff]
    %v421 = vld [vmem:[#allocation8 + $0x48] sm:$0xff]
    %v422 = vld [vmem:[#allocation8 + $0x50] sm:$0xff]
    %v423 = vld [vmem:[#allocation8 + $0x58] sm:$0xff]
    %v424 = vld [vmem:[#allocation8 + $0x60] sm:$0xff]
    %v425 = vld [vmem:[#allocation8 + $0x68] sm:$0xff]
    %v426 = vld [vmem:[#allocation8 + $0x70] sm:$0xff]
    %v427 = vld [vmem:[#allocation8 + $0x78] sm:$0xff]
    %428 = vmatprep.subr.mxu0 0.0
    %429 = vmatpush1.msra.mxu0 %v412
    %430 = vmatprep.subr.mxu0 0.0
    %431 = vmatpush1.msra.mxu0 %v413
    %432 = vmatprep.subr.mxu0 0.0
    %433 = vmatpush1.msra.mxu0 %v414
    %434 = vmatprep.subr.mxu0 0.0
    %435 = vmatpush1.msra.mxu0 %v415
    %436 = vmatprep.subr.mxu0 0.0
    %437 = vmatpush1.msra.mxu0 %v416
    %438 = vmatprep.subr.mxu0 0.0
    %439 = vmatpush1.msra.mxu0 %v417
    %440 = vmatprep.subr.mxu0 0.0
    %441 = vmatpush1.msra.mxu0 %v418
    %442 = vmatprep.subr.mxu0 0.0
    %443 = vmatpush1.msra.mxu0 %v419
    %444 = vmatprep.subr.mxu0 0.0
    %445 = vmatpush1.msra.mxu0 %v420
    %446 = vmatprep.subr.mxu0 0.0
    %447 = vmatpush1.msra.mxu0 %v421
    %448 = vmatprep.subr.mxu0 0.0
    %449 = vmatpush1.msra.mxu0 %v422
    %450 = vmatprep.subr.mxu0 0.0
    %451 = vmatpush1.msra.mxu0 %v423
    %452 = vmatprep.subr.mxu0 0.0
    %453 = vmatpush1.msra.mxu0 %v424
    %454 = vmatprep.subr.mxu0 0.0
    %455 = vmatpush1.msra.mxu0 %v425
    %456 = vmatprep.subr.mxu0 0.0
    %457 = vmatpush1.msra.mxu0 %v426
    %458 = vmatprep.subr.mxu0 0.0
    %459 = vmatpush1.msra.mxu0 %v427
    %460 = vmatprep.subr.mxu0 0.0
    %461 = vmatpush1.msra.mxu0 0.0
    %462 = vmatprep.subr.mxu0 0.0
    %463 = vmatpush1.msra.mxu0 0.0
    %464 = vmatprep.subr.mxu0 0.0
    %465 = vmatpush1.msra.mxu0 0.0
    %466 = vmatprep.subr.mxu0 0.0
    %467 = vmatpush1.msra.mxu0 0.0
    %468 = vmatprep.subr.mxu0 0.0
    %469 = vmatpush1.msra.mxu0 0.0
    %470 = vmatprep.subr.mxu0 0.0
    %471 = vmatpush1.msra.mxu0 0.0
    %472 = vmatprep.subr.mxu0 0.0
    %473 = vmatpush1.msra.mxu0 0.0
    %474 = vmatprep.subr.mxu0 0.0
    %475 = vmatpush1.msra.mxu0 0.0
    %476 = vmatprep.subr.mxu0 0.0
    %477 = vmatpush1.msra.mxu0 0.0
    %478 = vmatprep.subr.mxu0 0.0
    %479 = vmatpush1.msra.mxu0 0.0
    %480 = vmatprep.subr.mxu0 0.0
    %481 = vmatpush1.msra.mxu0 0.0
    %482 = vmatprep.subr.mxu0 0.0
    %483 = vmatpush1.msra.mxu0 0.0
    %484 = vmatprep.subr.mxu0 0.0
    %485 = vmatpush1.msra.mxu0 0.0
    %486 = vmatprep.subr.mxu0 0.0
    %487 = vmatpush1.msra.mxu0 0.0
    %488 = vmatprep.subr.mxu0 0.0
    %489 = vmatpush1.msra.mxu0 0.0
    %490 = vmatprep.subr.mxu0 0.0
    %491 = vmatpush1.msra.mxu0 0.0
    %492 = vmatprep.mubr.f32.mxu0 0.0
    %493 = vmatmul.mubr.f32.gmra.mrb[0].mxu0 %v178
    %v494 = vpop.f32.mrb[0].mxu0
    %v495 = vadd.f32 0.0, %v494
    %v496 = vpop.f32.mrb[0].mxu0
    %497 = vdwg.mxu0
    %v498 = vadd.f32 %v411, %v495
    %v499 = vtanh.pop %v498
    %v500 = vld [vmem:[#allocation10] sm:$0xff]
    %v501 = vld [vmem:[#allocation10 + $0x8] sm:$0xff]
    %v502 = vld [vmem:[#allocation10 + $0x10] sm:$0xff]
    %v503 = vld [vmem:[#allocation10 + $0x18] sm:$0xff]
    %v504 = vld [vmem:[#allocation10 + $0x20] sm:$0xff]
    %v505 = vld [vmem:[#allocation10 + $0x28] sm:$0xff]
    %v506 = vld [vmem:[#allocation10 + $0x30] sm:$0xff]
    %v507 = vld [vmem:[#allocation10 + $0x38] sm:$0xff]
    %v508 = vld [vmem:[#allocation10 + $0x40] sm:$0xff]
    %v509 = vld [vmem:[#allocation10 + $0x48] sm:$0xff]
    %v510 = vld [vmem:[#allocation10 + $0x50] sm:$0xff]
    %v511 = vld [vmem:[#allocation10 + $0x58] sm:$0xff]
    %v512 = vld [vmem:[#allocation10 + $0x60] sm:$0xff]
    %v513 = vld [vmem:[#allocation10 + $0x68] sm:$0xff]
    %v514 = vld [vmem:[#allocation10 + $0x70] sm:$0xff]
    %v515 = vld [vmem:[#allocation10 + $0x78] sm:$0xff]
    %v516 = vld [vmem:[#allocation10 + $0x80] sm:$0xff]
    %v517 = vld [vmem:[#allocation10 + $0x88] sm:$0xff]
    %v518 = vld [vmem:[#allocation10 + $0x90] sm:$0xff]
    %v519 = vld [vmem:[#allocation10 + $0x98] sm:$0xff]
    %v520 = vld [vmem:[#allocation10 + $0xa0] sm:$0xff]
    %v521 = vld [vmem:[#allocation10 + $0xa8] sm:$0xff]
    %v522 = vld [vmem:[#allocation10 + $0xb0] sm:$0xff]
    %v523 = vld [vmem:[#allocation10 + $0xb8] sm:$0xff]
    %v524 = vld [vmem:[#allocation10 + $0xc0] sm:$0xff]
    %v525 = vld [vmem:[#allocation10 + $0xc8] sm:$0xff]
    %v526 = vld [vmem:[#allocation10 + $0xd0] sm:$0xff]
    %v527 = vld [vmem:[#allocation10 + $0xd8] sm:$0xff]
    %v528 = vld [vmem:[#allocation10 + $0xe0] sm:$0xff]
    %v529 = vld [vmem:[#allocation10 + $0xe8] sm:$0xff]
    %v530 = vld [vmem:[#allocation10 + $0xf0] sm:$0xff]
    %v531 = vld [vmem:[#allocation10 + $0xf8] sm:$0xff]
    %v532 = vld [vmem:[%s3] sm:$0x1]
    %v534 = vlaneseq
    %v535 = vshrl.u32 %v534, 7
    %v536 = vsub.s32 0, %v535
    %v537 = vrot.slane %v532, %v536
    %539 = vmatprep.subr.mxu0 0.0
    %540 = vmatpush1.msra.mxu0 %v500
    %541 = vmatprep.subr.mxu0 0.0
    %542 = vmatpush1.msra.mxu0 %v501
    %543 = vmatprep.subr.mxu0 0.0
    %544 = vmatpush1.msra.mxu0 %v502
    %545 = vmatprep.subr.mxu0 0.0
    %546 = vmatpush1.msra.mxu0 %v503
    %547 = vmatprep.subr.mxu0 0.0
    %548 = vmatpush1.msra.mxu0 %v504
    %549 = vmatprep.subr.mxu0 0.0
    %550 = vmatpush1.msra.mxu0 %v505
    %551 = vmatprep.subr.mxu0 0.0
    %552 = vmatpush1.msra.mxu0 %v506
    %553 = vmatprep.subr.mxu0 0.0
    %554 = vmatpush1.msra.mxu0 %v507
    %555 = vmatprep.subr.mxu0 0.0
    %556 = vmatpush1.msra.mxu0 %v508
    %557 = vmatprep.subr.mxu0 0.0
    %558 = vmatpush1.msra.mxu0 %v509
    %559 = vmatprep.subr.mxu0 0.0
    %560 = vmatpush1.msra.mxu0 %v510
    %561 = vmatprep.subr.mxu0 0.0
    %562 = vmatpush1.msra.mxu0 %v511
    %563 = vmatprep.subr.mxu0 0.0
    %564 = vmatpush1.msra.mxu0 %v512
    %565 = vmatprep.subr.mxu0 0.0
    %566 = vmatpush1.msra.mxu0 %v513
    %567 = vmatprep.subr.mxu0 0.0
    %568 = vmatpush1.msra.mxu0 %v514
    %569 = vmatprep.subr.mxu0 0.0
    %570 = vmatpush1.msra.mxu0 %v515
    %571 = vmatprep.subr.mxu0 0.0
    %572 = vmatpush1.msra.mxu0 %v516
    %573 = vmatprep.subr.mxu0 0.0
    %574 = vmatpush1.msra.mxu0 %v517
    %575 = vmatprep.subr.mxu0 0.0
    %576 = vmatpush1.msra.mxu0 %v518
    %577 = vmatprep.subr.mxu0 0.0
    %578 = vmatpush1.msra.mxu0 %v519
    %579 = vmatprep.subr.mxu0 0.0
    %580 = vmatpush1.msra.mxu0 %v520
    %581 = vmatprep.subr.mxu0 0.0
    %582 = vmatpush1.msra.mxu0 %v521
    %583 = vmatprep.subr.mxu0 0.0
    %584 = vmatpush1.msra.mxu0 %v522
    %585 = vmatprep.subr.mxu0 0.0
    %586 = vmatpush1.msra.mxu0 %v523
    %587 = vmatprep.subr.mxu0 0.0
    %588 = vmatpush1.msra.mxu0 %v524
    %589 = vmatprep.subr.mxu0 0.0
    %590 = vmatpush1.msra.mxu0 %v525
    %591 = vmatprep.subr.mxu0 0.0
    %592 = vmatpush1.msra.mxu0 %v526
    %593 = vmatprep.subr.mxu0 0.0
    %594 = vmatpush1.msra.mxu0 %v527
    %595 = vmatprep.subr.mxu0 0.0
    %596 = vmatpush1.msra.mxu0 %v528
    %597 = vmatprep.subr.mxu0 0.0
    %598 = vmatpush1.msra.mxu0 %v529
    %599 = vmatprep.subr.mxu0 0.0
    %600 = vmatpush1.msra.mxu0 %v530
    %601 = vmatprep.subr.mxu0 0.0
    %602 = vmatpush1.msra.mxu0 %v531
    %603 = vmatprep.mubr.f32.mxu0 %v288
    %604 = vmatmul.mubr.f32.gmra.mrb[0].mxu0 %v499
    %v605 = vpop.f32.mrb[0].mxu0
    %v606 = vadd.f32 %v537, %v605
    %v607 = vpop.f32.mrb[0].mxu0
    %608 = vdwg.mxu0
    %v609 = vtanh.pop %v606
    %v610 = vld [vmem:[#allocation11] sm:$0xff]
    %v611 = vld [vmem:[#allocation11 + $0x8] sm:$0xff]
    %v612 = vld [vmem:[#allocation11 + $0x10] sm:$0xff]
    %v613 = vld [vmem:[#allocation11 + $0x18] sm:$0xff]
    %v614 = vld [vmem:[#allocation11 + $0x20] sm:$0xff]
    %v615 = vld [vmem:[#allocation11 + $0x28] sm:$0xff]
    %v616 = vld [vmem:[#allocation11 + $0x30] sm:$0xff]
    %v617 = vld [vmem:[#allocation11 + $0x38] sm:$0xff]
    %v618 = vld [vmem:[#allocation11 + $0x40] sm:$0xff]
    %v619 = vld [vmem:[#allocation11 + $0x48] sm:$0xff]
    %v620 = vld [vmem:[#allocation11 + $0x50] sm:$0xff]
    %v621 = vld [vmem:[#allocation11 + $0x58] sm:$0xff]
    %v622 = vld [vmem:[#allocation11 + $0x60] sm:$0xff]
    %v623 = vld [vmem:[#allocation11 + $0x68] sm:$0xff]
    %v624 = vld [vmem:[#allocation11 + $0x70] sm:$0xff]
    %v625 = vld [vmem:[#allocation11 + $0x78] sm:$0xff]
    %v626 = vld [vmem:[#allocation11 + $0x80] sm:$0xff]
    %v627 = vld [vmem:[#allocation11 + $0x88] sm:$0xff]
    %v628 = vld [vmem:[#allocation11 + $0x90] sm:$0xff]
    %v629 = vld [vmem:[#allocation11 + $0x98] sm:$0xff]
    %v630 = vld [vmem:[#allocation11 + $0xa0] sm:$0xff]
    %v631 = vld [vmem:[#allocation11 + $0xa8] sm:$0xff]
    %v632 = vld [vmem:[#allocation11 + $0xb0] sm:$0xff]
    %v633 = vld [vmem:[#allocation11 + $0xb8] sm:$0xff]
    %v634 = vld [vmem:[#allocation11 + $0xc0] sm:$0xff]
    %v635 = vld [vmem:[#allocation11 + $0xc8] sm:$0xff]
    %v636 = vld [vmem:[#allocation11 + $0xd0] sm:$0xff]
    %v637 = vld [vmem:[#allocation11 + $0xd8] sm:$0xff]
    %v638 = vld [vmem:[#allocation11 + $0xe0] sm:$0xff]
    %v639 = vld [vmem:[#allocation11 + $0xe8] sm:$0xff]
    %v640 = vld [vmem:[#allocation11 + $0xf0] sm:$0xff]
    %v641 = vld [vmem:[#allocation11 + $0xf8] sm:$0xff]
    %v642 = vld [vmem:[%s5] sm:$0x1]
    %v644 = vlaneseq
    %v645 = vshrl.u32 %v644, 7
    %v646 = vsub.s32 0, %v645
    %v647 = vrot.slane %v642, %v646
    %649 = vmatprep.subr.mxu0 0.0
    %650 = vmatpush1.msra.mxu0 %v610
    %651 = vmatprep.subr.mxu0 0.0
    %652 = vmatpush1.msra.mxu0 %v611
    %653 = vmatprep.subr.mxu0 0.0
    %654 = vmatpush1.msra.mxu0 %v612
    %655 = vmatprep.subr.mxu0 0.0
    %656 = vmatpush1.msra.mxu0 %v613
    %657 = vmatprep.subr.mxu0 0.0
    %658 = vmatpush1.msra.mxu0 %v614
    %659 = vmatprep.subr.mxu0 0.0
    %660 = vmatpush1.msra.mxu0 %v615
    %661 = vmatprep.subr.mxu0 0.0
    %662 = vmatpush1.msra.mxu0 %v616
    %663 = vmatprep.subr.mxu0 0.0
    %664 = vmatpush1.msra.mxu0 %v617
    %665 = vmatprep.subr.mxu0 0.0
    %666 = vmatpush1.msra.mxu0 %v618
    %667 = vmatprep.subr.mxu0 0.0
    %668 = vmatpush1.msra.mxu0 %v619
    %669 = vmatprep.subr.mxu0 0.0
    %670 = vmatpush1.msra.mxu0 %v620
    %671 = vmatprep.subr.mxu0 0.0
    %672 = vmatpush1.msra.mxu0 %v621
    %673 = vmatprep.subr.mxu0 0.0
    %674 = vmatpush1.msra.mxu0 %v622
    %675 = vmatprep.subr.mxu0 0.0
    %676 = vmatpush1.msra.mxu0 %v623
    %677 = vmatprep.subr.mxu0 0.0
    %678 = vmatpush1.msra.mxu0 %v624
    %679 = vmatprep.subr.mxu0 0.0
    %680 = vmatpush1.msra.mxu0 %v625
    %681 = vmatprep.subr.mxu0 0.0
    %682 = vmatpush1.msra.mxu0 %v626
    %683 = vmatprep.subr.mxu0 0.0
    %684 = vmatpush1.msra.mxu0 %v627
    %685 = vmatprep.subr.mxu0 0.0
    %686 = vmatpush1.msra.mxu0 %v628
    %687 = vmatprep.subr.mxu0 0.0
    %688 = vmatpush1.msra.mxu0 %v629
    %689 = vmatprep.subr.mxu0 0.0
    %690 = vmatpush1.msra.mxu0 %v630
    %691 = vmatprep.subr.mxu0 0.0
    %692 = vmatpush1.msra.mxu0 %v631
    %693 = vmatprep.subr.mxu0 0.0
    %694 = vmatpush1.msra.mxu0 %v632
    %695 = vmatprep.subr.mxu0 0.0
    %696 = vmatpush1.msra.mxu0 %v633
    %697 = vmatprep.subr.mxu0 0.0
    %698 = vmatpush1.msra.mxu0 %v634
    %699 = vmatprep.subr.mxu0 0.0
    %700 = vmatpush1.msra.mxu0 %v635
    %701 = vmatprep.subr.mxu0 0.0
    %702 = vmatpush1.msra.mxu0 %v636
    %703 = vmatprep.subr.mxu0 0.0
    %704 = vmatpush1.msra.mxu0 %v637
    %705 = vmatprep.subr.mxu0 0.0
    %706 = vmatpush1.msra.mxu0 %v638
    %707 = vmatprep.subr.mxu0 0.0
    %708 = vmatpush1.msra.mxu0 %v639
    %709 = vmatprep.subr.mxu0 0.0
    %710 = vmatpush1.msra.mxu0 %v640
    %711 = vmatprep.subr.mxu0 0.0
    %712 = vmatpush1.msra.mxu0 %v641
    %713 = vmatprep.mubr.f32.mxu0 %v398
    %714 = vmatmul.mubr.f32.gmra.mrb[0].mxu0 %v609
    %v715 = vpop.f32.mrb[0].mxu0
    %v716 = vadd.f32 %v647, %v715
    %v717 = vpop.f32.mrb[0].mxu0
    %718 = vdwg.mxu0
    %v719 = vtanh.pop %v716
    %p720 = scmp.ge.s32.totalorder %s409, 5
    %p721 = scmp.lt.s32.totalorder %s409, 8
    %p722 = pnand %p720, %p721
    %p723 = pneg %p722
    // Predicated region
    $region50: #{tpu_custom_call.1} parent=1 // pred_check
      _
    $region51: #{tpu_custom_call.1} parent=1 // pred_check_branch
      %725 = sbr.rel (%p722) target = $region53
    $region52: #{tpu_custom_call.1} parent=1 // pred_region
      %s726 = sadd.s32 %s86, 4294967292
      %s727 = smul.u32 %s726, 8
      %s728 = scalar_lea.vmem [#allocation13], %s727
      %729 = vst [vmem:[%s728] sm:$0xff] %v719
    $region53: #{tpu_custom_call.1} parent=1 // pred_fallthru
      _
    %s730 = sadd.s32 %s86, 2
    %s731 = scalar_lea.vmem [#allocation5], 16
    %v732 = vld [vmem:[%s731] sm:$0xff]
    %v733 = vld [vmem:[#allocation8] sm:$0xff]
    %v734 = vld [vmem:[#allocation8 + $0x8] sm:$0xff]
    %v735 = vld [vmem:[#allocation8 + $0x10] sm:$0xff]
    %v736 = vld [vmem:[#allocation8 + $0x18] sm:$0xff]
    %v737 = vld [vmem:[#allocation8 + $0x20] sm:$0xff]
    %v738 = vld [vmem:[#allocation8 + $0x28] sm:$0xff]
    %v739 = vld [vmem:[#allocation8 + $0x30] sm:$0xff]
    %v740 = vld [vmem:[#allocation8 + $0x38] sm:$0xff]
    %v741 = vld [vmem:[#allocation8 + $0x40] sm:$0xff]
    %v742 = vld [vmem:[#allocation8 + $0x48] sm:$0xff]
    %v743 = vld [vmem:[#allocation8 + $0x50] sm:$0xff]
    %v744 = vld [vmem:[#allocation8 + $0x58] sm:$0xff]
    %v745 = vld [vmem:[#allocation8 + $0x60] sm:$0xff]
    %v746 = vld [vmem:[#allocation8 + $0x68] sm:$0xff]
    %v747 = vld [vmem:[#allocation8 + $0x70] sm:$0xff]
    %v748 = vld [vmem:[#allocation8 + $0x78] sm:$0xff]
    %749 = vmatprep.subr.mxu0 0.0
    %750 = vmatpush1.msra.mxu0 %v733
    %751 = vmatprep.subr.mxu0 0.0
    %752 = vmatpush1.msra.mxu0 %v734
    %753 = vmatprep.subr.mxu0 0.0
    %754 = vmatpush1.msra.mxu0 %v735
    %755 = vmatprep.subr.mxu0 0.0
    %756 = vmatpush1.msra.mxu0 %v736
    %757 = vmatprep.subr.mxu0 0.0
    %758 = vmatpush1.msra.mxu0 %v737
    %759 = vmatprep.subr.mxu0 0.0
    %760 = vmatpush1.msra.mxu0 %v738
    %761 = vmatprep.subr.mxu0 0.0
    %762 = vmatpush1.msra.mxu0 %v739
    %763 = vmatprep.subr.mxu0 0.0
    %764 = vmatpush1.msra.mxu0 %v740
    %765 = vmatprep.subr.mxu0 0.0
    %766 = vmatpush1.msra.mxu0 %v741
    %767 = vmatprep.subr.mxu0 0.0
    %768 = vmatpush1.msra.mxu0 %v742
    %769 = vmatprep.subr.mxu0 0.0
    %770 = vmatpush1.msra.mxu0 %v743
    %771 = vmatprep.subr.mxu0 0.0
    %772 = vmatpush1.msra.mxu0 %v744
    %773 = vmatprep.subr.mxu0 0.0
    %774 = vmatpush1.msra.mxu0 %v745
    %775 = vmatprep.subr.mxu0 0.0
    %776 = vmatpush1.msra.mxu0 %v746
    %777 = vmatprep.subr.mxu0 0.0
    %778 = vmatpush1.msra.mxu0 %v747
    %779 = vmatprep.subr.mxu0 0.0
    %780 = vmatpush1.msra.mxu0 %v748
    %781 = vmatprep.subr.mxu0 0.0
    %782 = vmatpush1.msra.mxu0 0.0
    %783 = vmatprep.subr.mxu0 0.0
    %784 = vmatpush1.msra.mxu0 0.0
    %785 = vmatprep.subr.mxu0 0.0
    %786 = vmatpush1.msra.mxu0 0.0
    %787 = vmatprep.subr.mxu0 0.0
    %788 = vmatpush1.msra.mxu0 0.0
    %789 = vmatprep.subr.mxu0 0.0
    %790 = vmatpush1.msra.mxu0 0.0
    %791 = vmatprep.subr.mxu0 0.0
    %792 = vmatpush1.msra.mxu0 0.0
    %793 = vmatprep.subr.mxu0 0.0
    %794 = vmatpush1.msra.mxu0 0.0
    %795 = vmatprep.subr.mxu0 0.0
    %796 = vmatpush1.msra.mxu0 0.0
    %797 = vmatprep.subr.mxu0 0.0
    %798 = vmatpush1.msra.mxu0 0.0
    %799 = vmatprep.subr.mxu0 0.0
    %800 = vmatpush1.msra.mxu0 0.0
    %801 = vmatprep.subr.mxu0 0.0
    %802 = vmatpush1.msra.mxu0 0.0
    %803 = vmatprep.subr.mxu0 0.0
    %804 = vmatpush1.msra.mxu0 0.0
    %805 = vmatprep.subr.mxu0 0.0
    %806 = vmatpush1.msra.mxu0 0.0
    %807 = vmatprep.subr.mxu0 0.0
    %808 = vmatpush1.msra.mxu0 0.0
    %809 = vmatprep.subr.mxu0 0.0
    %810 = vmatpush1.msra.mxu0 0.0
    %811 = vmatprep.subr.mxu0 0.0
    %812 = vmatpush1.msra.mxu0 0.0
    %813 = vmatprep.mubr.f32.mxu0 0.0
    %814 = vmatmul.mubr.f32.gmra.mrb[0].mxu0 %v499
    %v815 = vpop.f32.mrb[0].mxu0
    %v816 = vadd.f32 0.0, %v815
    %v817 = vpop.f32.mrb[0].mxu0
    %818 = vdwg.mxu0
    %v819 = vadd.f32 %v732, %v816
    %v820 = vtanh.pop %v819
    %v821 = vld [vmem:[#allocation10] sm:$0xff]
    %v822 = vld [vmem:[#allocation10 + $0x8] sm:$0xff]
    %v823 = vld [vmem:[#allocation10 + $0x10] sm:$0xff]
    %v824 = vld [vmem:[#allocation10 + $0x18] sm:$0xff]
    %v825 = vld [vmem:[#allocation10 + $0x20] sm:$0xff]
    %v826 = vld [vmem:[#allocation10 + $0x28] sm:$0xff]
    %v827 = vld [vmem:[#allocation10 + $0x30] sm:$0xff]
    %v828 = vld [vmem:[#allocation10 + $0x38] sm:$0xff]
    %v829 = vld [vmem:[#allocation10 + $0x40] sm:$0xff]
    %v830 = vld [vmem:[#allocation10 + $0x48] sm:$0xff]
    %v831 = vld [vmem:[#allocation10 + $0x50] sm:$0xff]
    %v832 = vld [vmem:[#allocation10 + $0x58] sm:$0xff]
    %v833 = vld [vmem:[#allocation10 + $0x60] sm:$0xff]
    %v834 = vld [vmem:[#allocation10 + $0x68] sm:$0xff]
    %v835 = vld [vmem:[#allocation10 + $0x70] sm:$0xff]
    %v836 = vld [vmem:[#allocation10 + $0x78] sm:$0xff]
    %v837 = vld [vmem:[#allocation10 + $0x80] sm:$0xff]
    %v838 = vld [vmem:[#allocation10 + $0x88] sm:$0xff]
    %v839 = vld [vmem:[#allocation10 + $0x90] sm:$0xff]
    %v840 = vld [vmem:[#allocation10 + $0x98] sm:$0xff]
    %v841 = vld [vmem:[#allocation10 + $0xa0] sm:$0xff]
    %v842 = vld [vmem:[#allocation10 + $0xa8] sm:$0xff]
    %v843 = vld [vmem:[#allocation10 + $0xb0] sm:$0xff]
    %v844 = vld [vmem:[#allocation10 + $0xb8] sm:$0xff]
    %v845 = vld [vmem:[#allocation10 + $0xc0] sm:$0xff]
    %v846 = vld [vmem:[#allocation10 + $0xc8] sm:$0xff]
    %v847 = vld [vmem:[#allocation10 + $0xd0] sm:$0xff]
    %v848 = vld [vmem:[#allocation10 + $0xd8] sm:$0xff]
    %v849 = vld [vmem:[#allocation10 + $0xe0] sm:$0xff]
    %v850 = vld [vmem:[#allocation10 + $0xe8] sm:$0xff]
    %v851 = vld [vmem:[#allocation10 + $0xf0] sm:$0xff]
    %v852 = vld [vmem:[#allocation10 + $0xf8] sm:$0xff]
    %v853 = vld [vmem:[%s3] sm:$0x1]
    %v855 = vlaneseq
    %v856 = vshrl.u32 %v855, 7
    %v857 = vsub.s32 0, %v856
    %v858 = vrot.slane %v853, %v857
    %860 = vmatprep.subr.mxu0 0.0
    %861 = vmatpush1.msra.mxu0 %v821
    %862 = vmatprep.subr.mxu0 0.0
    %863 = vmatpush1.msra.mxu0 %v822
    %864 = vmatprep.subr.mxu0 0.0
    %865 = vmatpush1.msra.mxu0 %v823
    %866 = vmatprep.subr.mxu0 0.0
    %867 = vmatpush1.msra.mxu0 %v824
    %868 = vmatprep.subr.mxu0 0.0
    %869 = vmatpush1.msra.mxu0 %v825
    %870 = vmatprep.subr.mxu0 0.0
    %871 = vmatpush1.msra.mxu0 %v826
    %872 = vmatprep.subr.mxu0 0.0
    %873 = vmatpush1.msra.mxu0 %v827
    %874 = vmatprep.subr.mxu0 0.0
    %875 = vmatpush1.msra.mxu0 %v828
    %876 = vmatprep.subr.mxu0 0.0
    %877 = vmatpush1.msra.mxu0 %v829
    %878 = vmatprep.subr.mxu0 0.0
    %879 = vmatpush1.msra.mxu0 %v830
    %880 = vmatprep.subr.mxu0 0.0
    %881 = vmatpush1.msra.mxu0 %v831
    %882 = vmatprep.subr.mxu0 0.0
    %883 = vmatpush1.msra.mxu0 %v832
    %884 = vmatprep.subr.mxu0 0.0
    %885 = vmatpush1.msra.mxu0 %v833
    %886 = vmatprep.subr.mxu0 0.0
    %887 = vmatpush1.msra.mxu0 %v834
    %888 = vmatprep.subr.mxu0 0.0
    %889 = vmatpush1.msra.mxu0 %v835
    %890 = vmatprep.subr.mxu0 0.0
    %891 = vmatpush1.msra.mxu0 %v836
    %892 = vmatprep.subr.mxu0 0.0
    %893 = vmatpush1.msra.mxu0 %v837
    %894 = vmatprep.subr.mxu0 0.0
    %895 = vmatpush1.msra.mxu0 %v838
    %896 = vmatprep.subr.mxu0 0.0
    %897 = vmatpush1.msra.mxu0 %v839
    %898 = vmatprep.subr.mxu0 0.0
    %899 = vmatpush1.msra.mxu0 %v840
    %900 = vmatprep.subr.mxu0 0.0
    %901 = vmatpush1.msra.mxu0 %v841
    %902 = vmatprep.subr.mxu0 0.0
    %903 = vmatpush1.msra.mxu0 %v842
    %904 = vmatprep.subr.mxu0 0.0
    %905 = vmatpush1.msra.mxu0 %v843
    %906 = vmatprep.subr.mxu0 0.0
    %907 = vmatpush1.msra.mxu0 %v844
    %908 = vmatprep.subr.mxu0 0.0
    %909 = vmatpush1.msra.mxu0 %v845
    %910 = vmatprep.subr.mxu0 0.0
    %911 = vmatpush1.msra.mxu0 %v846
    %912 = vmatprep.subr.mxu0 0.0
    %913 = vmatpush1.msra.mxu0 %v847
    %914 = vmatprep.subr.mxu0 0.0
    %915 = vmatpush1.msra.mxu0 %v848
    %916 = vmatprep.subr.mxu0 0.0
    %917 = vmatpush1.msra.mxu0 %v849
    %918 = vmatprep.subr.mxu0 0.0
    %919 = vmatpush1.msra.mxu0 %v850
    %920 = vmatprep.subr.mxu0 0.0
    %921 = vmatpush1.msra.mxu0 %v851
    %922 = vmatprep.subr.mxu0 0.0
    %923 = vmatpush1.msra.mxu0 %v852
    %924 = vmatprep.mubr.f32.mxu0 %v609
    %925 = vmatmul.mubr.f32.gmra.mrb[0].mxu0 %v820
    %v926 = vpop.f32.mrb[0].mxu0
    %v927 = vadd.f32 %v858, %v926
    %v928 = vpop.f32.mrb[0].mxu0
    %929 = vdwg.mxu0
    %v930 = vtanh.pop %v927
    %v931 = vld [vmem:[#allocation11] sm:$0xff]
    %v932 = vld [vmem:[#allocation11 + $0x8] sm:$0xff]
    %v933 = vld [vmem:[#allocation11 + $0x10] sm:$0xff]
    %v934 = vld [vmem:[#allocation11 + $0x18] sm:$0xff]
    %v935 = vld [vmem:[#allocation11 + $0x20] sm:$0xff]
    %v936 = vld [vmem:[#allocation11 + $0x28] sm:$0xff]
    %v937 = vld [vmem:[#allocation11 + $0x30] sm:$0xff]
    %v938 = vld [vmem:[#allocation11 + $0x38] sm:$0xff]
    %v939 = vld [vmem:[#allocation11 + $0x40] sm:$0xff]
    %v940 = vld [vmem:[#allocation11 + $0x48] sm:$0xff]
    %v941 = vld [vmem:[#allocation11 + $0x50] sm:$0xff]
    %v942 = vld [vmem:[#allocation11 + $0x58] sm:$0xff]
    %v943 = vld [vmem:[#allocation11 + $0x60] sm:$0xff]
    %v944 = vld [vmem:[#allocation11 + $0x68] sm:$0xff]
    %v945 = vld [vmem:[#allocation11 + $0x70] sm:$0xff]
    %v946 = vld [vmem:[#allocation11 + $0x78] sm:$0xff]
    %v947 = vld [vmem:[#allocation11 + $0x80] sm:$0xff]
    %v948 = vld [vmem:[#allocation11 + $0x88] sm:$0xff]
    %v949 = vld [vmem:[#allocation11 + $0x90] sm:$0xff]
    %v950 = vld [vmem:[#allocation11 + $0x98] sm:$0xff]
    %v951 = vld [vmem:[#allocation11 + $0xa0] sm:$0xff]
    %v952 = vld [vmem:[#allocation11 + $0xa8] sm:$0xff]
    %v953 = vld [vmem:[#allocation11 + $0xb0] sm:$0xff]
    %v954 = vld [vmem:[#allocation11 + $0xb8] sm:$0xff]
    %v955 = vld [vmem:[#allocation11 + $0xc0] sm:$0xff]
    %v956 = vld [vmem:[#allocation11 + $0xc8] sm:$0xff]
    %v957 = vld [vmem:[#allocation11 + $0xd0] sm:$0xff]
    %v958 = vld [vmem:[#allocation11 + $0xd8] sm:$0xff]
    %v959 = vld [vmem:[#allocation11 + $0xe0] sm:$0xff]
    %v960 = vld [vmem:[#allocation11 + $0xe8] sm:$0xff]
    %v961 = vld [vmem:[#allocation11 + $0xf0] sm:$0xff]
    %v962 = vld [vmem:[#allocation11 + $0xf8] sm:$0xff]
    %v963 = vld [vmem:[%s5] sm:$0x1]
    %v965 = vlaneseq
    %v966 = vshrl.u32 %v965, 7
    %v967 = vsub.s32 0, %v966
    %v968 = vrot.slane %v963, %v967
    %970 = vmatprep.subr.mxu0 0.0
    %971 = vmatpush1.msra.mxu0 %v931
    %972 = vmatprep.subr.mxu0 0.0
    %973 = vmatpush1.msra.mxu0 %v932
    %974 = vmatprep.subr.mxu0 0.0
    %975 = vmatpush1.msra.mxu0 %v933
    %976 = vmatprep.subr.mxu0 0.0
    %977 = vmatpush1.msra.mxu0 %v934
    %978 = vmatprep.subr.mxu0 0.0
    %979 = vmatpush1.msra.mxu0 %v935
    %980 = vmatprep.subr.mxu0 0.0
    %981 = vmatpush1.msra.mxu0 %v936
    %982 = vmatprep.subr.mxu0 0.0
    %983 = vmatpush1.msra.mxu0 %v937
    %984 = vmatprep.subr.mxu0 0.0
    %985 = vmatpush1.msra.mxu0 %v938
    %986 = vmatprep.subr.mxu0 0.0
    %987 = vmatpush1.msra.mxu0 %v939
    %988 = vmatprep.subr.mxu0 0.0
    %989 = vmatpush1.msra.mxu0 %v940
    %990 = vmatprep.subr.mxu0 0.0
    %991 = vmatpush1.msra.mxu0 %v941
    %992 = vmatprep.subr.mxu0 0.0
    %993 = vmatpush1.msra.mxu0 %v942
    %994 = vmatprep.subr.mxu0 0.0
    %995 = vmatpush1.msra.mxu0 %v943
    %996 = vmatprep.subr.mxu0 0.0
    %997 = vmatpush1.msra.mxu0 %v944
    %998 = vmatprep.subr.mxu0 0.0
    %999 = vmatpush1.msra.mxu0 %v945
    %1000 = vmatprep.subr.mxu0 0.0
    %1001 = vmatpush1.msra.mxu0 %v946
    %1002 = vmatprep.subr.mxu0 0.0
    %1003 = vmatpush1.msra.mxu0 %v947
    %1004 = vmatprep.subr.mxu0 0.0
    %1005 = vmatpush1.msra.mxu0 %v948
    %1006 = vmatprep.subr.mxu0 0.0
    %1007 = vmatpush1.msra.mxu0 %v949
    %1008 = vmatprep.subr.mxu0 0.0
    %1009 = vmatpush1.msra.mxu0 %v950
    %1010 = vmatprep.subr.mxu0 0.0
    %1011 = vmatpush1.msra.mxu0 %v951
    %1012 = vmatprep.subr.mxu0 0.0
    %1013 = vmatpush1.msra.mxu0 %v952
    %1014 = vmatprep.subr.mxu0 0.0
    %1015 = vmatpush1.msra.mxu0 %v953
    %1016 = vmatprep.subr.mxu0 0.0
    %1017 = vmatpush1.msra.mxu0 %v954
    %1018 = vmatprep.subr.mxu0 0.0
    %1019 = vmatpush1.msra.mxu0 %v955
    %1020 = vmatprep.subr.mxu0 0.0
    %1021 = vmatpush1.msra.mxu0 %v956
    %1022 = vmatprep.subr.mxu0 0.0
    %1023 = vmatpush1.msra.mxu0 %v957
    %1024 = vmatprep.subr.mxu0 0.0
    %1025 = vmatpush1.msra.mxu0 %v958
    %1026 = vmatprep.subr.mxu0 0.0
    %1027 = vmatpush1.msra.mxu0 %v959
    %1028 = vmatprep.subr.mxu0 0.0
    %1029 = vmatpush1.msra.mxu0 %v960
    %1030 = vmatprep.subr.mxu0 0.0
    %1031 = vmatpush1.msra.mxu0 %v961
    %1032 = vmatprep.subr.mxu0 0.0
    %1033 = vmatpush1.msra.mxu0 %v962
    %1034 = vmatprep.mubr.f32.mxu0 %v719
    %1035 = vmatmul.mubr.f32.gmra.mrb[0].mxu0 %v930
    %v1036 = vpop.f32.mrb[0].mxu0
    %v1037 = vadd.f32 %v968, %v1036
    %v1038 = vpop.f32.mrb[0].mxu0
    %1039 = vdwg.mxu0
    %v1040 = vtanh.pop %v1037
    %p1041 = scmp.ge.s32.totalorder %s730, 5
    %p1042 = scmp.lt.s32.totalorder %s730, 8
    %p1043 = pnand %p1041, %p1042
    %p1044 = pneg %p1043
    // Predicated region
    $region54: #{tpu_custom_call.1} parent=1 // pred_check
      _
    $region55: #{tpu_custom_call.1} parent=1 // pred_check_branch
      %1046 = sbr.rel (%p1043) target = $region57
    $region56: #{tpu_custom_call.1} parent=1 // pred_region
      %s1047 = sadd.s32 %s86, 4294967293
      %s1048 = smul.u32 %s1047, 8
      %s1049 = scalar_lea.vmem [#allocation13], %s1048
      %1050 = vst [vmem:[%s1049] sm:$0xff] %v1040
    $region57: #{tpu_custom_call.1} parent=1 // pred_fallthru
      _
    %s1051 = sadd.s32 %s86, 3
    %s1052 = scalar_lea.vmem [#allocation5], 24
    %v1053 = vld [vmem:[%s1052] sm:$0xff]
    %v1054 = vld [vmem:[#allocation8] sm:$0xff]
    %v1055 = vld [vmem:[#allocation8 + $0x8] sm:$0xff]
    %v1056 = vld [vmem:[#allocation8 + $0x10] sm:$0xff]
    %v1057 = vld [vmem:[#allocation8 + $0x18] sm:$0xff]
    %v1058 = vld [vmem:[#allocation8 + $0x20] sm:$0xff]
    %v1059 = vld [vmem:[#allocation8 + $0x28] sm:$0xff]
    %v1060 = vld [vmem:[#allocation8 + $0x30] sm:$0xff]
    %v1061 = vld [vmem:[#allocation8 + $0x38] sm:$0xff]
    %v1062 = vld [vmem:[#allocation8 + $0x40] sm:$0xff]
    %v1063 = vld [vmem:[#allocation8 + $0x48] sm:$0xff]
    %v1064 = vld [vmem:[#allocation8 + $0x50] sm:$0xff]
    %v1065 = vld [vmem:[#allocation8 + $0x58] sm:$0xff]
    %v1066 = vld [vmem:[#allocation8 + $0x60] sm:$0xff]
    %v1067 = vld [vmem:[#allocation8 + $0x68] sm:$0xff]
    %v1068 = vld [vmem:[#allocation8 + $0x70] sm:$0xff]
    %v1069 = vld [vmem:[#allocation8 + $0x78] sm:$0xff]
    %1070 = vmatprep.subr.mxu0 0.0
    %1071 = vmatpush1.msra.mxu0 %v1054
    %1072 = vmatprep.subr.mxu0 0.0
    %1073 = vmatpush1.msra.mxu0 %v1055
    %1074 = vmatprep.subr.mxu0 0.0
    %1075 = vmatpush1.msra.mxu0 %v1056
    %1076 = vmatprep.subr.mxu0 0.0
    %1077 = vmatpush1.msra.mxu0 %v1057
    %1078 = vmatprep.subr.mxu0 0.0
    %1079 = vmatpush1.msra.mxu0 %v1058
    %1080 = vmatprep.subr.mxu0 0.0
    %1081 = vmatpush1.msra.mxu0 %v1059
    %1082 = vmatprep.subr.mxu0 0.0
    %1083 = vmatpush1.msra.mxu0 %v1060
    %1084 = vmatprep.subr.mxu0 0.0
    %1085 = vmatpush1.msra.mxu0 %v1061
    %1086 = vmatprep.subr.mxu0 0.0
    %1087 = vmatpush1.msra.mxu0 %v1062
    %1088 = vmatprep.subr.mxu0 0.0
    %1089 = vmatpush1.msra.mxu0 %v1063
    %1090 = vmatprep.subr.mxu0 0.0
    %1091 = vmatpush1.msra.mxu0 %v1064
    %1092 = vmatprep.subr.mxu0 0.0
    %1093 = vmatpush1.msra.mxu0 %v1065
    %1094 = vmatprep.subr.mxu0 0.0
    %1095 = vmatpush1.msra.mxu0 %v1066
    %1096 = vmatprep.subr.mxu0 0.0
    %1097 = vmatpush1.msra.mxu0 %v1067
    %1098 = vmatprep.subr.mxu0 0.0
    %1099 = vmatpush1.msra.mxu0 %v1068
    %1100 = vmatprep.subr.mxu0 0.0
    %1101 = vmatpush1.msra.mxu0 %v1069
    %1102 = vmatprep.subr.mxu0 0.0
    %1103 = vmatpush1.msra.mxu0 0.0
    %1104 = vmatprep.subr.mxu0 0.0
    %1105 = vmatpush1.msra.mxu0 0.0
    %1106 = vmatprep.subr.mxu0 0.0
    %1107 = vmatpush1.msra.mxu0 0.0
    %1108 = vmatprep.subr.mxu0 0.0
    %1109 = vmatpush1.msra.mxu0 0.0
    %1110 = vmatprep.subr.mxu0 0.0
    %1111 = vmatpush1.msra.mxu0 0.0
    %1112 = vmatprep.subr.mxu0 0.0
    %1113 = vmatpush1.msra.mxu0 0.0
    %1114 = vmatprep.subr.mxu0 0.0
    %1115 = vmatpush1.msra.mxu0 0.0
    %1116 = vmatprep.subr.mxu0 0.0
    %1117 = vmatpush1.msra.mxu0 0.0
    %1118 = vmatprep.subr.mxu0 0.0
    %1119 = vmatpush1.msra.mxu0 0.0
    %1120 = vmatprep.subr.mxu0 0.0
    %1121 = vmatpush1.msra.mxu0 0.0
    %1122 = vmatprep.subr.mxu0 0.0
    %1123 = vmatpush1.msra.mxu0 0.0
    %1124 = vmatprep.subr.mxu0 0.0
    %1125 = vmatpush1.msra.mxu0 0.0
    %1126 = vmatprep.subr.mxu0 0.0
    %1127 = vmatpush1.msra.mxu0 0.0
    %1128 = vmatprep.subr.mxu0 0.0
    %1129 = vmatpush1.msra.mxu0 0.0
    %1130 = vmatprep.subr.mxu0 0.0
    %1131 = vmatpush1.msra.mxu0 0.0
    %1132 = vmatprep.subr.mxu0 0.0
    %1133 = vmatpush1.msra.mxu0 0.0
    %1134 = vmatprep.mubr.f32.mxu0 0.0
    %1135 = vmatmul.mubr.f32.gmra.mrb[0].mxu0 %v820
    %v1136 = vpop.f32.mrb[0].mxu0
    %v1137 = vadd.f32 0.0, %v1136
    %v1138 = vpop.f32.mrb[0].mxu0
    %1139 = vdwg.mxu0
    %v1140 = vadd.f32 %v1053, %v1137
    %v1141 = vtanh.pop %v1140
    %v1142 = vld [vmem:[#allocation10] sm:$0xff]
    %v1143 = vld [vmem:[#allocation10 + $0x8] sm:$0xff]
    %v1144 = vld [vmem:[#allocation10 + $0x10] sm:$0xff]
    %v1145 = vld [vmem:[#allocation10 + $0x18] sm:$0xff]
    %v1146 = vld [vmem:[#allocation10 + $0x20] sm:$0xff]
    %v1147 = vld [vmem:[#allocation10 + $0x28] sm:$0xff]
    %v1148 = vld [vmem:[#allocation10 + $0x30] sm:$0xff]
    %v1149 = vld [vmem:[#allocation10 + $0x38] sm:$0xff]
    %v1150 = vld [vmem:[#allocation10 + $0x40] sm:$0xff]
    %v1151 = vld [vmem:[#allocation10 + $0x48] sm:$0xff]
    %v1152 = vld [vmem:[#allocation10 + $0x50] sm:$0xff]
    %v1153 = vld [vmem:[#allocation10 + $0x58] sm:$0xff]
    %v1154 = vld [vmem:[#allocation10 + $0x60] sm:$0xff]
    %v1155 = vld [vmem:[#allocation10 + $0x68] sm:$0xff]
    %v1156 = vld [vmem:[#allocation10 + $0x70] sm:$0xff]
    %v1157 = vld [vmem:[#allocation10 + $0x78] sm:$0xff]
    %v1158 = vld [vmem:[#allocation10 + $0x80] sm:$0xff]
    %v1159 = vld [vmem:[#allocation10 + $0x88] sm:$0xff]
    %v1160 = vld [vmem:[#allocation10 + $0x90] sm:$0xff]
    %v1161 = vld [vmem:[#allocation10 + $0x98] sm:$0xff]
    %v1162 = vld [vmem:[#allocation10 + $0xa0] sm:$0xff]
    %v1163 = vld [vmem:[#allocation10 + $0xa8] sm:$0xff]
    %v1164 = vld [vmem:[#allocation10 + $0xb0] sm:$0xff]
    %v1165 = vld [vmem:[#allocation10 + $0xb8] sm:$0xff]
    %v1166 = vld [vmem:[#allocation10 + $0xc0] sm:$0xff]
    %v1167 = vld [vmem:[#allocation10 + $0xc8] sm:$0xff]
    %v1168 = vld [vmem:[#allocation10 + $0xd0] sm:$0xff]
    %v1169 = vld [vmem:[#allocation10 + $0xd8] sm:$0xff]
    %v1170 = vld [vmem:[#allocation10 + $0xe0] sm:$0xff]
    %v1171 = vld [vmem:[#allocation10 + $0xe8] sm:$0xff]
    %v1172 = vld [vmem:[#allocation10 + $0xf0] sm:$0xff]
    %v1173 = vld [vmem:[#allocation10 + $0xf8] sm:$0xff]
    %v1174 = vld [vmem:[%s3] sm:$0x1]
    %v1176 = vlaneseq
    %v1177 = vshrl.u32 %v1176, 7
    %v1178 = vsub.s32 0, %v1177
    %v1179 = vrot.slane %v1174, %v1178
    %1181 = vmatprep.subr.mxu0 0.0
    %1182 = vmatpush1.msra.mxu0 %v1142
    %1183 = vmatprep.subr.mxu0 0.0
    %1184 = vmatpush1.msra.mxu0 %v1143
    %1185 = vmatprep.subr.mxu0 0.0
    %1186 = vmatpush1.msra.mxu0 %v1144
    %1187 = vmatprep.subr.mxu0 0.0
    %1188 = vmatpush1.msra.mxu0 %v1145
    %1189 = vmatprep.subr.mxu0 0.0
    %1190 = vmatpush1.msra.mxu0 %v1146
    %1191 = vmatprep.subr.mxu0 0.0
    %1192 = vmatpush1.msra.mxu0 %v1147
    %1193 = vmatprep.subr.mxu0 0.0
    %1194 = vmatpush1.msra.mxu0 %v1148
    %1195 = vmatprep.subr.mxu0 0.0
    %1196 = vmatpush1.msra.mxu0 %v1149
    %1197 = vmatprep.subr.mxu0 0.0
    %1198 = vmatpush1.msra.mxu0 %v1150
    %1199 = vmatprep.subr.mxu0 0.0
    %1200 = vmatpush1.msra.mxu0 %v1151
    %1201 = vmatprep.subr.mxu0 0.0
    %1202 = vmatpush1.msra.mxu0 %v1152
    %1203 = vmatprep.subr.mxu0 0.0
    %1204 = vmatpush1.msra.mxu0 %v1153
    %1205 = vmatprep.subr.mxu0 0.0
    %1206 = vmatpush1.msra.mxu0 %v1154
    %1207 = vmatprep.subr.mxu0 0.0
    %1208 = vmatpush1.msra.mxu0 %v1155
    %1209 = vmatprep.subr.mxu0 0.0
    %1210 = vmatpush1.msra.mxu0 %v1156
    %1211 = vmatprep.subr.mxu0 0.0
    %1212 = vmatpush1.msra.mxu0 %v1157
    %1213 = vmatprep.subr.mxu0 0.0
    %1214 = vmatpush1.msra.mxu0 %v1158
    %1215 = vmatprep.subr.mxu0 0.0
    %1216 = vmatpush1.msra.mxu0 %v1159
    %1217 = vmatprep.subr.mxu0 0.0
    %1218 = vmatpush1.msra.mxu0 %v1160
    %1219 = vmatprep.subr.mxu0 0.0
    %1220 = vmatpush1.msra.mxu0 %v1161
    %1221 = vmatprep.subr.mxu0 0.0
    %1222 = vmatpush1.msra.mxu0 %v1162
    %1223 = vmatprep.subr.mxu0 0.0
    %1224 = vmatpush1.msra.mxu0 %v1163
    %1225 = vmatprep.subr.mxu0 0.0
    %1226 = vmatpush1.msra.mxu0 %v1164
    %1227 = vmatprep.subr.mxu0 0.0
    %1228 = vmatpush1.msra.mxu0 %v1165
    %1229 = vmatprep.subr.mxu0 0.0
    %1230 = vmatpush1.msra.mxu0 %v1166
    %1231 = vmatprep.subr.mxu0 0.0
    %1232 = vmatpush1.msra.mxu0 %v1167
    %1233 = vmatprep.subr.mxu0 0.0
    %1234 = vmatpush1.msra.mxu0 %v1168
    %1235 = vmatprep.subr.mxu0 0.0
    %1236 = vmatpush1.msra.mxu0 %v1169
    %1237 = vmatprep.subr.mxu0 0.0
    %1238 = vmatpush1.msra.mxu0 %v1170
    %1239 = vmatprep.subr.mxu0 0.0
    %1240 = vmatpush1.msra.mxu0 %v1171
    %1241 = vmatprep.subr.mxu0 0.0
    %1242 = vmatpush1.msra.mxu0 %v1172
    %1243 = vmatprep.subr.mxu0 0.0
    %1244 = vmatpush1.msra.mxu0 %v1173
    %1245 = vmatprep.mubr.f32.mxu0 %v930
    %1246 = vmatmul.mubr.f32.gmra.mrb[0].mxu0 %v1141
    %v1247 = vpop.f32.mrb[0].mxu0
    %v1248 = vadd.f32 %v1179, %v1247
    %v1249 = vpop.f32.mrb[0].mxu0
    %1250 = vdwg.mxu0
    %v1251 = vtanh.pop %v1248
    %v1252 = vld [vmem:[#allocation11] sm:$0xff]
    %v1253 = vld [vmem:[#allocation11 + $0x8] sm:$0xff]
    %v1254 = vld [vmem:[#allocation11 + $0x10] sm:$0xff]
    %v1255 = vld [vmem:[#allocation11 + $0x18] sm:$0xff]
    %v1256 = vld [vmem:[#allocation11 + $0x20] sm:$0xff]
    %v1257 = vld [vmem:[#allocation11 + $0x28] sm:$0xff]
    %v1258 = vld [vmem:[#allocation11 + $0x30] sm:$0xff]
    %v1259 = vld [vmem:[#allocation11 + $0x38] sm:$0xff]
    %v1260 = vld [vmem:[#allocation11 + $0x40] sm:$0xff]
    %v1261 = vld [vmem:[#allocation11 + $0x48] sm:$0xff]
    %v1262 = vld [vmem:[#allocation11 + $0x50] sm:$0xff]
    %v1263 = vld [vmem:[#allocation11 + $0x58] sm:$0xff]
    %v1264 = vld [vmem:[#allocation11 + $0x60] sm:$0xff]
    %v1265 = vld [vmem:[#allocation11 + $0x68] sm:$0xff]
    %v1266 = vld [vmem:[#allocation11 + $0x70] sm:$0xff]
    %v1267 = vld [vmem:[#allocation11 + $0x78] sm:$0xff]
    %v1268 = vld [vmem:[#allocation11 + $0x80] sm:$0xff]
    %v1269 = vld [vmem:[#allocation11 + $0x88] sm:$0xff]
    %v1270 = vld [vmem:[#allocation11 + $0x90] sm:$0xff]
    %v1271 = vld [vmem:[#allocation11 + $0x98] sm:$0xff]
    %v1272 = vld [vmem:[#allocation11 + $0xa0] sm:$0xff]
    %v1273 = vld [vmem:[#allocation11 + $0xa8] sm:$0xff]
    %v1274 = vld [vmem:[#allocation11 + $0xb0] sm:$0xff]
    %v1275 = vld [vmem:[#allocation11 + $0xb8] sm:$0xff]
    %v1276 = vld [vmem:[#allocation11 + $0xc0] sm:$0xff]
    %v1277 = vld [vmem:[#allocation11 + $0xc8] sm:$0xff]
    %v1278 = vld [vmem:[#allocation11 + $0xd0] sm:$0xff]
    %v1279 = vld [vmem:[#allocation11 + $0xd8] sm:$0xff]
    %v1280 = vld [vmem:[#allocation11 + $0xe0] sm:$0xff]
    %v1281 = vld [vmem:[#allocation11 + $0xe8] sm:$0xff]
    %v1282 = vld [vmem:[#allocation11 + $0xf0] sm:$0xff]
    %v1283 = vld [vmem:[#allocation11 + $0xf8] sm:$0xff]
    %v1284 = vld [vmem:[%s5] sm:$0x1]
    %v1286 = vlaneseq
    %v1287 = vshrl.u32 %v1286, 7
    %v1288 = vsub.s32 0, %v1287
    %v1289 = vrot.slane %v1284, %v1288
    %1291 = vmatprep.subr.mxu0 0.0
    %1292 = vmatpush1.msra.mxu0 %v1252
    %1293 = vmatprep.subr.mxu0 0.0
    %1294 = vmatpush1.msra.mxu0 %v1253
    %1295 = vmatprep.subr.mxu0 0.0
    %1296 = vmatpush1.msra.mxu0 %v1254
    %1297 = vmatprep.subr.mxu0 0.0
    %1298 = vmatpush1.msra.mxu0 %v1255
    %1299 = vmatprep.subr.mxu0 0.0
    %1300 = vmatpush1.msra.mxu0 %v1256
    %1301 = vmatprep.subr.mxu0 0.0
    %1302 = vmatpush1.msra.mxu0 %v1257
    %1303 = vmatprep.subr.mxu0 0.0
    %1304 = vmatpush1.msra.mxu0 %v1258
    %1305 = vmatprep.subr.mxu0 0.0
    %1306 = vmatpush1.msra.mxu0 %v1259
    %1307 = vmatprep.subr.mxu0 0.0
    %1308 = vmatpush1.msra.mxu0 %v1260
    %1309 = vmatprep.subr.mxu0 0.0
    %1310 = vmatpush1.msra.mxu0 %v1261
    %1311 = vmatprep.subr.mxu0 0.0
    %1312 = vmatpush1.msra.mxu0 %v1262
    %1313 = vmatprep.subr.mxu0 0.0
    %1314 = vmatpush1.msra.mxu0 %v1263
    %1315 = vmatprep.subr.mxu0 0.0
    %1316 = vmatpush1.msra.mxu0 %v1264
    %1317 = vmatprep.subr.mxu0 0.0
    %1318 = vmatpush1.msra.mxu0 %v1265
    %1319 = vmatprep.subr.mxu0 0.0
    %1320 = vmatpush1.msra.mxu0 %v1266
    %1321 = vmatprep.subr.mxu0 0.0
    %1322 = vmatpush1.msra.mxu0 %v1267
    %1323 = vmatprep.subr.mxu0 0.0
    %1324 = vmatpush1.msra.mxu0 %v1268
    %1325 = vmatprep.subr.mxu0 0.0
    %1326 = vmatpush1.msra.mxu0 %v1269
    %1327 = vmatprep.subr.mxu0 0.0
    %1328 = vmatpush1.msra.mxu0 %v1270
    %1329 = vmatprep.subr.mxu0 0.0
    %1330 = vmatpush1.msra.mxu0 %v1271
    %1331 = vmatprep.subr.mxu0 0.0
    %1332 = vmatpush1.msra.mxu0 %v1272
    %1333 = vmatprep.subr.mxu0 0.0
    %1334 = vmatpush1.msra.mxu0 %v1273
    %1335 = vmatprep.subr.mxu0 0.0
    %1336 = vmatpush1.msra.mxu0 %v1274
    %1337 = vmatprep.subr.mxu0 0.0
    %1338 = vmatpush1.msra.mxu0 %v1275
    %1339 = vmatprep.subr.mxu0 0.0
    %1340 = vmatpush1.msra.mxu0 %v1276
    %1341 = vmatprep.subr.mxu0 0.0
    %1342 = vmatpush1.msra.mxu0 %v1277
    %1343 = vmatprep.subr.mxu0 0.0
    %1344 = vmatpush1.msra.mxu0 %v1278
    %1345 = vmatprep.subr.mxu0 0.0
    %1346 = vmatpush1.msra.mxu0 %v1279
    %1347 = vmatprep.subr.mxu0 0.0
    %1348 = vmatpush1.msra.mxu0 %v1280
    %1349 = vmatprep.subr.mxu0 0.0
    %1350 = vmatpush1.msra.mxu0 %v1281
    %1351 = vmatprep.subr.mxu0 0.0
    %1352 = vmatpush1.msra.mxu0 %v1282
    %1353 = vmatprep.subr.mxu0 0.0
    %1354 = vmatpush1.msra.mxu0 %v1283
    %1355 = vmatprep.mubr.f32.mxu0 %v1040
    %1356 = vmatmul.mubr.f32.gmra.mrb[0].mxu0 %v1251
    %v1357 = vpop.f32.mrb[0].mxu0
    %v1358 = vadd.f32 %v1289, %v1357
    %v1359 = vpop.f32.mrb[0].mxu0
    %1360 = vdwg.mxu0
    %v1361 = vtanh.pop %v1358
    %p1362 = scmp.ge.s32.totalorder %s1051, 5
    %p1363 = scmp.lt.s32.totalorder %s1051, 8
    %p1364 = pnand %p1362, %p1363
    %p1365 = pneg %p1364
    // Predicated region
    $region58: #{tpu_custom_call.1} parent=1 // pred_check
      _
    $region59: #{tpu_custom_call.1} parent=1 // pred_check_branch
      %1367 = sbr.rel (%p1364) target = $region61
    $region60: #{tpu_custom_call.1} parent=1 // pred_region
      %s1368 = sadd.s32 %s86, 4294967294
      %s1369 = smul.u32 %s1368, 8
      %s1370 = scalar_lea.vmem [#allocation13], %s1369
      %1371 = vst [vmem:[%s1370] sm:$0xff] %v1361
    $region61: #{tpu_custom_call.1} parent=1 // pred_fallthru
      _
    %s1372 = sadd.s32 %s86, 4
    %s1373 = scalar_lea.vmem [#allocation5], 32
    %v1374 = vld [vmem:[%s1373] sm:$0xff]
    %v1375 = vld [vmem:[#allocation8] sm:$0xff]
    %v1376 = vld [vmem:[#allocation8 + $0x8] sm:$0xff]
    %v1377 = vld [vmem:[#allocation8 + $0x10] sm:$0xff]
    %v1378 = vld [vmem:[#allocation8 + $0x18] sm:$0xff]
    %v1379 = vld [vmem:[#allocation8 + $0x20] sm:$0xff]
    %v1380 = vld [vmem:[#allocation8 + $0x28] sm:$0xff]
    %v1381 = vld [vmem:[#allocation8 + $0x30] sm:$0xff]
    %v1382 = vld [vmem:[#allocation8 + $0x38] sm:$0xff]
    %v1383 = vld [vmem:[#allocation8 + $0x40] sm:$0xff]
    %v1384 = vld [vmem:[#allocation8 + $0x48] sm:$0xff]
    %v1385 = vld [vmem:[#allocation8 + $0x50] sm:$0xff]
    %v1386 = vld [vmem:[#allocation8 + $0x58] sm:$0xff]
    %v1387 = vld [vmem:[#allocation8 + $0x60] sm:$0xff]
    %v1388 = vld [vmem:[#allocation8 + $0x68] sm:$0xff]
    %v1389 = vld [vmem:[#allocation8 + $0x70] sm:$0xff]
    %v1390 = vld [vmem:[#allocation8 + $0x78] sm:$0xff]
    %1391 = vmatprep.subr.mxu0 0.0
    %1392 = vmatpush1.msra.mxu0 %v1375
    %1393 = vmatprep.subr.mxu0 0.0
    %1394 = vmatpush1.msra.mxu0 %v1376
    %1395 = vmatprep.subr.mxu0 0.0
    %1396 = vmatpush1.msra.mxu0 %v1377
    %1397 = vmatprep.subr.mxu0 0.0
    %1398 = vmatpush1.msra.mxu0 %v1378
    %1399 = vmatprep.subr.mxu0 0.0
    %1400 = vmatpush1.msra.mxu0 %v1379
    %1401 = vmatprep.subr.mxu0 0.0
    %1402 = vmatpush1.msra.mxu0 %v1380
    %1403 = vmatprep.subr.mxu0 0.0
    %1404 = vmatpush1.msra.mxu0 %v1381
    %1405 = vmatprep.subr.mxu0 0.0
    %1406 = vmatpush1.msra.mxu0 %v1382
    %1407 = vmatprep.subr.mxu0 0.0
    %1408 = vmatpush1.msra.mxu0 %v1383
    %1409 = vmatprep.subr.mxu0 0.0
    %1410 = vmatpush1.msra.mxu0 %v1384
    %1411 = vmatprep.subr.mxu0 0.0
    %1412 = vmatpush1.msra.mxu0 %v1385
    %1413 = vmatprep.subr.mxu0 0.0
    %1414 = vmatpush1.msra.mxu0 %v1386
    %1415 = vmatprep.subr.mxu0 0.0
    %1416 = vmatpush1.msra.mxu0 %v1387
    %1417 = vmatprep.subr.mxu0 0.0
    %1418 = vmatpush1.msra.mxu0 %v1388
    %1419 = vmatprep.subr.mxu0 0.0
    %1420 = vmatpush1.msra.mxu0 %v1389
    %1421 = vmatprep.subr.mxu0 0.0
    %1422 = vmatpush1.msra.mxu0 %v1390
    %1423 = vmatprep.subr.mxu0 0.0
    %1424 = vmatpush1.msra.mxu0 0.0
    %1425 = vmatprep.subr.mxu0 0.0
    %1426 = vmatpush1.msra.mxu0 0.0
    %1427 = vmatprep.subr.mxu0 0.0
    %1428 = vmatpush1.msra.mxu0 0.0
    %1429 = vmatprep.subr.mxu0 0.0
    %1430 = vmatpush1.msra.mxu0 0.0
    %1431 = vmatprep.subr.mxu0 0.0
    %1432 = vmatpush1.msra.mxu0 0.0
    %1433 = vmatprep.subr.mxu0 0.0
    %1434 = vmatpush1.msra.mxu0 0.0
    %1435 = vmatprep.subr.mxu0 0.0
    %1436 = vmatpush1.msra.mxu0 0.0
    %1437 = vmatprep.subr.mxu0 0.0
    %1438 = vmatpush1.msra.mxu0 0.0
    %1439 = vmatprep.subr.mxu0 0.0
    %1440 = vmatpush1.msra.mxu0 0.0
    %1441 = vmatprep.subr.mxu0 0.0
    %1442 = vmatpush1.msra.mxu0 0.0
    %1443 = vmatprep.subr.mxu0 0.0
    %1444 = vmatpush1.msra.mxu0 0.0
    %1445 = vmatprep.subr.mxu0 0.0
    %1446 = vmatpush1.msra.mxu0 0.0
    %1447 = vmatprep.subr.mxu0 0.0
    %1448 = vmatpush1.msra.mxu0 0.0
    %1449 = vmatprep.subr.mxu0 0.0
    %1450 = vmatpush1.msra.mxu0 0.0
    %1451 = vmatprep.subr.mxu0 0.0
    %1452 = vmatpush1.msra.mxu0 0.0
    %1453 = vmatprep.subr.mxu0 0.0
    %1454 = vmatpush1.msra.mxu0 0.0
    %1455 = vmatprep.mubr.f32.mxu0 0.0
    %1456 = vmatmul.mubr.f32.gmra.mrb[0].mxu0 %v1141
    %v1457 = vpop.f32.mrb[0].mxu0
    %v1458 = vadd.f32 0.0, %v1457
    %v1459 = vpop.f32.mrb[0].mxu0
    %1460 = vdwg.mxu0
    %v1461 = vadd.f32 %v1374, %v1458
    %v1462 = vtanh.pop %v1461
    %v1463 = vld [vmem:[#allocation10] sm:$0xff]
    %v1464 = vld [vmem:[#allocation10 + $0x8] sm:$0xff]
    %v1465 = vld [vmem:[#allocation10 + $0x10] sm:$0xff]
    %v1466 = vld [vmem:[#allocation10 + $0x18] sm:$0xff]
    %v1467 = vld [vmem:[#allocation10 + $0x20] sm:$0xff]
    %v1468 = vld [vmem:[#allocation10 + $0x28] sm:$0xff]
    %v1469 = vld [vmem:[#allocation10 + $0x30] sm:$0xff]
    %v1470 = vld [vmem:[#allocation10 + $0x38] sm:$0xff]
    %v1471 = vld [vmem:[#allocation10 + $0x40] sm:$0xff]
    %v1472 = vld [vmem:[#allocation10 + $0x48] sm:$0xff]
    %v1473 = vld [vmem:[#allocation10 + $0x50] sm:$0xff]
    %v1474 = vld [vmem:[#allocation10 + $0x58] sm:$0xff]
    %v1475 = vld [vmem:[#allocation10 + $0x60] sm:$0xff]
    %v1476 = vld [vmem:[#allocation10 + $0x68] sm:$0xff]
    %v1477 = vld [vmem:[#allocation10 + $0x70] sm:$0xff]
    %v1478 = vld [vmem:[#allocation10 + $0x78] sm:$0xff]
    %v1479 = vld [vmem:[#allocation10 + $0x80] sm:$0xff]
    %v1480 = vld [vmem:[#allocation10 + $0x88] sm:$0xff]
    %v1481 = vld [vmem:[#allocation10 + $0x90] sm:$0xff]
    %v1482 = vld [vmem:[#allocation10 + $0x98] sm:$0xff]
    %v1483 = vld [vmem:[#allocation10 + $0xa0] sm:$0xff]
    %v1484 = vld [vmem:[#allocation10 + $0xa8] sm:$0xff]
    %v1485 = vld [vmem:[#allocation10 + $0xb0] sm:$0xff]
    %v1486 = vld [vmem:[#allocation10 + $0xb8] sm:$0xff]
    %v1487 = vld [vmem:[#allocation10 + $0xc0] sm:$0xff]
    %v1488 = vld [vmem:[#allocation10 + $0xc8] sm:$0xff]
    %v1489 = vld [vmem:[#allocation10 + $0xd0] sm:$0xff]
    %v1490 = vld [vmem:[#allocation10 + $0xd8] sm:$0xff]
    %v1491 = vld [vmem:[#allocation10 + $0xe0] sm:$0xff]
    %v1492 = vld [vmem:[#allocation10 + $0xe8] sm:$0xff]
    %v1493 = vld [vmem:[#allocation10 + $0xf0] sm:$0xff]
    %v1494 = vld [vmem:[#allocation10 + $0xf8] sm:$0xff]
    %v1495 = vld [vmem:[%s3] sm:$0x1]
    %v1497 = vlaneseq
    %v1498 = vshrl.u32 %v1497, 7
    %v1499 = vsub.s32 0, %v1498
    %v1500 = vrot.slane %v1495, %v1499
    %1502 = vmatprep.subr.mxu0 0.0
    %1503 = vmatpush1.msra.mxu0 %v1463
    %1504 = vmatprep.subr.mxu0 0.0
    %1505 = vmatpush1.msra.mxu0 %v1464
    %1506 = vmatprep.subr.mxu0 0.0
    %1507 = vmatpush1.msra.mxu0 %v1465
    %1508 = vmatprep.subr.mxu0 0.0
    %1509 = vmatpush1.msra.mxu0 %v1466
    %1510 = vmatprep.subr.mxu0 0.0
    %1511 = vmatpush1.msra.mxu0 %v1467
    %1512 = vmatprep.subr.mxu0 0.0
    %1513 = vmatpush1.msra.mxu0 %v1468
    %1514 = vmatprep.subr.mxu0 0.0
    %1515 = vmatpush1.msra.mxu0 %v1469
    %1516 = vmatprep.subr.mxu0 0.0
    %1517 = vmatpush1.msra.mxu0 %v1470
    %1518 = vmatprep.subr.mxu0 0.0
    %1519 = vmatpush1.msra.mxu0 %v1471
    %1520 = vmatprep.subr.mxu0 0.0
    %1521 = vmatpush1.msra.mxu0 %v1472
    %1522 = vmatprep.subr.mxu0 0.0
    %1523 = vmatpush1.msra.mxu0 %v1473
    %1524 = vmatprep.subr.mxu0 0.0
    %1525 = vmatpush1.msra.mxu0 %v1474
    %1526 = vmatprep.subr.mxu0 0.0
    %1527 = vmatpush1.msra.mxu0 %v1475
    %1528 = vmatprep.subr.mxu0 0.0
    %1529 = vmatpush1.msra.mxu0 %v1476
    %1530 = vmatprep.subr.mxu0 0.0
    %1531 = vmatpush1.msra.mxu0 %v1477
    %1532 = vmatprep.subr.mxu0 0.0
    %1533 = vmatpush1.msra.mxu0 %v1478
    %1534 = vmatprep.subr.mxu0 0.0
    %1535 = vmatpush1.msra.mxu0 %v1479
    %1536 = vmatprep.subr.mxu0 0.0
    %1537 = vmatpush1.msra.mxu0 %v1480
    %1538 = vmatprep.subr.mxu0 0.0
    %1539 = vmatpush1.msra.mxu0 %v1481
    %1540 = vmatprep.subr.mxu0 0.0
    %1541 = vmatpush1.msra.mxu0 %v1482
    %1542 = vmatprep.subr.mxu0 0.0
    %1543 = vmatpush1.msra.mxu0 %v1483
    %1544 = vmatprep.subr.mxu0 0.0
    %1545 = vmatpush1.msra.mxu0 %v1484
    %1546 = vmatprep.subr.mxu0 0.0
    %1547 = vmatpush1.msra.mxu0 %v1485
    %1548 = vmatprep.subr.mxu0 0.0
    %1549 = vmatpush1.msra.mxu0 %v1486
    %1550 = vmatprep.subr.mxu0 0.0
    %1551 = vmatpush1.msra.mxu0 %v1487
    %1552 = vmatprep.subr.mxu0 0.0
    %1553 = vmatpush1.msra.mxu0 %v1488
    %1554 = vmatprep.subr.mxu0 0.0
    %1555 = vmatpush1.msra.mxu0 %v1489
    %1556 = vmatprep.subr.mxu0 0.0
    %1557 = vmatpush1.msra.mxu0 %v1490
    %1558 = vmatprep.subr.mxu0 0.0
    %1559 = vmatpush1.msra.mxu0 %v1491
    %1560 = vmatprep.subr.mxu0 0.0
    %1561 = vmatpush1.msra.mxu0 %v1492
    %1562 = vmatprep.subr.mxu0 0.0
    %1563 = vmatpush1.msra.mxu0 %v1493
    %1564 = vmatprep.subr.mxu0 0.0
    %1565 = vmatpush1.msra.mxu0 %v1494
    %1566 = vmatprep.mubr.f32.mxu0 %v1251
    %1567 = vmatmul.mubr.f32.gmra.mrb[0].mxu0 %v1462
    %v1568 = vpop.f32.mrb[0].mxu0
    %v1569 = vadd.f32 %v1500, %v1568
    %v1570 = vpop.f32.mrb[0].mxu0
    %1571 = vdwg.mxu0
    %v1572 = vtanh.pop %v1569
    %v1573 = vld [vmem:[#allocation11] sm:$0xff]
    %v1574 = vld [vmem:[#allocation11 + $0x8] sm:$0xff]
    %v1575 = vld [vmem:[#allocation11 + $0x10] sm:$0xff]
    %v1576 = vld [vmem:[#allocation11 + $0x18] sm:$0xff]
    %v1577 = vld [vmem:[#allocation11 + $0x20] sm:$0xff]
    %v1578 = vld [vmem:[#allocation11 + $0x28] sm:$0xff]
    %v1579 = vld [vmem:[#allocation11 + $0x30] sm:$0xff]
    %v1580 = vld [vmem:[#allocation11 + $0x38] sm:$0xff]
    %v1581 = vld [vmem:[#allocation11 + $0x40] sm:$0xff]
    %v1582 = vld [vmem:[#allocation11 + $0x48] sm:$0xff]
    %v1583 = vld [vmem:[#allocation11 + $0x50] sm:$0xff]
    %v1584 = vld [vmem:[#allocation11 + $0x58] sm:$0xff]
    %v1585 = vld [vmem:[#allocation11 + $0x60] sm:$0xff]
    %v1586 = vld [vmem:[#allocation11 + $0x68] sm:$0xff]
    %v1587 = vld [vmem:[#allocation11 + $0x70] sm:$0xff]
    %v1588 = vld [vmem:[#allocation11 + $0x78] sm:$0xff]
    %v1589 = vld [vmem:[#allocation11 + $0x80] sm:$0xff]
    %v1590 = vld [vmem:[#allocation11 + $0x88] sm:$0xff]
    %v1591 = vld [vmem:[#allocation11 + $0x90] sm:$0xff]
    %v1592 = vld [vmem:[#allocation11 + $0x98] sm:$0xff]
    %v1593 = vld [vmem:[#allocation11 + $0xa0] sm:$0xff]
    %v1594 = vld [vmem:[#allocation11 + $0xa8] sm:$0xff]
    %v1595 = vld [vmem:[#allocation11 + $0xb0] sm:$0xff]
    %v1596 = vld [vmem:[#allocation11 + $0xb8] sm:$0xff]
    %v1597 = vld [vmem:[#allocation11 + $0xc0] sm:$0xff]
    %v1598 = vld [vmem:[#allocation11 + $0xc8] sm:$0xff]
    %v1599 = vld [vmem:[#allocation11 + $0xd0] sm:$0xff]
    %v1600 = vld [vmem:[#allocation11 + $0xd8] sm:$0xff]
    %v1601 = vld [vmem:[#allocation11 + $0xe0] sm:$0xff]
    %v1602 = vld [vmem:[#allocation11 + $0xe8] sm:$0xff]
    %v1603 = vld [vmem:[#allocation11 + $0xf0] sm:$0xff]
    %v1604 = vld [vmem:[#allocation11 + $0xf8] sm:$0xff]
    %v1605 = vld [vmem:[%s5] sm:$0x1]
    %v1607 = vlaneseq
    %v1608 = vshrl.u32 %v1607, 7
    %v1609 = vsub.s32 0, %v1608
    %v1610 = vrot.slane %v1605, %v1609
    %1612 = vmatprep.subr.mxu0 0.0
    %1613 = vmatpush1.msra.mxu0 %v1573
    %1614 = vmatprep.subr.mxu0 0.0
    %1615 = vmatpush1.msra.mxu0 %v1574
    %1616 = vmatprep.subr.mxu0 0.0
    %1617 = vmatpush1.msra.mxu0 %v1575
    %1618 = vmatprep.subr.mxu0 0.0
    %1619 = vmatpush1.msra.mxu0 %v1576
    %1620 = vmatprep.subr.mxu0 0.0
    %1621 = vmatpush1.msra.mxu0 %v1577
    %1622 = vmatprep.subr.mxu0 0.0
    %1623 = vmatpush1.msra.mxu0 %v1578
    %1624 = vmatprep.subr.mxu0 0.0
    %1625 = vmatpush1.msra.mxu0 %v1579
    %1626 = vmatprep.subr.mxu0 0.0
    %1627 = vmatpush1.msra.mxu0 %v1580
    %1628 = vmatprep.subr.mxu0 0.0
    %1629 = vmatpush1.msra.mxu0 %v1581
    %1630 = vmatprep.subr.mxu0 0.0
    %1631 = vmatpush1.msra.mxu0 %v1582
    %1632 = vmatprep.subr.mxu0 0.0
    %1633 = vmatpush1.msra.mxu0 %v1583
    %1634 = vmatprep.subr.mxu0 0.0
    %1635 = vmatpush1.msra.mxu0 %v1584
    %1636 = vmatprep.subr.mxu0 0.0
    %1637 = vmatpush1.msra.mxu0 %v1585
    %1638 = vmatprep.subr.mxu0 0.0
    %1639 = vmatpush1.msra.mxu0 %v1586
    %1640 = vmatprep.subr.mxu0 0.0
    %1641 = vmatpush1.msra.mxu0 %v1587
    %1642 = vmatprep.subr.mxu0 0.0
    %1643 = vmatpush1.msra.mxu0 %v1588
    %1644 = vmatprep.subr.mxu0 0.0
    %1645 = vmatpush1.msra.mxu0 %v1589
    %1646 = vmatprep.subr.mxu0 0.0
    %1647 = vmatpush1.msra.mxu0 %v1590
    %1648 = vmatprep.subr.mxu0 0.0
    %1649 = vmatpush1.msra.mxu0 %v1591
    %1650 = vmatprep.subr.mxu0 0.0
    %1651 = vmatpush1.msra.mxu0 %v1592
    %1652 = vmatprep.subr.mxu0 0.0
    %1653 = vmatpush1.msra.mxu0 %v1593
    %1654 = vmatprep.subr.mxu0 0.0
    %1655 = vmatpush1.msra.mxu0 %v1594
    %1656 = vmatprep.subr.mxu0 0.0
    %1657 = vmatpush1.msra.mxu0 %v1595
    %1658 = vmatprep.subr.mxu0 0.0
    %1659 = vmatpush1.msra.mxu0 %v1596
    %1660 = vmatprep.subr.mxu0 0.0
    %1661 = vmatpush1.msra.mxu0 %v1597
    %1662 = vmatprep.subr.mxu0 0.0
    %1663 = vmatpush1.msra.mxu0 %v1598
    %1664 = vmatprep.subr.mxu0 0.0
    %1665 = vmatpush1.msra.mxu0 %v1599
    %1666 = vmatprep.subr.mxu0 0.0
    %1667 = vmatpush1.msra.mxu0 %v1600
    %1668 = vmatprep.subr.mxu0 0.0
    %1669 = vmatpush1.msra.mxu0 %v1601
    %1670 = vmatprep.subr.mxu0 0.0
    %1671 = vmatpush1.msra.mxu0 %v1602
    %1672 = vmatprep.subr.mxu0 0.0
    %1673 = vmatpush1.msra.mxu0 %v1603
    %1674 = vmatprep.subr.mxu0 0.0
    %1675 = vmatpush1.msra.mxu0 %v1604
    %1676 = vmatprep.mubr.f32.mxu0 %v1361
    %1677 = vmatmul.mubr.f32.gmra.mrb[0].mxu0 %v1572
    %v1678 = vpop.f32.mrb[0].mxu0
    %v1679 = vadd.f32 %v1610, %v1678
    %v1680 = vpop.f32.mrb[0].mxu0
    %1681 = vdwg.mxu0
    %v1682 = vtanh.pop %v1679
    %p1683 = scmp.ge.s32.totalorder %s1372, 5
    %p1684 = scmp.lt.s32.totalorder %s1372, 8
    %p1685 = pnand %p1683, %p1684
    %p1686 = pneg %p1685
    // Predicated region
    $region62: #{tpu_custom_call.1} parent=1 // pred_check
      _
    $region63: #{tpu_custom_call.1} parent=1 // pred_check_branch
      %1688 = sbr.rel (%p1685) target = $region65
    $region64: #{tpu_custom_call.1} parent=1 // pred_region
      %s1689 = sadd.s32 %s86, 4294967295
      %s1690 = smul.u32 %s1689, 8
      %s1691 = scalar_lea.vmem [#allocation13], %s1690
      %1692 = vst [vmem:[%s1691] sm:$0xff] %v1682
    $region65: #{tpu_custom_call.1} parent=1 // pred_fallthru
      _
    %s1693 = sadd.s32 %s86, 5
    %s1694 = scalar_lea.vmem [#allocation5], 40
    %v1695 = vld [vmem:[%s1694] sm:$0xff]
    %v1696 = vld [vmem:[#allocation8] sm:$0xff]
    %v1697 = vld [vmem:[#allocation8 + $0x8] sm:$0xff]
    %v1698 = vld [vmem:[#allocation8 + $0x10] sm:$0xff]
    %v1699 = vld [vmem:[#allocation8 + $0x18] sm:$0xff]
    %v1700 = vld [vmem:[#allocation8 + $0x20] sm:$0xff]
    %v1701 = vld [vmem:[#allocation8 + $0x28] sm:$0xff]
    %v1702 = vld [vmem:[#allocation8 + $0x30] sm:$0xff]
    %v1703 = vld [vmem:[#allocation8 + $0x38] sm:$0xff]
    %v1704 = vld [vmem:[#allocation8 + $0x40] sm:$0xff]
    %v1705 = vld [vmem:[#allocation8 + $0x48] sm:$0xff]
    %v1706 = vld [vmem:[#allocation8 + $0x50] sm:$0xff]
    %v1707 = vld [vmem:[#allocation8 + $0x58] sm:$0xff]
    %v1708 = vld [vmem:[#allocation8 + $0x60] sm:$0xff]
    %v1709 = vld [vmem:[#allocation8 + $0x68] sm:$0xff]
    %v1710 = vld [vmem:[#allocation8 + $0x70] sm:$0xff]
    %v1711 = vld [vmem:[#allocation8 + $0x78] sm:$0xff]
    %1712 = vmatprep.subr.mxu0 0.0
    %1713 = vmatpush1.msra.mxu0 %v1696
    %1714 = vmatprep.subr.mxu0 0.0
    %1715 = vmatpush1.msra.mxu0 %v1697
    %1716 = vmatprep.subr.mxu0 0.0
    %1717 = vmatpush1.msra.mxu0 %v1698
    %1718 = vmatprep.subr.mxu0 0.0
    %1719 = vmatpush1.msra.mxu0 %v1699
    %1720 = vmatprep.subr.mxu0 0.0
    %1721 = vmatpush1.msra.mxu0 %v1700
    %1722 = vmatprep.subr.mxu0 0.0
    %1723 = vmatpush1.msra.mxu0 %v1701
    %1724 = vmatprep.subr.mxu0 0.0
    %1725 = vmatpush1.msra.mxu0 %v1702
    %1726 = vmatprep.subr.mxu0 0.0
    %1727 = vmatpush1.msra.mxu0 %v1703
    %1728 = vmatprep.subr.mxu0 0.0
    %1729 = vmatpush1.msra.mxu0 %v1704
    %1730 = vmatprep.subr.mxu0 0.0
    %1731 = vmatpush1.msra.mxu0 %v1705
    %1732 = vmatprep.subr.mxu0 0.0
    %1733 = vmatpush1.msra.mxu0 %v1706
    %1734 = vmatprep.subr.mxu0 0.0
    %1735 = vmatpush1.msra.mxu0 %v1707
    %1736 = vmatprep.subr.mxu0 0.0
    %1737 = vmatpush1.msra.mxu0 %v1708
    %1738 = vmatprep.subr.mxu0 0.0
    %1739 = vmatpush1.msra.mxu0 %v1709
    %1740 = vmatprep.subr.mxu0 0.0
    %1741 = vmatpush1.msra.mxu0 %v1710
    %1742 = vmatprep.subr.mxu0 0.0
    %1743 = vmatpush1.msra.mxu0 %v1711
    %1744 = vmatprep.subr.mxu0 0.0
    %1745 = vmatpush1.msra.mxu0 0.0
    %1746 = vmatprep.subr.mxu0 0.0
    %1747 = vmatpush1.msra.mxu0 0.0
    %1748 = vmatprep.subr.mxu0 0.0
    %1749 = vmatpush1.msra.mxu0 0.0
    %1750 = vmatprep.subr.mxu0 0.0
    %1751 = vmatpush1.msra.mxu0 0.0
    %1752 = vmatprep.subr.mxu0 0.0
    %1753 = vmatpush1.msra.mxu0 0.0
    %1754 = vmatprep.subr.mxu0 0.0
    %1755 = vmatpush1.msra.mxu0 0.0
    %1756 = vmatprep.subr.mxu0 0.0
    %1757 = vmatpush1.msra.mxu0 0.0
    %1758 = vmatprep.subr.mxu0 0.0
    %1759 = vmatpush1.msra.mxu0 0.0
    %1760 = vmatprep.subr.mxu0 0.0
    %1761 = vmatpush1.msra.mxu0 0.0
    %1762 = vmatprep.subr.mxu0 0.0
    %1763 = vmatpush1.msra.mxu0 0.0
    %1764 = vmatprep.subr.mxu0 0.0
    %1765 = vmatpush1.msra.mxu0 0.0
    %1766 = vmatprep.subr.mxu0 0.0
    %1767 = vmatpush1.msra.mxu0 0.0
    %1768 = vmatprep.subr.mxu0 0.0
    %1769 = vmatpush1.msra.mxu0 0.0
    %1770 = vmatprep.subr.mxu0 0.0
    %1771 = vmatpush1.msra.mxu0 0.0
    %1772 = vmatprep.subr.mxu0 0.0
    %1773 = vmatpush1.msra.mxu0 0.0
    %1774 = vmatprep.subr.mxu0 0.0
    %1775 = vmatpush1.msra.mxu0 0.0
    %1776 = vmatprep.mubr.f32.mxu0 0.0
    %1777 = vmatmul.mubr.f32.gmra.mrb[0].mxu0 %v1462
    %v1778 = vpop.f32.mrb[0].mxu0
    %v1779 = vadd.f32 0.0, %v1778
    %v1780 = vpop.f32.mrb[0].mxu0
    %1781 = vdwg.mxu0
    %v1782 = vadd.f32 %v1695, %v1779
    %v1783 = vtanh.pop %v1782
    %v1784 = vld [vmem:[#allocation10] sm:$0xff]
    %v1785 = vld [vmem:[#allocation10 + $0x8] sm:$0xff]
    %v1786 = vld [vmem:[#allocation10 + $0x10] sm:$0xff]
    %v1787 = vld [vmem:[#allocation10 + $0x18] sm:$0xff]
    %v1788 = vld [vmem:[#allocation10 + $0x20] sm:$0xff]
    %v1789 = vld [vmem:[#allocation10 + $0x28] sm:$0xff]
    %v1790 = vld [vmem:[#allocation10 + $0x30] sm:$0xff]
    %v1791 = vld [vmem:[#allocation10 + $0x38] sm:$0xff]
    %v1792 = vld [vmem:[#allocation10 + $0x40] sm:$0xff]
    %v1793 = vld [vmem:[#allocation10 + $0x48] sm:$0xff]
    %v1794 = vld [vmem:[#allocation10 + $0x50] sm:$0xff]
    %v1795 = vld [vmem:[#allocation10 + $0x58] sm:$0xff]
    %v1796 = vld [vmem:[#allocation10 + $0x60] sm:$0xff]
    %v1797 = vld [vmem:[#allocation10 + $0x68] sm:$0xff]
    %v1798 = vld [vmem:[#allocation10 + $0x70] sm:$0xff]
    %v1799 = vld [vmem:[#allocation10 + $0x78] sm:$0xff]
    %v1800 = vld [vmem:[#allocation10 + $0x80] sm:$0xff]
    %v1801 = vld [vmem:[#allocation10 + $0x88] sm:$0xff]
    %v1802 = vld [vmem:[#allocation10 + $0x90] sm:$0xff]
    %v1803 = vld [vmem:[#allocation10 + $0x98] sm:$0xff]
    %v1804 = vld [vmem:[#allocation10 + $0xa0] sm:$0xff]
    %v1805 = vld [vmem:[#allocation10 + $0xa8] sm:$0xff]
    %v1806 = vld [vmem:[#allocation10 + $0xb0] sm:$0xff]
    %v1807 = vld [vmem:[#allocation10 + $0xb8] sm:$0xff]
    %v1808 = vld [vmem:[#allocation10 + $0xc0] sm:$0xff]
    %v1809 = vld [vmem:[#allocation10 + $0xc8] sm:$0xff]
    %v1810 = vld [vmem:[#allocation10 + $0xd0] sm:$0xff]
    %v1811 = vld [vmem:[#allocation10 + $0xd8] sm:$0xff]
    %v1812 = vld [vmem:[#allocation10 + $0xe0] sm:$0xff]
    %v1813 = vld [vmem:[#allocation10 + $0xe8] sm:$0xff]
    %v1814 = vld [vmem:[#allocation10 + $0xf0] sm:$0xff]
    %v1815 = vld [vmem:[#allocation10 + $0xf8] sm:$0xff]
    %v1816 = vld [vmem:[%s3] sm:$0x1]
    %v1818 = vlaneseq
    %v1819 = vshrl.u32 %v1818, 7
    %v1820 = vsub.s32 0, %v1819
    %v1821 = vrot.slane %v1816, %v1820
    %1823 = vmatprep.subr.mxu0 0.0
    %1824 = vmatpush1.msra.mxu0 %v1784
    %1825 = vmatprep.subr.mxu0 0.0
    %1826 = vmatpush1.msra.mxu0 %v1785
    %1827 = vmatprep.subr.mxu0 0.0
    %1828 = vmatpush1.msra.mxu0 %v1786
    %1829 = vmatprep.subr.mxu0 0.0
    %1830 = vmatpush1.msra.mxu0 %v1787
    %1831 = vmatprep.subr.mxu0 0.0
    %1832 = vmatpush1.msra.mxu0 %v1788
    %1833 = vmatprep.subr.mxu0 0.0
    %1834 = vmatpush1.msra.mxu0 %v1789
    %1835 = vmatprep.subr.mxu0 0.0
    %1836 = vmatpush1.msra.mxu0 %v1790
    %1837 = vmatprep.subr.mxu0 0.0
    %1838 = vmatpush1.msra.mxu0 %v1791
    %1839 = vmatprep.subr.mxu0 0.0
    %1840 = vmatpush1.msra.mxu0 %v1792
    %1841 = vmatprep.subr.mxu0 0.0
    %1842 = vmatpush1.msra.mxu0 %v1793
    %1843 = vmatprep.subr.mxu0 0.0
    %1844 = vmatpush1.msra.mxu0 %v1794
    %1845 = vmatprep.subr.mxu0 0.0
    %1846 = vmatpush1.msra.mxu0 %v1795
    %1847 = vmatprep.subr.mxu0 0.0
    %1848 = vmatpush1.msra.mxu0 %v1796
    %1849 = vmatprep.subr.mxu0 0.0
    %1850 = vmatpush1.msra.mxu0 %v1797
    %1851 = vmatprep.subr.mxu0 0.0
    %1852 = vmatpush1.msra.mxu0 %v1798
    %1853 = vmatprep.subr.mxu0 0.0
    %1854 = vmatpush1.msra.mxu0 %v1799
    %1855 = vmatprep.subr.mxu0 0.0
    %1856 = vmatpush1.msra.mxu0 %v1800
    %1857 = vmatprep.subr.mxu0 0.0
    %1858 = vmatpush1.msra.mxu0 %v1801
    %1859 = vmatprep.subr.mxu0 0.0
    %1860 = vmatpush1.msra.mxu0 %v1802
    %1861 = vmatprep.subr.mxu0 0.0
    %1862 = vmatpush1.msra.mxu0 %v1803
    %1863 = vmatprep.subr.mxu0 0.0
    %1864 = vmatpush1.msra.mxu0 %v1804
    %1865 = vmatprep.subr.mxu0 0.0
    %1866 = vmatpush1.msra.mxu0 %v1805
    %1867 = vmatprep.subr.mxu0 0.0
    %1868 = vmatpush1.msra.mxu0 %v1806
    %1869 = vmatprep.subr.mxu0 0.0
    %1870 = vmatpush1.msra.mxu0 %v1807
    %1871 = vmatprep.subr.mxu0 0.0
    %1872 = vmatpush1.msra.mxu0 %v1808
    %1873 = vmatprep.subr.mxu0 0.0
    %1874 = vmatpush1.msra.mxu0 %v1809
    %1875 = vmatprep.subr.mxu0 0.0
    %1876 = vmatpush1.msra.mxu0 %v1810
    %1877 = vmatprep.subr.mxu0 0.0
    %1878 = vmatpush1.msra.mxu0 %v1811
    %1879 = vmatprep.subr.mxu0 0.0
    %1880 = vmatpush1.msra.mxu0 %v1812
    %1881 = vmatprep.subr.mxu0 0.0
    %1882 = vmatpush1.msra.mxu0 %v1813
    %1883 = vmatprep.subr.mxu0 0.0
    %1884 = vmatpush1.msra.mxu0 %v1814
    %1885 = vmatprep.subr.mxu0 0.0
    %1886 = vmatpush1.msra.mxu0 %v1815
    %1887 = vmatprep.mubr.f32.mxu0 %v1572
    %1888 = vmatmul.mubr.f32.gmra.mrb[0].mxu0 %v1783
    %v1889 = vpop.f32.mrb[0].mxu0
    %v1890 = vadd.f32 %v1821, %v1889
    %v1891 = vpop.f32.mrb[0].mxu0
    %1892 = vdwg.mxu0
    %v1893 = vtanh.pop %v1890
    %v1894 = vld [vmem:[#allocation11] sm:$0xff]
    %v1895 = vld [vmem:[#allocation11 + $0x8] sm:$0xff]
    %v1896 = vld [vmem:[#allocation11 + $0x10] sm:$0xff]
    %v1897 = vld [vmem:[#allocation11 + $0x18] sm:$0xff]
    %v1898 = vld [vmem:[#allocation11 + $0x20] sm:$0xff]
    %v1899 = vld [vmem:[#allocation11 + $0x28] sm:$0xff]
    %v1900 = vld [vmem:[#allocation11 + $0x30] sm:$0xff]
    %v1901 = vld [vmem:[#allocation11 + $0x38] sm:$0xff]
    %v1902 = vld [vmem:[#allocation11 + $0x40] sm:$0xff]
    %v1903 = vld [vmem:[#allocation11 + $0x48] sm:$0xff]
    %v1904 = vld [vmem:[#allocation11 + $0x50] sm:$0xff]
    %v1905 = vld [vmem:[#allocation11 + $0x58] sm:$0xff]
    %v1906 = vld [vmem:[#allocation11 + $0x60] sm:$0xff]
    %v1907 = vld [vmem:[#allocation11 + $0x68] sm:$0xff]
    %v1908 = vld [vmem:[#allocation11 + $0x70] sm:$0xff]
    %v1909 = vld [vmem:[#allocation11 + $0x78] sm:$0xff]
    %v1910 = vld [vmem:[#allocation11 + $0x80] sm:$0xff]
    %v1911 = vld [vmem:[#allocation11 + $0x88] sm:$0xff]
    %v1912 = vld [vmem:[#allocation11 + $0x90] sm:$0xff]
    %v1913 = vld [vmem:[#allocation11 + $0x98] sm:$0xff]
    %v1914 = vld [vmem:[#allocation11 + $0xa0] sm:$0xff]
    %v1915 = vld [vmem:[#allocation11 + $0xa8] sm:$0xff]
    %v1916 = vld [vmem:[#allocation11 + $0xb0] sm:$0xff]
    %v1917 = vld [vmem:[#allocation11 + $0xb8] sm:$0xff]
    %v1918 = vld [vmem:[#allocation11 + $0xc0] sm:$0xff]
    %v1919 = vld [vmem:[#allocation11 + $0xc8] sm:$0xff]
    %v1920 = vld [vmem:[#allocation11 + $0xd0] sm:$0xff]
    %v1921 = vld [vmem:[#allocation11 + $0xd8] sm:$0xff]
    %v1922 = vld [vmem:[#allocation11 + $0xe0] sm:$0xff]
    %v1923 = vld [vmem:[#allocation11 + $0xe8] sm:$0xff]
    %v1924 = vld [vmem:[#allocation11 + $0xf0] sm:$0xff]
    %v1925 = vld [vmem:[#allocation11 + $0xf8] sm:$0xff]
    %v1926 = vld [vmem:[%s5] sm:$0x1]
    %v1928 = vlaneseq
    %v1929 = vshrl.u32 %v1928, 7
    %v1930 = vsub.s32 0, %v1929
    %v1931 = vrot.slane %v1926, %v1930
    %1933 = vmatprep.subr.mxu0 0.0
    %1934 = vmatpush1.msra.mxu0 %v1894
    %1935 = vmatprep.subr.mxu0 0.0
    %1936 = vmatpush1.msra.mxu0 %v1895
    %1937 = vmatprep.subr.mxu0 0.0
    %1938 = vmatpush1.msra.mxu0 %v1896
    %1939 = vmatprep.subr.mxu0 0.0
    %1940 = vmatpush1.msra.mxu0 %v1897
    %1941 = vmatprep.subr.mxu0 0.0
    %1942 = vmatpush1.msra.mxu0 %v1898
    %1943 = vmatprep.subr.mxu0 0.0
    %1944 = vmatpush1.msra.mxu0 %v1899
    %1945 = vmatprep.subr.mxu0 0.0
    %1946 = vmatpush1.msra.mxu0 %v1900
    %1947 = vmatprep.subr.mxu0 0.0
    %1948 = vmatpush1.msra.mxu0 %v1901
    %1949 = vmatprep.subr.mxu0 0.0
    %1950 = vmatpush1.msra.mxu0 %v1902
    %1951 = vmatprep.subr.mxu0 0.0
    %1952 = vmatpush1.msra.mxu0 %v1903
    %1953 = vmatprep.subr.mxu0 0.0
    %1954 = vmatpush1.msra.mxu0 %v1904
    %1955 = vmatprep.subr.mxu0 0.0
    %1956 = vmatpush1.msra.mxu0 %v1905
    %1957 = vmatprep.subr.mxu0 0.0
    %1958 = vmatpush1.msra.mxu0 %v1906
    %1959 = vmatprep.subr.mxu0 0.0
    %1960 = vmatpush1.msra.mxu0 %v1907
    %1961 = vmatprep.subr.mxu0 0.0
    %1962 = vmatpush1.msra.mxu0 %v1908
    %1963 = vmatprep.subr.mxu0 0.0
    %1964 = vmatpush1.msra.mxu0 %v1909
    %1965 = vmatprep.subr.mxu0 0.0
    %1966 = vmatpush1.msra.mxu0 %v1910
    %1967 = vmatprep.subr.mxu0 0.0
    %1968 = vmatpush1.msra.mxu0 %v1911
    %1969 = vmatprep.subr.mxu0 0.0
    %1970 = vmatpush1.msra.mxu0 %v1912
    %1971 = vmatprep.subr.mxu0 0.0
    %1972 = vmatpush1.msra.mxu0 %v1913
    %1973 = vmatprep.subr.mxu0 0.0
    %1974 = vmatpush1.msra.mxu0 %v1914
    %1975 = vmatprep.subr.mxu0 0.0
    %1976 = vmatpush1.msra.mxu0 %v1915
    %1977 = vmatprep.subr.mxu0 0.0
    %1978 = vmatpush1.msra.mxu0 %v1916
    %1979 = vmatprep.subr.mxu0 0.0
    %1980 = vmatpush1.msra.mxu0 %v1917
    %1981 = vmatprep.subr.mxu0 0.0
    %1982 = vmatpush1.msra.mxu0 %v1918
    %1983 = vmatprep.subr.mxu0 0.0
    %1984 = vmatpush1.msra.mxu0 %v1919
    %1985 = vmatprep.subr.mxu0 0.0
    %1986 = vmatpush1.msra.mxu0 %v1920
    %1987 = vmatprep.subr.mxu0 0.0
    %1988 = vmatpush1.msra.mxu0 %v1921
    %1989 = vmatprep.subr.mxu0 0.0
    %1990 = vmatpush1.msra.mxu0 %v1922
    %1991 = vmatprep.subr.mxu0 0.0
    %1992 = vmatpush1.msra.mxu0 %v1923
    %1993 = vmatprep.subr.mxu0 0.0
    %1994 = vmatpush1.msra.mxu0 %v1924
    %1995 = vmatprep.subr.mxu0 0.0
    %1996 = vmatpush1.msra.mxu0 %v1925
    %1997 = vmatprep.mubr.f32.mxu0 %v1682
    %1998 = vmatmul.mubr.f32.gmra.mrb[0].mxu0 %v1893
    %v1999 = vpop.f32.mrb[0].mxu0
    %v2000 = vadd.f32 %v1931, %v1999
    %v2001 = vpop.f32.mrb[0].mxu0
    %2002 = vdwg.mxu0
    %v2003 = vtanh.pop %v2000
    %p2004 = scmp.ge.s32.totalorder %s1693, 5
    %p2005 = scmp.lt.s32.totalorder %s1693, 8
    %p2006 = pnand %p2004, %p2005
    %p2007 = pneg %p2006
    // Predicated region
    $region66: #{tpu_custom_call.1} parent=1 // pred_check
      _
    $region67: #{tpu_custom_call.1} parent=1 // pred_check_branch
      %2009 = sbr.rel (%p2006) target = $region69
    $region68: #{tpu_custom_call.1} parent=1 // pred_region
      %s2010 = smul.u32 %s86, 8
      %s2011 = scalar_lea.vmem [#allocation13], %s2010
      %2012 = vst [vmem:[%s2011] sm:$0xff] %v2003
    $region69: #{tpu_custom_call.1} parent=1 // pred_fallthru
      _
    %s2013 = sadd.s32 %s86, 6
    %s2014 = scalar_lea.vmem [#allocation5], 48
    %v2015 = vld [vmem:[%s2014] sm:$0xff]
    %v2016 = vld [vmem:[#allocation8] sm:$0xff]
    %v2017 = vld [vmem:[#allocation8 + $0x8] sm:$0xff]
    %v2018 = vld [vmem:[#allocation8 + $0x10] sm:$0xff]
    %v2019 = vld [vmem:[#allocation8 + $0x18] sm:$0xff]
    %v2020 = vld [vmem:[#allocation8 + $0x20] sm:$0xff]
    %v2021 = vld [vmem:[#allocation8 + $0x28] sm:$0xff]
    %v2022 = vld [vmem:[#allocation8 + $0x30] sm:$0xff]
    %v2023 = vld [vmem:[#allocation8 + $0x38] sm:$0xff]
    %v2024 = vld [vmem:[#allocation8 + $0x40] sm:$0xff]
    %v2025 = vld [vmem:[#allocation8 + $0x48] sm:$0xff]
    %v2026 = vld [vmem:[#allocation8 + $0x50] sm:$0xff]
    %v2027 = vld [vmem:[#allocation8 + $0x58] sm:$0xff]
    %v2028 = vld [vmem:[#allocation8 + $0x60] sm:$0xff]
    %v2029 = vld [vmem:[#allocation8 + $0x68] sm:$0xff]
    %v2030 = vld [vmem:[#allocation8 + $0x70] sm:$0xff]
    %v2031 = vld [vmem:[#allocation8 + $0x78] sm:$0xff]
    %2032 = vmatprep.subr.mxu0 0.0
    %2033 = vmatpush1.msra.mxu0 %v2016
    %2034 = vmatprep.subr.mxu0 0.0
    %2035 = vmatpush1.msra.mxu0 %v2017
    %2036 = vmatprep.subr.mxu0 0.0
    %2037 = vmatpush1.msra.mxu0 %v2018
    %2038 = vmatprep.subr.mxu0 0.0
    %2039 = vmatpush1.msra.mxu0 %v2019
    %2040 = vmatprep.subr.mxu0 0.0
    %2041 = vmatpush1.msra.mxu0 %v2020
    %2042 = vmatprep.subr.mxu0 0.0
    %2043 = vmatpush1.msra.mxu0 %v2021
    %2044 = vmatprep.subr.mxu0 0.0
    %2045 = vmatpush1.msra.mxu0 %v2022
    %2046 = vmatprep.subr.mxu0 0.0
    %2047 = vmatpush1.msra.mxu0 %v2023
    %2048 = vmatprep.subr.mxu0 0.0
    %2049 = vmatpush1.msra.mxu0 %v2024
    %2050 = vmatprep.subr.mxu0 0.0
    %2051 = vmatpush1.msra.mxu0 %v2025
    %2052 = vmatprep.subr.mxu0 0.0
    %2053 = vmatpush1.msra.mxu0 %v2026
    %2054 = vmatprep.subr.mxu0 0.0
    %2055 = vmatpush1.msra.mxu0 %v2027
    %2056 = vmatprep.subr.mxu0 0.0
    %2057 = vmatpush1.msra.mxu0 %v2028
    %2058 = vmatprep.subr.mxu0 0.0
    %2059 = vmatpush1.msra.mxu0 %v2029
    %2060 = vmatprep.subr.mxu0 0.0
    %2061 = vmatpush1.msra.mxu0 %v2030
    %2062 = vmatprep.subr.mxu0 0.0
    %2063 = vmatpush1.msra.mxu0 %v2031
    %2064 = vmatprep.subr.mxu0 0.0
    %2065 = vmatpush1.msra.mxu0 0.0
    %2066 = vmatprep.subr.mxu0 0.0
    %2067 = vmatpush1.msra.mxu0 0.0
    %2068 = vmatprep.subr.mxu0 0.0
    %2069 = vmatpush1.msra.mxu0 0.0
    %2070 = vmatprep.subr.mxu0 0.0
    %2071 = vmatpush1.msra.mxu0 0.0
    %2072 = vmatprep.subr.mxu0 0.0
    %2073 = vmatpush1.msra.mxu0 0.0
    %2074 = vmatprep.subr.mxu0 0.0
    %2075 = vmatpush1.msra.mxu0 0.0
    %2076 = vmatprep.subr.mxu0 0.0
    %2077 = vmatpush1.msra.mxu0 0.0
    %2078 = vmatprep.subr.mxu0 0.0
    %2079 = vmatpush1.msra.mxu0 0.0
    %2080 = vmatprep.subr.mxu0 0.0
    %2081 = vmatpush1.msra.mxu0 0.0
    %2082 = vmatprep.subr.mxu0 0.0
    %2083 = vmatpush1.msra.mxu0 0.0
    %2084 = vmatprep.subr.mxu0 0.0
    %2085 = vmatpush1.msra.mxu0 0.0
    %2086 = vmatprep.subr.mxu0 0.0
    %2087 = vmatpush1.msra.mxu0 0.0
    %2088 = vmatprep.subr.mxu0 0.0
    %2089 = vmatpush1.msra.mxu0 0.0
    %2090 = vmatprep.subr.mxu0 0.0
    %2091 = vmatpush1.msra.mxu0 0.0
    %2092 = vmatprep.subr.mxu0 0.0
    %2093 = vmatpush1.msra.mxu0 0.0
    %2094 = vmatprep.subr.mxu0 0.0
    %2095 = vmatpush1.msra.mxu0 0.0
    %2096 = vmatprep.mubr.f32.mxu0 0.0
    %2097 = vmatmul.mubr.f32.gmra.mrb[0].mxu0 %v1783
    %v2098 = vpop.f32.mrb[0].mxu0
    %v2099 = vadd.f32 0.0, %v2098
    %v2100 = vpop.f32.mrb[0].mxu0
    %2101 = vdwg.mxu0
    %v2102 = vadd.f32 %v2015, %v2099
    %v2103 = vtanh.pop %v2102
    %v2104 = vld [vmem:[#allocation10] sm:$0xff]
    %v2105 = vld [vmem:[#allocation10 + $0x8] sm:$0xff]
    %v2106 = vld [vmem:[#allocation10 + $0x10] sm:$0xff]
    %v2107 = vld [vmem:[#allocation10 + $0x18] sm:$0xff]
    %v2108 = vld [vmem:[#allocation10 + $0x20] sm:$0xff]
    %v2109 = vld [vmem:[#allocation10 + $0x28] sm:$0xff]
    %v2110 = vld [vmem:[#allocation10 + $0x30] sm:$0xff]
    %v2111 = vld [vmem:[#allocation10 + $0x38] sm:$0xff]
    %v2112 = vld [vmem:[#allocation10 + $0x40] sm:$0xff]
    %v2113 = vld [vmem:[#allocation10 + $0x48] sm:$0xff]
    %v2114 = vld [vmem:[#allocation10 + $0x50] sm:$0xff]
    %v2115 = vld [vmem:[#allocation10 + $0x58] sm:$0xff]
    %v2116 = vld [vmem:[#allocation10 + $0x60] sm:$0xff]
    %v2117 = vld [vmem:[#allocation10 + $0x68] sm:$0xff]
    %v2118 = vld [vmem:[#allocation10 + $0x70] sm:$0xff]
    %v2119 = vld [vmem:[#allocation10 + $0x78] sm:$0xff]
    %v2120 = vld [vmem:[#allocation10 + $0x80] sm:$0xff]
    %v2121 = vld [vmem:[#allocation10 + $0x88] sm:$0xff]
    %v2122 = vld [vmem:[#allocation10 + $0x90] sm:$0xff]
    %v2123 = vld [vmem:[#allocation10 + $0x98] sm:$0xff]
    %v2124 = vld [vmem:[#allocation10 + $0xa0] sm:$0xff]
    %v2125 = vld [vmem:[#allocation10 + $0xa8] sm:$0xff]
    %v2126 = vld [vmem:[#allocation10 + $0xb0] sm:$0xff]
    %v2127 = vld [vmem:[#allocation10 + $0xb8] sm:$0xff]
    %v2128 = vld [vmem:[#allocation10 + $0xc0] sm:$0xff]
    %v2129 = vld [vmem:[#allocation10 + $0xc8] sm:$0xff]
    %v2130 = vld [vmem:[#allocation10 + $0xd0] sm:$0xff]
    %v2131 = vld [vmem:[#allocation10 + $0xd8] sm:$0xff]
    %v2132 = vld [vmem:[#allocation10 + $0xe0] sm:$0xff]
    %v2133 = vld [vmem:[#allocation10 + $0xe8] sm:$0xff]
    %v2134 = vld [vmem:[#allocation10 + $0xf0] sm:$0xff]
    %v2135 = vld [vmem:[#allocation10 + $0xf8] sm:$0xff]
    %v2136 = vld [vmem:[%s3] sm:$0x1]
    %v2138 = vlaneseq
    %v2139 = vshrl.u32 %v2138, 7
    %v2140 = vsub.s32 0, %v2139
    %v2141 = vrot.slane %v2136, %v2140
    %2143 = vmatprep.subr.mxu0 0.0
    %2144 = vmatpush1.msra.mxu0 %v2104
    %2145 = vmatprep.subr.mxu0 0.0
    %2146 = vmatpush1.msra.mxu0 %v2105
    %2147 = vmatprep.subr.mxu0 0.0
    %2148 = vmatpush1.msra.mxu0 %v2106
    %2149 = vmatprep.subr.mxu0 0.0
    %2150 = vmatpush1.msra.mxu0 %v2107
    %2151 = vmatprep.subr.mxu0 0.0
    %2152 = vmatpush1.msra.mxu0 %v2108
    %2153 = vmatprep.subr.mxu0 0.0
    %2154 = vmatpush1.msra.mxu0 %v2109
    %2155 = vmatprep.subr.mxu0 0.0
    %2156 = vmatpush1.msra.mxu0 %v2110
    %2157 = vmatprep.subr.mxu0 0.0
    %2158 = vmatpush1.msra.mxu0 %v2111
    %2159 = vmatprep.subr.mxu0 0.0
    %2160 = vmatpush1.msra.mxu0 %v2112
    %2161 = vmatprep.subr.mxu0 0.0
    %2162 = vmatpush1.msra.mxu0 %v2113
    %2163 = vmatprep.subr.mxu0 0.0
    %2164 = vmatpush1.msra.mxu0 %v2114
    %2165 = vmatprep.subr.mxu0 0.0
    %2166 = vmatpush1.msra.mxu0 %v2115
    %2167 = vmatprep.subr.mxu0 0.0
    %2168 = vmatpush1.msra.mxu0 %v2116
    %2169 = vmatprep.subr.mxu0 0.0
    %2170 = vmatpush1.msra.mxu0 %v2117
    %2171 = vmatprep.subr.mxu0 0.0
    %2172 = vmatpush1.msra.mxu0 %v2118
    %2173 = vmatprep.subr.mxu0 0.0
    %2174 = vmatpush1.msra.mxu0 %v2119
    %2175 = vmatprep.subr.mxu0 0.0
    %2176 = vmatpush1.msra.mxu0 %v2120
    %2177 = vmatprep.subr.mxu0 0.0
    %2178 = vmatpush1.msra.mxu0 %v2121
    %2179 = vmatprep.subr.mxu0 0.0
    %2180 = vmatpush1.msra.mxu0 %v2122
    %2181 = vmatprep.subr.mxu0 0.0
    %2182 = vmatpush1.msra.mxu0 %v2123
    %2183 = vmatprep.subr.mxu0 0.0
    %2184 = vmatpush1.msra.mxu0 %v2124
    %2185 = vmatprep.subr.mxu0 0.0
    %2186 = vmatpush1.msra.mxu0 %v2125
    %2187 = vmatprep.subr.mxu0 0.0
    %2188 = vmatpush1.msra.mxu0 %v2126
    %2189 = vmatprep.subr.mxu0 0.0
    %2190 = vmatpush1.msra.mxu0 %v2127
    %2191 = vmatprep.subr.mxu0 0.0
    %2192 = vmatpush1.msra.mxu0 %v2128
    %2193 = vmatprep.subr.mxu0 0.0
    %2194 = vmatpush1.msra.mxu0 %v2129
    %2195 = vmatprep.subr.mxu0 0.0
    %2196 = vmatpush1.msra.mxu0 %v2130
    %2197 = vmatprep.subr.mxu0 0.0
    %2198 = vmatpush1.msra.mxu0 %v2131
    %2199 = vmatprep.subr.mxu0 0.0
    %2200 = vmatpush1.msra.mxu0 %v2132
    %2201 = vmatprep.subr.mxu0 0.0
    %2202 = vmatpush1.msra.mxu0 %v2133
    %2203 = vmatprep.subr.mxu0 0.0
    %2204 = vmatpush1.msra.mxu0 %v2134
    %2205 = vmatprep.subr.mxu0 0.0
    %2206 = vmatpush1.msra.mxu0 %v2135
    %2207 = vmatprep.mubr.f32.mxu0 %v1893
    %2208 = vmatmul.mubr.f32.gmra.mrb[0].mxu0 %v2103
    %v2209 = vpop.f32.mrb[0].mxu0
    %v2210 = vadd.f32 %v2141, %v2209
    %v2211 = vpop.f32.mrb[0].mxu0
    %2212 = vdwg.mxu0
    %v2213 = vtanh.pop %v2210
    %v2214 = vld [vmem:[#allocation11] sm:$0xff]
    %v2215 = vld [vmem:[#allocation11 + $0x8] sm:$0xff]
    %v2216 = vld [vmem:[#allocation11 + $0x10] sm:$0xff]
    %v2217 = vld [vmem:[#allocation11 + $0x18] sm:$0xff]
    %v2218 = vld [vmem:[#allocation11 + $0x20] sm:$0xff]
    %v2219 = vld [vmem:[#allocation11 + $0x28] sm:$0xff]
    %v2220 = vld [vmem:[#allocation11 + $0x30] sm:$0xff]
    %v2221 = vld [vmem:[#allocation11 + $0x38] sm:$0xff]
    %v2222 = vld [vmem:[#allocation11 + $0x40] sm:$0xff]
    %v2223 = vld [vmem:[#allocation11 + $0x48] sm:$0xff]
    %v2224 = vld [vmem:[#allocation11 + $0x50] sm:$0xff]
    %v2225 = vld [vmem:[#allocation11 + $0x58] sm:$0xff]
    %v2226 = vld [vmem:[#allocation11 + $0x60] sm:$0xff]
    %v2227 = vld [vmem:[#allocation11 + $0x68] sm:$0xff]
    %v2228 = vld [vmem:[#allocation11 + $0x70] sm:$0xff]
    %v2229 = vld [vmem:[#allocation11 + $0x78] sm:$0xff]
    %v2230 = vld [vmem:[#allocation11 + $0x80] sm:$0xff]
    %v2231 = vld [vmem:[#allocation11 + $0x88] sm:$0xff]
    %v2232 = vld [vmem:[#allocation11 + $0x90] sm:$0xff]
    %v2233 = vld [vmem:[#allocation11 + $0x98] sm:$0xff]
    %v2234 = vld [vmem:[#allocation11 + $0xa0] sm:$0xff]
    %v2235 = vld [vmem:[#allocation11 + $0xa8] sm:$0xff]
    %v2236 = vld [vmem:[#allocation11 + $0xb0] sm:$0xff]
    %v2237 = vld [vmem:[#allocation11 + $0xb8] sm:$0xff]
    %v2238 = vld [vmem:[#allocation11 + $0xc0] sm:$0xff]
    %v2239 = vld [vmem:[#allocation11 + $0xc8] sm:$0xff]
    %v2240 = vld [vmem:[#allocation11 + $0xd0] sm:$0xff]
    %v2241 = vld [vmem:[#allocation11 + $0xd8] sm:$0xff]
    %v2242 = vld [vmem:[#allocation11 + $0xe0] sm:$0xff]
    %v2243 = vld [vmem:[#allocation11 + $0xe8] sm:$0xff]
    %v2244 = vld [vmem:[#allocation11 + $0xf0] sm:$0xff]
    %v2245 = vld [vmem:[#allocation11 + $0xf8] sm:$0xff]
    %v2246 = vld [vmem:[%s5] sm:$0x1]
    %v2248 = vlaneseq
    %v2249 = vshrl.u32 %v2248, 7
    %v2250 = vsub.s32 0, %v2249
    %v2251 = vrot.slane %v2246, %v2250
    %2253 = vmatprep.subr.mxu0 0.0
    %2254 = vmatpush1.msra.mxu0 %v2214
    %2255 = vmatprep.subr.mxu0 0.0
    %2256 = vmatpush1.msra.mxu0 %v2215
    %2257 = vmatprep.subr.mxu0 0.0
    %2258 = vmatpush1.msra.mxu0 %v2216
    %2259 = vmatprep.subr.mxu0 0.0
    %2260 = vmatpush1.msra.mxu0 %v2217
    %2261 = vmatprep.subr.mxu0 0.0
    %2262 = vmatpush1.msra.mxu0 %v2218
    %2263 = vmatprep.subr.mxu0 0.0
    %2264 = vmatpush1.msra.mxu0 %v2219
    %2265 = vmatprep.subr.mxu0 0.0
    %2266 = vmatpush1.msra.mxu0 %v2220
    %2267 = vmatprep.subr.mxu0 0.0
    %2268 = vmatpush1.msra.mxu0 %v2221
    %2269 = vmatprep.subr.mxu0 0.0
    %2270 = vmatpush1.msra.mxu0 %v2222
    %2271 = vmatprep.subr.mxu0 0.0
    %2272 = vmatpush1.msra.mxu0 %v2223
    %2273 = vmatprep.subr.mxu0 0.0
    %2274 = vmatpush1.msra.mxu0 %v2224
    %2275 = vmatprep.subr.mxu0 0.0
    %2276 = vmatpush1.msra.mxu0 %v2225
    %2277 = vmatprep.subr.mxu0 0.0
    %2278 = vmatpush1.msra.mxu0 %v2226
    %2279 = vmatprep.subr.mxu0 0.0
    %2280 = vmatpush1.msra.mxu0 %v2227
    %2281 = vmatprep.subr.mxu0 0.0
    %2282 = vmatpush1.msra.mxu0 %v2228
    %2283 = vmatprep.subr.mxu0 0.0
    %2284 = vmatpush1.msra.mxu0 %v2229
    %2285 = vmatprep.subr.mxu0 0.0
    %2286 = vmatpush1.msra.mxu0 %v2230
    %2287 = vmatprep.subr.mxu0 0.0
    %2288 = vmatpush1.msra.mxu0 %v2231
    %2289 = vmatprep.subr.mxu0 0.0
    %2290 = vmatpush1.msra.mxu0 %v2232
    %2291 = vmatprep.subr.mxu0 0.0
    %2292 = vmatpush1.msra.mxu0 %v2233
    %2293 = vmatprep.subr.mxu0 0.0
    %2294 = vmatpush1.msra.mxu0 %v2234
    %2295 = vmatprep.subr.mxu0 0.0
    %2296 = vmatpush1.msra.mxu0 %v2235
    %2297 = vmatprep.subr.mxu0 0.0
    %2298 = vmatpush1.msra.mxu0 %v2236
    %2299 = vmatprep.subr.mxu0 0.0
    %2300 = vmatpush1.msra.mxu0 %v2237
    %2301 = vmatprep.subr.mxu0 0.0
    %2302 = vmatpush1.msra.mxu0 %v2238
    %2303 = vmatprep.subr.mxu0 0.0
    %2304 = vmatpush1.msra.mxu0 %v2239
    %2305 = vmatprep.subr.mxu0 0.0
    %2306 = vmatpush1.msra.mxu0 %v2240
    %2307 = vmatprep.subr.mxu0 0.0
    %2308 = vmatpush1.msra.mxu0 %v2241
    %2309 = vmatprep.subr.mxu0 0.0
    %2310 = vmatpush1.msra.mxu0 %v2242
    %2311 = vmatprep.subr.mxu0 0.0
    %2312 = vmatpush1.msra.mxu0 %v2243
    %2313 = vmatprep.subr.mxu0 0.0
    %2314 = vmatpush1.msra.mxu0 %v2244
    %2315 = vmatprep.subr.mxu0 0.0
    %2316 = vmatpush1.msra.mxu0 %v2245
    %2317 = vmatprep.mubr.f32.mxu0 %v2003
    %2318 = vmatmul.mubr.f32.gmra.mrb[0].mxu0 %v2213
    %v2319 = vpop.f32.mrb[0].mxu0
    %v2320 = vadd.f32 %v2251, %v2319
    %v2321 = vpop.f32.mrb[0].mxu0
    %2322 = vdwg.mxu0
    %v2323 = vtanh.pop %v2320
    %p2324 = scmp.ge.s32.totalorder %s2013, 5
    %p2325 = scmp.lt.s32.totalorder %s2013, 8
    %p2326 = pnand %p2324, %p2325
    %p2327 = pneg %p2326
    // Predicated region
    $region70: #{tpu_custom_call.1} parent=1 // pred_check
      _
    $region71: #{tpu_custom_call.1} parent=1 // pred_check_branch
      %2329 = sbr.rel (%p2326) target = $region73
    $region72: #{tpu_custom_call.1} parent=1 // pred_region
      %s2330 = smul.u32 %s409, 8
      %s2331 = scalar_lea.vmem [#allocation13], %s2330
      %2332 = vst [vmem:[%s2331] sm:$0xff] %v2323
    $region73: #{tpu_custom_call.1} parent=1 // pred_fallthru
      _
    %s2333 = sadd.s32 %s86, 7
    %s2334 = scalar_lea.vmem [#allocation5], 56
    %v2335 = vld [vmem:[%s2334] sm:$0xff]
    %v2336 = vld [vmem:[#allocation8] sm:$0xff]
    %v2337 = vld [vmem:[#allocation8 + $0x8] sm:$0xff]
    %v2338 = vld [vmem:[#allocation8 + $0x10] sm:$0xff]
    %v2339 = vld [vmem:[#allocation8 + $0x18] sm:$0xff]
    %v2340 = vld [vmem:[#allocation8 + $0x20] sm:$0xff]
    %v2341 = vld [vmem:[#allocation8 + $0x28] sm:$0xff]
    %v2342 = vld [vmem:[#allocation8 + $0x30] sm:$0xff]
    %v2343 = vld [vmem:[#allocation8 + $0x38] sm:$0xff]
    %v2344 = vld [vmem:[#allocation8 + $0x40] sm:$0xff]
    %v2345 = vld [vmem:[#allocation8 + $0x48] sm:$0xff]
    %v2346 = vld [vmem:[#allocation8 + $0x50] sm:$0xff]
    %v2347 = vld [vmem:[#allocation8 + $0x58] sm:$0xff]
    %v2348 = vld [vmem:[#allocation8 + $0x60] sm:$0xff]
    %v2349 = vld [vmem:[#allocation8 + $0x68] sm:$0xff]
    %v2350 = vld [vmem:[#allocation8 + $0x70] sm:$0xff]
    %v2351 = vld [vmem:[#allocation8 + $0x78] sm:$0xff]
    %2352 = vmatprep.subr.mxu0 0.0
    %2353 = vmatpush1.msra.mxu0 %v2336
    %2354 = vmatprep.subr.mxu0 0.0
    %2355 = vmatpush1.msra.mxu0 %v2337
    %2356 = vmatprep.subr.mxu0 0.0
    %2357 = vmatpush1.msra.mxu0 %v2338
    %2358 = vmatprep.subr.mxu0 0.0
    %2359 = vmatpush1.msra.mxu0 %v2339
    %2360 = vmatprep.subr.mxu0 0.0
    %2361 = vmatpush1.msra.mxu0 %v2340
    %2362 = vmatprep.subr.mxu0 0.0
    %2363 = vmatpush1.msra.mxu0 %v2341
    %2364 = vmatprep.subr.mxu0 0.0
    %2365 = vmatpush1.msra.mxu0 %v2342
    %2366 = vmatprep.subr.mxu0 0.0
    %2367 = vmatpush1.msra.mxu0 %v2343
    %2368 = vmatprep.subr.mxu0 0.0
    %2369 = vmatpush1.msra.mxu0 %v2344
    %2370 = vmatprep.subr.mxu0 0.0
    %2371 = vmatpush1.msra.mxu0 %v2345
    %2372 = vmatprep.subr.mxu0 0.0
    %2373 = vmatpush1.msra.mxu0 %v2346
    %2374 = vmatprep.subr.mxu0 0.0
    %2375 = vmatpush1.msra.mxu0 %v2347
    %2376 = vmatprep.subr.mxu0 0.0
    %2377 = vmatpush1.msra.mxu0 %v2348
    %2378 = vmatprep.subr.mxu0 0.0
    %2379 = vmatpush1.msra.mxu0 %v2349
    %2380 = vmatprep.subr.mxu0 0.0
    %2381 = vmatpush1.msra.mxu0 %v2350
    %2382 = vmatprep.subr.mxu0 0.0
    %2383 = vmatpush1.msra.mxu0 %v2351
    %2384 = vmatprep.subr.mxu0 0.0
    %2385 = vmatpush1.msra.mxu0 0.0
    %2386 = vmatprep.subr.mxu0 0.0
    %2387 = vmatpush1.msra.mxu0 0.0
    %2388 = vmatprep.subr.mxu0 0.0
    %2389 = vmatpush1.msra.mxu0 0.0
    %2390 = vmatprep.subr.mxu0 0.0
    %2391 = vmatpush1.msra.mxu0 0.0
    %2392 = vmatprep.subr.mxu0 0.0
    %2393 = vmatpush1.msra.mxu0 0.0
    %2394 = vmatprep.subr.mxu0 0.0
    %2395 = vmatpush1.msra.mxu0 0.0
    %2396 = vmatprep.subr.mxu0 0.0
    %2397 = vmatpush1.msra.mxu0 0.0
    %2398 = vmatprep.subr.mxu0 0.0
    %2399 = vmatpush1.msra.mxu0 0.0
    %2400 = vmatprep.subr.mxu0 0.0
    %2401 = vmatpush1.msra.mxu0 0.0
    %2402 = vmatprep.subr.mxu0 0.0
    %2403 = vmatpush1.msra.mxu0 0.0
    %2404 = vmatprep.subr.mxu0 0.0
    %2405 = vmatpush1.msra.mxu0 0.0
    %2406 = vmatprep.subr.mxu0 0.0
    %2407 = vmatpush1.msra.mxu0 0.0
    %2408 = vmatprep.subr.mxu0 0.0
    %2409 = vmatpush1.msra.mxu0 0.0
    %2410 = vmatprep.subr.mxu0 0.0
    %2411 = vmatpush1.msra.mxu0 0.0
    %2412 = vmatprep.subr.mxu0 0.0
    %2413 = vmatpush1.msra.mxu0 0.0
    %2414 = vmatprep.subr.mxu0 0.0
    %2415 = vmatpush1.msra.mxu0 0.0
    %2416 = vmatprep.mubr.f32.mxu0 0.0
    %2417 = vmatmul.mubr.f32.gmra.mrb[0].mxu0 %v2103
    %v2418 = vpop.f32.mrb[0].mxu0
    %v2419 = vadd.f32 0.0, %v2418
    %v2420 = vpop.f32.mrb[0].mxu0
    %2421 = vdwg.mxu0
    %v2422 = vadd.f32 %v2335, %v2419
    %v2423 = vtanh.pop %v2422
    %v2424 = vld [vmem:[#allocation10] sm:$0xff]
    %v2425 = vld [vmem:[#allocation10 + $0x8] sm:$0xff]
    %v2426 = vld [vmem:[#allocation10 + $0x10] sm:$0xff]
    %v2427 = vld [vmem:[#allocation10 + $0x18] sm:$0xff]
    %v2428 = vld [vmem:[#allocation10 + $0x20] sm:$0xff]
    %v2429 = vld [vmem:[#allocation10 + $0x28] sm:$0xff]
    %v2430 = vld [vmem:[#allocation10 + $0x30] sm:$0xff]
    %v2431 = vld [vmem:[#allocation10 + $0x38] sm:$0xff]
    %v2432 = vld [vmem:[#allocation10 + $0x40] sm:$0xff]
    %v2433 = vld [vmem:[#allocation10 + $0x48] sm:$0xff]
    %v2434 = vld [vmem:[#allocation10 + $0x50] sm:$0xff]
    %v2435 = vld [vmem:[#allocation10 + $0x58] sm:$0xff]
    %v2436 = vld [vmem:[#allocation10 + $0x60] sm:$0xff]
    %v2437 = vld [vmem:[#allocation10 + $0x68] sm:$0xff]
    %v2438 = vld [vmem:[#allocation10 + $0x70] sm:$0xff]
    %v2439 = vld [vmem:[#allocation10 + $0x78] sm:$0xff]
    %v2440 = vld [vmem:[#allocation10 + $0x80] sm:$0xff]
    %v2441 = vld [vmem:[#allocation10 + $0x88] sm:$0xff]
    %v2442 = vld [vmem:[#allocation10 + $0x90] sm:$0xff]
    %v2443 = vld [vmem:[#allocation10 + $0x98] sm:$0xff]
    %v2444 = vld [vmem:[#allocation10 + $0xa0] sm:$0xff]
    %v2445 = vld [vmem:[#allocation10 + $0xa8] sm:$0xff]
    %v2446 = vld [vmem:[#allocation10 + $0xb0] sm:$0xff]
    %v2447 = vld [vmem:[#allocation10 + $0xb8] sm:$0xff]
    %v2448 = vld [vmem:[#allocation10 + $0xc0] sm:$0xff]
    %v2449 = vld [vmem:[#allocation10 + $0xc8] sm:$0xff]
    %v2450 = vld [vmem:[#allocation10 + $0xd0] sm:$0xff]
    %v2451 = vld [vmem:[#allocation10 + $0xd8] sm:$0xff]
    %v2452 = vld [vmem:[#allocation10 + $0xe0] sm:$0xff]
    %v2453 = vld [vmem:[#allocation10 + $0xe8] sm:$0xff]
    %v2454 = vld [vmem:[#allocation10 + $0xf0] sm:$0xff]
    %v2455 = vld [vmem:[#allocation10 + $0xf8] sm:$0xff]
    %v2456 = vld [vmem:[%s3] sm:$0x1]
    %v2458 = vlaneseq
    %v2459 = vshrl.u32 %v2458, 7
    %v2460 = vsub.s32 0, %v2459
    %v2461 = vrot.slane %v2456, %v2460
    %2463 = vmatprep.subr.mxu0 0.0
    %2464 = vmatpush1.msra.mxu0 %v2424
    %2465 = vmatprep.subr.mxu0 0.0
    %2466 = vmatpush1.msra.mxu0 %v2425
    %2467 = vmatprep.subr.mxu0 0.0
    %2468 = vmatpush1.msra.mxu0 %v2426
    %2469 = vmatprep.subr.mxu0 0.0
    %2470 = vmatpush1.msra.mxu0 %v2427
    %2471 = vmatprep.subr.mxu0 0.0
    %2472 = vmatpush1.msra.mxu0 %v2428
    %2473 = vmatprep.subr.mxu0 0.0
    %2474 = vmatpush1.msra.mxu0 %v2429
    %2475 = vmatprep.subr.mxu0 0.0
    %2476 = vmatpush1.msra.mxu0 %v2430
    %2477 = vmatprep.subr.mxu0 0.0
    %2478 = vmatpush1.msra.mxu0 %v2431
    %2479 = vmatprep.subr.mxu0 0.0
    %2480 = vmatpush1.msra.mxu0 %v2432
    %2481 = vmatprep.subr.mxu0 0.0
    %2482 = vmatpush1.msra.mxu0 %v2433
    %2483 = vmatprep.subr.mxu0 0.0
    %2484 = vmatpush1.msra.mxu0 %v2434
    %2485 = vmatprep.subr.mxu0 0.0
    %2486 = vmatpush1.msra.mxu0 %v2435
    %2487 = vmatprep.subr.mxu0 0.0
    %2488 = vmatpush1.msra.mxu0 %v2436
    %2489 = vmatprep.subr.mxu0 0.0
    %2490 = vmatpush1.msra.mxu0 %v2437
    %2491 = vmatprep.subr.mxu0 0.0
    %2492 = vmatpush1.msra.mxu0 %v2438
    %2493 = vmatprep.subr.mxu0 0.0
    %2494 = vmatpush1.msra.mxu0 %v2439
    %2495 = vmatprep.subr.mxu0 0.0
    %2496 = vmatpush1.msra.mxu0 %v2440
    %2497 = vmatprep.subr.mxu0 0.0
    %2498 = vmatpush1.msra.mxu0 %v2441
    %2499 = vmatprep.subr.mxu0 0.0
    %2500 = vmatpush1.msra.mxu0 %v2442
    %2501 = vmatprep.subr.mxu0 0.0
    %2502 = vmatpush1.msra.mxu0 %v2443
    %2503 = vmatprep.subr.mxu0 0.0
    %2504 = vmatpush1.msra.mxu0 %v2444
    %2505 = vmatprep.subr.mxu0 0.0
    %2506 = vmatpush1.msra.mxu0 %v2445
    %2507 = vmatprep.subr.mxu0 0.0
    %2508 = vmatpush1.msra.mxu0 %v2446
    %2509 = vmatprep.subr.mxu0 0.0
    %2510 = vmatpush1.msra.mxu0 %v2447
    %2511 = vmatprep.subr.mxu0 0.0
    %2512 = vmatpush1.msra.mxu0 %v2448
    %2513 = vmatprep.subr.mxu0 0.0
    %2514 = vmatpush1.msra.mxu0 %v2449
    %2515 = vmatprep.subr.mxu0 0.0
    %2516 = vmatpush1.msra.mxu0 %v2450
    %2517 = vmatprep.subr.mxu0 0.0
    %2518 = vmatpush1.msra.mxu0 %v2451
    %2519 = vmatprep.subr.mxu0 0.0
    %2520 = vmatpush1.msra.mxu0 %v2452
    %2521 = vmatprep.subr.mxu0 0.0
    %2522 = vmatpush1.msra.mxu0 %v2453
    %2523 = vmatprep.subr.mxu0 0.0
    %2524 = vmatpush1.msra.mxu0 %v2454
    %2525 = vmatprep.subr.mxu0 0.0
    %2526 = vmatpush1.msra.mxu0 %v2455
    %2527 = vmatprep.mubr.f32.mxu0 %v2213
    %2528 = vmatmul.mubr.f32.gmra.mrb[0].mxu0 %v2423
    %v2529 = vpop.f32.mrb[0].mxu0
    %v2530 = vadd.f32 %v2461, %v2529
    %v2531 = vpop.f32.mrb[0].mxu0
    %2532 = vdwg.mxu0
    %v2533 = vtanh.pop %v2530
    %v2534 = vld [vmem:[#allocation11] sm:$0xff]
    %v2535 = vld [vmem:[#allocation11 + $0x8] sm:$0xff]
    %v2536 = vld [vmem:[#allocation11 + $0x10] sm:$0xff]
    %v2537 = vld [vmem:[#allocation11 + $0x18] sm:$0xff]
    %v2538 = vld [vmem:[#allocation11 + $0x20] sm:$0xff]
    %v2539 = vld [vmem:[#allocation11 + $0x28] sm:$0xff]
    %v2540 = vld [vmem:[#allocation11 + $0x30] sm:$0xff]
    %v2541 = vld [vmem:[#allocation11 + $0x38] sm:$0xff]
    %v2542 = vld [vmem:[#allocation11 + $0x40] sm:$0xff]
    %v2543 = vld [vmem:[#allocation11 + $0x48] sm:$0xff]
    %v2544 = vld [vmem:[#allocation11 + $0x50] sm:$0xff]
    %v2545 = vld [vmem:[#allocation11 + $0x58] sm:$0xff]
    %v2546 = vld [vmem:[#allocation11 + $0x60] sm:$0xff]
    %v2547 = vld [vmem:[#allocation11 + $0x68] sm:$0xff]
    %v2548 = vld [vmem:[#allocation11 + $0x70] sm:$0xff]
    %v2549 = vld [vmem:[#allocation11 + $0x78] sm:$0xff]
    %v2550 = vld [vmem:[#allocation11 + $0x80] sm:$0xff]
    %v2551 = vld [vmem:[#allocation11 + $0x88] sm:$0xff]
    %v2552 = vld [vmem:[#allocation11 + $0x90] sm:$0xff]
    %v2553 = vld [vmem:[#allocation11 + $0x98] sm:$0xff]
    %v2554 = vld [vmem:[#allocation11 + $0xa0] sm:$0xff]
    %v2555 = vld [vmem:[#allocation11 + $0xa8] sm:$0xff]
    %v2556 = vld [vmem:[#allocation11 + $0xb0] sm:$0xff]
    %v2557 = vld [vmem:[#allocation11 + $0xb8] sm:$0xff]
    %v2558 = vld [vmem:[#allocation11 + $0xc0] sm:$0xff]
    %v2559 = vld [vmem:[#allocation11 + $0xc8] sm:$0xff]
    %v2560 = vld [vmem:[#allocation11 + $0xd0] sm:$0xff]
    %v2561 = vld [vmem:[#allocation11 + $0xd8] sm:$0xff]
    %v2562 = vld [vmem:[#allocation11 + $0xe0] sm:$0xff]
    %v2563 = vld [vmem:[#allocation11 + $0xe8] sm:$0xff]
    %v2564 = vld [vmem:[#allocation11 + $0xf0] sm:$0xff]
    %v2565 = vld [vmem:[#allocation11 + $0xf8] sm:$0xff]
    %v2566 = vld [vmem:[%s5] sm:$0x1]
    %v2568 = vlaneseq
    %v2569 = vshrl.u32 %v2568, 7
    %v2570 = vsub.s32 0, %v2569
    %v2571 = vrot.slane %v2566, %v2570
    %2573 = vmatprep.subr.mxu0 0.0
    %2574 = vmatpush1.msra.mxu0 %v2534
    %2575 = vmatprep.subr.mxu0 0.0
    %2576 = vmatpush1.msra.mxu0 %v2535
    %2577 = vmatprep.subr.mxu0 0.0
    %2578 = vmatpush1.msra.mxu0 %v2536
    %2579 = vmatprep.subr.mxu0 0.0
    %2580 = vmatpush1.msra.mxu0 %v2537
    %2581 = vmatprep.subr.mxu0 0.0
    %2582 = vmatpush1.msra.mxu0 %v2538
    %2583 = vmatprep.subr.mxu0 0.0
    %2584 = vmatpush1.msra.mxu0 %v2539
    %2585 = vmatprep.subr.mxu0 0.0
    %2586 = vmatpush1.msra.mxu0 %v2540
    %2587 = vmatprep.subr.mxu0 0.0
    %2588 = vmatpush1.msra.mxu0 %v2541
    %2589 = vmatprep.subr.mxu0 0.0
    %2590 = vmatpush1.msra.mxu0 %v2542
    %2591 = vmatprep.subr.mxu0 0.0
    %2592 = vmatpush1.msra.mxu0 %v2543
    %2593 = vmatprep.subr.mxu0 0.0
    %2594 = vmatpush1.msra.mxu0 %v2544
    %2595 = vmatprep.subr.mxu0 0.0
    %2596 = vmatpush1.msra.mxu0 %v2545
    %2597 = vmatprep.subr.mxu0 0.0
    %2598 = vmatpush1.msra.mxu0 %v2546
    %2599 = vmatprep.subr.mxu0 0.0
    %2600 = vmatpush1.msra.mxu0 %v2547
    %2601 = vmatprep.subr.mxu0 0.0
    %2602 = vmatpush1.msra.mxu0 %v2548
    %2603 = vmatprep.subr.mxu0 0.0
    %2604 = vmatpush1.msra.mxu0 %v2549
    %2605 = vmatprep.subr.mxu0 0.0
    %2606 = vmatpush1.msra.mxu0 %v2550
    %2607 = vmatprep.subr.mxu0 0.0
    %2608 = vmatpush1.msra.mxu0 %v2551
    %2609 = vmatprep.subr.mxu0 0.0
    %2610 = vmatpush1.msra.mxu0 %v2552
    %2611 = vmatprep.subr.mxu0 0.0
    %2612 = vmatpush1.msra.mxu0 %v2553
    %2613 = vmatprep.subr.mxu0 0.0
    %2614 = vmatpush1.msra.mxu0 %v2554
    %2615 = vmatprep.subr.mxu0 0.0
    %2616 = vmatpush1.msra.mxu0 %v2555
    %2617 = vmatprep.subr.mxu0 0.0
    %2618 = vmatpush1.msra.mxu0 %v2556
    %2619 = vmatprep.subr.mxu0 0.0
    %2620 = vmatpush1.msra.mxu0 %v2557
    %2621 = vmatprep.subr.mxu0 0.0
    %2622 = vmatpush1.msra.mxu0 %v2558
    %2623 = vmatprep.subr.mxu0 0.0
    %2624 = vmatpush1.msra.mxu0 %v2559
    %2625 = vmatprep.subr.mxu0 0.0
    %2626 = vmatpush1.msra.mxu0 %v2560
    %2627 = vmatprep.subr.mxu0 0.0
    %2628 = vmatpush1.msra.mxu0 %v2561
    %2629 = vmatprep.subr.mxu0 0.0
    %2630 = vmatpush1.msra.mxu0 %v2562
    %2631 = vmatprep.subr.mxu0 0.0
    %2632 = vmatpush1.msra.mxu0 %v2563
    %2633 = vmatprep.subr.mxu0 0.0
    %2634 = vmatpush1.msra.mxu0 %v2564
    %2635 = vmatprep.subr.mxu0 0.0
    %2636 = vmatpush1.msra.mxu0 %v2565
    %2637 = vmatprep.mubr.f32.mxu0 %v2323
    %2638 = vmatmul.mubr.f32.gmra.mrb[0].mxu0 %v2533
    %v2639 = vpop.f32.mrb[0].mxu0
    %v2640 = vadd.f32 %v2571, %v2639
    %v2641 = vpop.f32.mrb[0].mxu0
    %2642 = vdwg.mxu0
    %v2643 = vtanh.pop %v2640
    %p2644 = scmp.ge.s32.totalorder %s2333, 5
    %p2645 = scmp.lt.s32.totalorder %s2333, 8
    %p2646 = pnand %p2644, %p2645
    %p2647 = pneg %p2646
    // Predicated region
    $region74: #{tpu_custom_call.1} parent=1 // pred_check
      _
    $region75: #{tpu_custom_call.1} parent=1 // pred_check_branch
      %2649 = sbr.rel (%p2646) target = $region77
    $region76: #{tpu_custom_call.1} parent=1 // pred_region
      %s2650 = smul.u32 %s730, 8
      %s2651 = scalar_lea.vmem [#allocation13], %s2650
      %2652 = vst [vmem:[%s2651] sm:$0xff] %v2643
    $region77: #{tpu_custom_call.1} parent=1 // pred_fallthru
      _
    %2653 = vst [vmem:[#allocation2] sm:$0xff] %v2423
    %2654 = vst [vmem:[#allocation3] sm:$0xff] %v2533
    %2655 = vst [vmem:[#allocation4] sm:$0xff] %v2643
    // Predicated region
    $region78: #{tpu_custom_call.1} parent=1 // pred_check
      _
    $region79: #{tpu_custom_call.1} parent=1 // pred_check_branch
      %2657 = sbr.rel (0) target = $region81
    $region80: #{tpu_custom_call.1} parent=1 // pred_region
      %s2659 = ssub.s32 384, 384
      %2660 = vsyncadd [#allocation7], %s2659
      %s2661 = sshll.u32 [#allocation13], 4
      %s2662 = int_to_ptr.vmem [resolvable:$true] %s2661
      %2667 = dma.vmem_to_hbm [thread:$0]  %s2662, 384, %s6, [#allocation7], 128, 128, 8
    $region81: #{tpu_custom_call.1} parent=1 // pred_fallthru
      _
    // Predicated region
    $region82: #{tpu_custom_call.1} parent=1 // pred_check
      _
    $region83: #{tpu_custom_call.1} parent=1 // pred_check_branch
      %2669 = sbr.rel (0) target = $region85
    $region84: #{tpu_custom_call.1} parent=1 // pred_region
      %2670 = dma.done [#allocation7], 384
    $region85: #{tpu_custom_call.1} parent=1 // pred_fallthru
      _
    %2671 = vsyncpa [#allocation6], 1
    %2672 = vsyncpa [#allocation9], 1
    %2673 = vsyncpa [#allocation12], 1
    %2674 = vsyncpa [#allocation7], 1

</llo_original>
